<compile_context>
chip_gen: v5e
topology: v5e:2x2
jax: 0.10.0
libtpu: 0.0.40
codegen_flags: <defaults>
</compile_context>

<pallas_src>
import numpy as np
import jax
import jax.numpy as jnp
from jax.experimental import pallas as pl
from jax.experimental.pallas import tpu as pltpu


# ----------------------------- fused Pallas kernel -------------------------

def snn_fused_kernel(x4_ref, w1_ref, b1_ref, w2_ref, b2_ref, w3_ref, b3_ref,
                     spk3_ref, mem3_ref, s1e_ref, s1o_ref, s2_ref):
    f32 = jnp.float32

    # ---- stage 1: conv1 (5x5, 1->12) + 2x2 maxpool + Leaky(threshold=1) ----
    # accs[u][m, :] = conv1 output row (4m + u), u = row mod 4, m = 0..5.
    # Columns ordered ww*256 + j*12 + c  (conv column ow = 2j + ww, channel c).
    accs = [None, None, None, None]
    for kh in range(5):
        w_kh = w1_ref[kh]                                        # (28, 512)
        for u in range(4):
            t = u + kh                                           # image row 4m + t
            lhs = x4_ref[0, t % 4, (t // 4):(t // 4) + 6, :]     # (6, 28)
            part = jnp.dot(lhs, w_kh, preferred_element_type=f32)
            accs[u] = part if accs[u] is None else accs[u] + part
    for hp in range(2):                          # hp = parity of the pooled row
        cur = jnp.maximum(accs[2 * hp], accs[2 * hp + 1])    # pool rows  (6, 512)
        cur = jnp.maximum(cur[:, :256], cur[:, 256:])        # pool cols  (6, 256)
        cur = cur[:, :144] + b1_ref[...]     # drop col padding; add bias
        spk = (cur > 1.0).astype(f32)        # Heaviside, threshold = 1.0
        if hp == 0:
            s1e_ref[...] = spk               # pooled rows 0,2,...,10  (6, 144)
        else:
            s1o_ref[...] = spk               # pooled rows 1,3,...,11  (6, 144)

    # ---- stage 2: conv2 (5x5, 12->64) + 2x2 maxpool + Leaky -----------------
    # acc2[v][i, :] = conv2 output row (2i + v), i = 0..3; cols ww*256+j*64+c.
    acc2 = [None, None]
    for kh in range(5):
        w_kh = w2_ref[kh]                                        # (144, 512)
        for v in range(2):
            t = v + kh                                           # spk1 row 2i + t
            src = s1e_ref if t % 2 == 0 else s1o_ref
            lhs = src[(t // 2):(t // 2) + 4, :]                  # (4, 144)
            part = jnp.dot(lhs, w_kh, preferred_element_type=f32)
            acc2[v] = part if acc2[v] is None else acc2[v] + part
    cur2 = jnp.maximum(acc2[0], acc2[1])                         # (4, 512)
    cur2 = jnp.maximum(cur2[:, :256], cur2[:, 256:]) + b2_ref[...]   # (4, 256)
    s2_ref[...] = (cur2 > 1.0).astype(f32)       # spk2: rows i, cols j*64 + c

    # ---- stage 3: fc1 (1024 -> 10) + Leaky ----------------------------------
    cur3 = b3_ref[...]                                           # (1, 10)
    for i in range(4):
        cur3 = cur3 + jnp.dot(s2_ref[i:i + 1, :], w3_ref[i],
                              preferred_element_type=f32)        # (1, 10)
    mem3_ref[0] = cur3
    spk3_ref[0] = (cur3 > 1.0).astype(f32)


# ----------------------------- one-time weight repack -----------------------

def prepare_params(params):
    """Fold im2col + 2x2-pool layout into the weights (done once at init)."""
    W1, b1, W2, b2, W3, b3 = [np.asarray(p, dtype=np.float32) for p in params]

    # conv1 row-Toeplitz: w1r[kh, w_in, ww*256 + j*12 + c] = W1[c, 0, kh, kw],
    # with w_in = 2j + ww + kw (conv output column ow = 2j + ww).
    w1r = np.zeros((5, 28, 512), np.float32)
    for kh in range(5):
        for ww in range(2):
            for j in range(12):
                for kw in range(5):
                    w_in = 2 * j + ww + kw
                    col = ww * 256 + j * 12
                    w1r[kh, w_in, col:col + 12] = W1[:, 0, kh, kw]

    # conv2 row-Toeplitz: w2r[kh, w_in*12+ci, ww*256 + j*64 + co] = W2[co,ci,kh,kw]
    w2r = np.zeros((5, 144, 512), np.float32)
    for kh in range(5):
        for ww in range(2):
            for j in range(4):
                for kw in range(5):
                    w_in = 2 * j + ww + kw
                    col = ww * 256 + j * 64
                    w2r[kh, w_in * 12:(w_in + 1) * 12, col:col + 64] = W2[:, :, kh, kw].T

    # fc1 weights permuted to the kernel's spk2 layout (row=i, col=j*64+c);
    # PyTorch NCHW flatten order of spk2 (B, 64, 4, 4) is c*16 + i*4 + j.
    w3r = np.zeros((4, 256, 10), np.float32)
    W3_4d = W3.reshape(10, 64, 4, 4)
    for i in range(4):
        for j in range(4):
            w3r[i, j * 64:(j + 1) * 64, :] = W3_4d[:, :, i, j].T

    b1t = np.tile(b1, 12).reshape(1, 144)    # col j*12 + c -> b1[c]
    b2t = np.tile(b2, 4).reshape(1, 256)     # col j*64 + c -> b2[c]
    b3t = b3.reshape(1, 10)
    return tuple(jnp.asarray(a) for a in (w1r, b1t, w2r, b2t, w3r, b3t))


# ----------------------------- forward wrapper ------------------------------

def _net_forward(x_nchw, prepped):
    w1r, b1t, w2r, b2t, w3r, b3t = prepped
    B = x_nchw.shape[0]
    x = x_nchw.reshape(B, 28, 28).astype(jnp.float32)
    # x4[b, r, m, :] = x[b, 4*m + r, :]  (rows grouped by h mod 4 so every
    # in-kernel slice is contiguous -- no strided slices inside the kernel).
    x4 = jnp.transpose(x.reshape(B, 7, 4, 28), (0, 2, 1, 3))     # (B, 4, 7, 28)

    spk3, mem3 = pl.pallas_call(
        snn_fused_kernel,
        out_shape=(jax.ShapeDtypeStruct((B, 1, 10), jnp.float32),
                   jax.ShapeDtypeStruct((B, 1, 10), jnp.float32)),
        grid=(B,),
        in_specs=[
            pl.BlockSpec((1, 4, 7, 28), lambda b: (b, 0, 0, 0)),   # image rows
            pl.BlockSpec((5, 28, 512), lambda b: (0, 0, 0)),       # conv1 weights
            pl.BlockSpec((1, 144), lambda b: (0, 0)),              # conv1 bias
            pl.BlockSpec((5, 144, 512), lambda b: (0, 0, 0)),      # conv2 weights
            pl.BlockSpec((1, 256), lambda b: (0, 0)),              # conv2 bias
            pl.BlockSpec((4, 256, 10), lambda b: (0, 0, 0)),       # fc weights
            pl.BlockSpec((1, 10), lambda b: (0, 0)),               # fc bias
        ],
        out_specs=(pl.BlockSpec((1, 1, 10), lambda b: (b, 0, 0)),
                   pl.BlockSpec((1, 1, 10), lambda b: (b, 0, 0))),
        scratch_shapes=[pltpu.VMEM((6, 144), jnp.float32),   # spk1 even rows
                        pltpu.VMEM((6, 144), jnp.float32),   # spk1 odd rows
                        pltpu.VMEM((4, 256), jnp.float32)],  # spk2
        compiler_params=pltpu.CompilerParams(
            dimension_semantics=("parallel",)),   # batch items are independent
        cost_estimate=pl.CostEstimate(
            flops=2_823_680 * B, transcendentals=0,
            bytes_accessed=1_803_880 + 3_216 * B),
    )(x4, w1r, b1t, w2r, b2t, w3r, b3t)
    return spk3[:, 0, :], mem3[:, 0, :]


net_forward = jax.jit(_net_forward)


# ----------------------------- reference (sanity check) ---------------------

def reference(x, W1, b1, W2, b2, W3, b3):
    def conv(a, W):
        return jax.lax.conv_general_dilated(
            a, W, (1, 1), "VALID", dimension_numbers=("NCHW", "OIHW", "NCHW"))

    def pool(a):
        return jax.lax.reduce_window(a, -jnp.inf, jax.lax.max,
                                     (1, 1, 2, 2), (1, 1, 2, 2), "VALID")

    c1 = pool(conv(x, W1) + b1[None, :, None, None])
    s1 = (c1 > 1.0).astype(jnp.float32)
    c2 = pool(conv(s1, W2) + b2[None, :, None, None])
    s2 = (c2 > 1.0).astype(jnp.float32)
    c3 = s2.reshape(s2.shape[0], -1) @ W3.T + b3
    return (c3 > 1.0).astype(jnp.float32), c3


# ----------------------------- main ------------------------------------------

if __name__ == "__main__":
    key = jax.random.PRNGKey(0)
    ks = jax.random.split(key, 7)

    def uinit(k, shape, fan_in):
        bound = 1.0 / float(np.sqrt(fan_in))
        return jax.random.uniform(k, shape, jnp.float32, -bound, bound)

    # Parameter shapes from Net.__init__ (PyTorch layouts).
    W1 = uinit(ks[0], (12, 1, 5, 5), 25)
    b1 = uinit(ks[1], (12,), 25)
    W2 = uinit(ks[2], (64, 12, 5, 5), 300)
    b2 = uinit(ks[3], (64,), 300)
    W3 = uinit(ks[4], (10, 64 * 4 * 4), 64 * 4 * 4)
    b3 = uinit(ks[5], (10,), 64 * 4 * 4)

    # Small batch; spatial must be 28x28 to satisfy fc1's 64*4*4 input.
    x = jax.random.normal(ks[6], (2, 1, 28, 28), jnp.float32) * 2.0

    params = (W1, b1, W2, b2, W3, b3)
    prepped = prepare_params(params)

    spk3, mem3 = net_forward(x, prepped)
    jax.block_until_ready((spk3, mem3))

    spk3_ref, mem3_ref = reference(x, *params)
    assert spk3.shape == (2, 10) and mem3.shape == (2, 10)
    assert float(jnp.max(jnp.abs(mem3 - mem3_ref))) < 5e-2, "mem3 mismatch vs reference"
    # spikes must agree everywhere except (possibly) exactly at the threshold
    ok = (spk3 == spk3_ref) | (jnp.abs(mem3_ref - 1.0) < 1e-3)
    assert bool(jnp.all(ok)), "spk3 mismatch vs reference"

    print("KERNEL_OK")
</pallas_src>

<mosaic_0001>
module attributes {stable_mosaic.version = 11 : i64} {
  func.func @snn_fused_kernel(%arg0: i32, %arg1: memref<1x4x7x28xf32, #tpu.memory_space<vmem>>, %arg2: memref<5x28x512xf32, #tpu.memory_space<vmem>>, %arg3: memref<1x144xf32, #tpu.memory_space<vmem>>, %arg4: memref<5x144x512xf32, #tpu.memory_space<vmem>>, %arg5: memref<1x256xf32, #tpu.memory_space<vmem>>, %arg6: memref<4x256x10xf32, #tpu.memory_space<vmem>>, %arg7: memref<1x10xf32, #tpu.memory_space<vmem>>, %arg8: memref<1x1x10xf32, #tpu.memory_space<vmem>>, %arg9: memref<1x1x10xf32, #tpu.memory_space<vmem>>, %arg10: memref<6x144xf32, #tpu.memory_space<vmem>>, %arg11: memref<6x144xf32, #tpu.memory_space<vmem>>, %arg12: memref<4x256xf32, #tpu.memory_space<vmem>>) attributes {dimension_semantics = [#tpu.dimension_semantics<parallel>], iteration_bounds = array<i64: 2>, scalar_prefetch = 0 : i64, scratch_operands = 3 : i64, tpu.core_type = #tpu.core_type<tc>, window_params = [{transform_indices = @transform_0, window_bounds = array<i64: 1, 4, 7, 28>}, {pipeline_mode = #tpu.pipeline_mode<synchronous>, transform_indices = @transform_1, window_bounds = array<i64: 5, 28, 512>}, {pipeline_mode = #tpu.pipeline_mode<synchronous>, transform_indices = @transform_2, window_bounds = array<i64: 1, 144>}, {pipeline_mode = #tpu.pipeline_mode<synchronous>, transform_indices = @transform_3, window_bounds = array<i64: 5, 144, 512>}, {pipeline_mode = #tpu.pipeline_mode<synchronous>, transform_indices = @transform_4, window_bounds = array<i64: 1, 256>}, {pipeline_mode = #tpu.pipeline_mode<synchronous>, transform_indices = @transform_5, window_bounds = array<i64: 4, 256, 10>}, {pipeline_mode = #tpu.pipeline_mode<synchronous>, transform_indices = @transform_6, window_bounds = array<i64: 1, 10>}, {transform_indices = @transform_7, window_bounds = array<i64: 1, 1, 10>}, {transform_indices = @transform_8, window_bounds = array<i64: 1, 1, 10>}]} {
    %c0 = arith.constant 0 : index
    %c0_0 = arith.constant 0 : index
    %c0_1 = arith.constant 0 : index
    %0 = vector.load %arg2[%c0, %c0_0, %c0_1] : memref<5x28x512xf32, #tpu.memory_space<vmem>>, vector<1x28x512xf32>
    %1 = vector.shape_cast %0 : vector<1x28x512xf32> to vector<28x512xf32>
    %c0_2 = arith.constant 0 : index
    %c0_3 = arith.constant 0 : index
    %c0_4 = arith.constant 0 : index
    %c0_5 = arith.constant 0 : index
    %2 = vector.load %arg1[%c0_2, %c0_3, %c0_4, %c0_5] : memref<1x4x7x28xf32, #tpu.memory_space<vmem>>, vector<1x1x6x28xf32>
    %3 = vector.shape_cast %2 : vector<1x1x6x28xf32> to vector<6x28xf32>
    %cst = arith.constant dense<0.000000e+00> : vector<6x512xf32>
    %4 = tpu.matmul %3, %1, %cst {dimension_numbers = #tpu.dot_dimension_numbers<[1], [0], [0], [1], [0, 0, 1, 1], [], []>} : vector<6x28xf32>, vector<28x512xf32>, vector<6x512xf32> -> vector<6x512xf32>
    %c0_6 = arith.constant 0 : index
    %c1 = arith.constant 1 : index
    %c0_7 = arith.constant 0 : index
    %c0_8 = arith.constant 0 : index
    %5 = vector.load %arg1[%c0_6, %c1, %c0_7, %c0_8] : memref<1x4x7x28xf32, #tpu.memory_space<vmem>>, vector<1x1x6x28xf32>
    %6 = vector.shape_cast %5 : vector<1x1x6x28xf32> to vector<6x28xf32>
    %cst_9 = arith.constant dense<0.000000e+00> : vector<6x512xf32>
    %7 = tpu.matmul %6, %1, %cst_9 {dimension_numbers = #tpu.dot_dimension_numbers<[1], [0], [0], [1], [0, 0, 1, 1], [], []>} : vector<6x28xf32>, vector<28x512xf32>, vector<6x512xf32> -> vector<6x512xf32>
    %c0_10 = arith.constant 0 : index
    %c2 = arith.constant 2 : index
    %c0_11 = arith.constant 0 : index
    %c0_12 = arith.constant 0 : index
    %8 = vector.load %arg1[%c0_10, %c2, %c0_11, %c0_12] : memref<1x4x7x28xf32, #tpu.memory_space<vmem>>, vector<1x1x6x28xf32>
    %9 = vector.shape_cast %8 : vector<1x1x6x28xf32> to vector<6x28xf32>
    %cst_13 = arith.constant dense<0.000000e+00> : vector<6x512xf32>
    %10 = tpu.matmul %9, %1, %cst_13 {dimension_numbers = #tpu.dot_dimension_numbers<[1], [0], [0], [1], [0, 0, 1, 1], [], []>} : vector<6x28xf32>, vector<28x512xf32>, vector<6x512xf32> -> vector<6x512xf32>
    %c0_14 = arith.constant 0 : index
    %c3 = arith.constant 3 : index
    %c0_15 = arith.constant 0 : index
    %c0_16 = arith.constant 0 : index
    %11 = vector.load %arg1[%c0_14, %c3, %c0_15, %c0_16] : memref<1x4x7x28xf32, #tpu.memory_space<vmem>>, vector<1x1x6x28xf32>
    %12 = vector.shape_cast %11 : vector<1x1x6x28xf32> to vector<6x28xf32>
    %cst_17 = arith.constant dense<0.000000e+00> : vector<6x512xf32>
    %13 = tpu.matmul %12, %1, %cst_17 {dimension_numbers = #tpu.dot_dimension_numbers<[1], [0], [0], [1], [0, 0, 1, 1], [], []>} : vector<6x28xf32>, vector<28x512xf32>, vector<6x512xf32> -> vector<6x512xf32>
    %c1_18 = arith.constant 1 : index
    %c0_19 = arith.constant 0 : index
    %c0_20 = arith.constant 0 : index
    %14 = vector.load %arg2[%c1_18, %c0_19, %c0_20] : memref<5x28x512xf32, #tpu.memory_space<vmem>>, vector<1x28x512xf32>
    %15 = vector.shape_cast %14 : vector<1x28x512xf32> to vector<28x512xf32>
    %c0_21 = arith.constant 0 : index
    %c1_22 = arith.constant 1 : index
    %c0_23 = arith.constant 0 : index
    %c0_24 = arith.constant 0 : index
    %16 = vector.load %arg1[%c0_21, %c1_22, %c0_23, %c0_24] : memref<1x4x7x28xf32, #tpu.memory_space<vmem>>, vector<1x1x6x28xf32>
    %17 = vector.shape_cast %16 : vector<1x1x6x28xf32> to vector<6x28xf32>
    %cst_25 = arith.constant dense<0.000000e+00> : vector<6x512xf32>
    %18 = tpu.matmul %17, %15, %cst_25 {dimension_numbers = #tpu.dot_dimension_numbers<[1], [0], [0], [1], [0, 0, 1, 1], [], []>} : vector<6x28xf32>, vector<28x512xf32>, vector<6x512xf32> -> vector<6x512xf32>
    %19 = arith.addf %4, %18 : vector<6x512xf32>
    %c0_26 = arith.constant 0 : index
    %c2_27 = arith.constant 2 : index
    %c0_28 = arith.constant 0 : index
    %c0_29 = arith.constant 0 : index
    %20 = vector.load %arg1[%c0_26, %c2_27, %c0_28, %c0_29] : memref<1x4x7x28xf32, #tpu.memory_space<vmem>>, vector<1x1x6x28xf32>
    %21 = vector.shape_cast %20 : vector<1x1x6x28xf32> to vector<6x28xf32>
    %cst_30 = arith.constant dense<0.000000e+00> : vector<6x512xf32>
    %22 = tpu.matmul %21, %15, %cst_30 {dimension_numbers = #tpu.dot_dimension_numbers<[1], [0], [0], [1], [0, 0, 1, 1], [], []>} : vector<6x28xf32>, vector<28x512xf32>, vector<6x512xf32> -> vector<6x512xf32>
    %23 = arith.addf %7, %22 : vector<6x512xf32>
    %c0_31 = arith.constant 0 : index
    %c3_32 = arith.constant 3 : index
    %c0_33 = arith.constant 0 : index
    %c0_34 = arith.constant 0 : index
    %24 = vector.load %arg1[%c0_31, %c3_32, %c0_33, %c0_34] : memref<1x4x7x28xf32, #tpu.memory_space<vmem>>, vector<1x1x6x28xf32>
    %25 = vector.shape_cast %24 : vector<1x1x6x28xf32> to vector<6x28xf32>
    %cst_35 = arith.constant dense<0.000000e+00> : vector<6x512xf32>
    %26 = tpu.matmul %25, %15, %cst_35 {dimension_numbers = #tpu.dot_dimension_numbers<[1], [0], [0], [1], [0, 0, 1, 1], [], []>} : vector<6x28xf32>, vector<28x512xf32>, vector<6x512xf32> -> vector<6x512xf32>
    %27 = arith.addf %10, %26 : vector<6x512xf32>
    %c0_36 = arith.constant 0 : index
    %c0_37 = arith.constant 0 : index
    %c1_38 = arith.constant 1 : index
    %c0_39 = arith.constant 0 : index
    %28 = vector.load %arg1[%c0_36, %c0_37, %c1_38, %c0_39] : memref<1x4x7x28xf32, #tpu.memory_space<vmem>>, vector<1x1x6x28xf32>
    %29 = vector.shape_cast %28 : vector<1x1x6x28xf32> to vector<6x28xf32>
    %cst_40 = arith.constant dense<0.000000e+00> : vector<6x512xf32>
    %30 = tpu.matmul %29, %15, %cst_40 {dimension_numbers = #tpu.dot_dimension_numbers<[1], [0], [0], [1], [0, 0, 1, 1], [], []>} : vector<6x28xf32>, vector<28x512xf32>, vector<6x512xf32> -> vector<6x512xf32>
    %31 = arith.addf %13, %30 : vector<6x512xf32>
    %c2_41 = arith.constant 2 : index
    %c0_42 = arith.constant 0 : index
    %c0_43 = arith.constant 0 : index
    %32 = vector.load %arg2[%c2_41, %c0_42, %c0_43] : memref<5x28x512xf32, #tpu.memory_space<vmem>>, vector<1x28x512xf32>
    %33 = vector.shape_cast %32 : vector<1x28x512xf32> to vector<28x512xf32>
    %c0_44 = arith.constant 0 : index
    %c2_45 = arith.constant 2 : index
    %c0_46 = arith.constant 0 : index
    %c0_47 = arith.constant 0 : index
    %34 = vector.load %arg1[%c0_44, %c2_45, %c0_46, %c0_47] : memref<1x4x7x28xf32, #tpu.memory_space<vmem>>, vector<1x1x6x28xf32>
    %35 = vector.shape_cast %34 : vector<1x1x6x28xf32> to vector<6x28xf32>
    %cst_48 = arith.constant dense<0.000000e+00> : vector<6x512xf32>
    %36 = tpu.matmul %35, %33, %cst_48 {dimension_numbers = #tpu.dot_dimension_numbers<[1], [0], [0], [1], [0, 0, 1, 1], [], []>} : vector<6x28xf32>, vector<28x512xf32>, vector<6x512xf32> -> vector<6x512xf32>
    %37 = arith.addf %19, %36 : vector<6x512xf32>
    %c0_49 = arith.constant 0 : index
    %c3_50 = arith.constant 3 : index
    %c0_51 = arith.constant 0 : index
    %c0_52 = arith.constant 0 : index
    %38 = vector.load %arg1[%c0_49, %c3_50, %c0_51, %c0_52] : memref<1x4x7x28xf32, #tpu.memory_space<vmem>>, vector<1x1x6x28xf32>
    %39 = vector.shape_cast %38 : vector<1x1x6x28xf32> to vector<6x28xf32>
    %cst_53 = arith.constant dense<0.000000e+00> : vector<6x512xf32>
    %40 = tpu.matmul %39, %33, %cst_53 {dimension_numbers = #tpu.dot_dimension_numbers<[1], [0], [0], [1], [0, 0, 1, 1], [], []>} : vector<6x28xf32>, vector<28x512xf32>, vector<6x512xf32> -> vector<6x512xf32>
    %41 = arith.addf %23, %40 : vector<6x512xf32>
    %c0_54 = arith.constant 0 : index
    %c0_55 = arith.constant 0 : index
    %c1_56 = arith.constant 1 : index
    %c0_57 = arith.constant 0 : index
    %42 = vector.load %arg1[%c0_54, %c0_55, %c1_56, %c0_57] : memref<1x4x7x28xf32, #tpu.memory_space<vmem>>, vector<1x1x6x28xf32>
    %43 = vector.shape_cast %42 : vector<1x1x6x28xf32> to vector<6x28xf32>
    %cst_58 = arith.constant dense<0.000000e+00> : vector<6x512xf32>
    %44 = tpu.matmul %43, %33, %cst_58 {dimension_numbers = #tpu.dot_dimension_numbers<[1], [0], [0], [1], [0, 0, 1, 1], [], []>} : vector<6x28xf32>, vector<28x512xf32>, vector<6x512xf32> -> vector<6x512xf32>
    %45 = arith.addf %27, %44 : vector<6x512xf32>
    %c0_59 = arith.constant 0 : index
    %c1_60 = arith.constant 1 : index
    %c1_61 = arith.constant 1 : index
    %c0_62 = arith.constant 0 : index
    %46 = vector.load %arg1[%c0_59, %c1_60, %c1_61, %c0_62] : memref<1x4x7x28xf32, #tpu.memory_space<vmem>>, vector<1x1x6x28xf32>
    %47 = vector.shape_cast %46 : vector<1x1x6x28xf32> to vector<6x28xf32>
    %cst_63 = arith.constant dense<0.000000e+00> : vector<6x512xf32>
    %48 = tpu.matmul %47, %33, %cst_63 {dimension_numbers = #tpu.dot_dimension_numbers<[1], [0], [0], [1], [0, 0, 1, 1], [], []>} : vector<6x28xf32>, vector<28x512xf32>, vector<6x512xf32> -> vector<6x512xf32>
    %49 = arith.addf %31, %48 : vector<6x512xf32>
    %c3_64 = arith.constant 3 : index
    %c0_65 = arith.constant 0 : index
    %c0_66 = arith.constant 0 : index
    %50 = vector.load %arg2[%c3_64, %c0_65, %c0_66] : memref<5x28x512xf32, #tpu.memory_space<vmem>>, vector<1x28x512xf32>
    %51 = vector.shape_cast %50 : vector<1x28x512xf32> to vector<28x512xf32>
    %c0_67 = arith.constant 0 : index
    %c3_68 = arith.constant 3 : index
    %c0_69 = arith.constant 0 : index
    %c0_70 = arith.constant 0 : index
    %52 = vector.load %arg1[%c0_67, %c3_68, %c0_69, %c0_70] : memref<1x4x7x28xf32, #tpu.memory_space<vmem>>, vector<1x1x6x28xf32>
    %53 = vector.shape_cast %52 : vector<1x1x6x28xf32> to vector<6x28xf32>
    %cst_71 = arith.constant dense<0.000000e+00> : vector<6x512xf32>
    %54 = tpu.matmul %53, %51, %cst_71 {dimension_numbers = #tpu.dot_dimension_numbers<[1], [0], [0], [1], [0, 0, 1, 1], [], []>} : vector<6x28xf32>, vector<28x512xf32>, vector<6x512xf32> -> vector<6x512xf32>
    %55 = arith.addf %37, %54 : vector<6x512xf32>
    %c0_72 = arith.constant 0 : index
    %c0_73 = arith.constant 0 : index
    %c1_74 = arith.constant 1 : index
    %c0_75 = arith.constant 0 : index
    %56 = vector.load %arg1[%c0_72, %c0_73, %c1_74, %c0_75] : memref<1x4x7x28xf32, #tpu.memory_space<vmem>>, vector<1x1x6x28xf32>
    %57 = vector.shape_cast %56 : vector<1x1x6x28xf32> to vector<6x28xf32>
    %cst_76 = arith.constant dense<0.000000e+00> : vector<6x512xf32>
    %58 = tpu.matmul %57, %51, %cst_76 {dimension_numbers = #tpu.dot_dimension_numbers<[1], [0], [0], [1], [0, 0, 1, 1], [], []>} : vector<6x28xf32>, vector<28x512xf32>, vector<6x512xf32> -> vector<6x512xf32>
    %59 = arith.addf %41, %58 : vector<6x512xf32>
    %c0_77 = arith.constant 0 : index
    %c1_78 = arith.constant 1 : index
    %c1_79 = arith.constant 1 : index
    %c0_80 = arith.constant 0 : index
    %60 = vector.load %arg1[%c0_77, %c1_78, %c1_79, %c0_80] : memref<1x4x7x28xf32, #tpu.memory_space<vmem>>, vector<1x1x6x28xf32>
    %61 = vector.shape_cast %60 : vector<1x1x6x28xf32> to vector<6x28xf32>
    %cst_81 = arith.constant dense<0.000000e+00> : vector<6x512xf32>
    %62 = tpu.matmul %61, %51, %cst_81 {dimension_numbers = #tpu.dot_dimension_numbers<[1], [0], [0], [1], [0, 0, 1, 1], [], []>} : vector<6x28xf32>, vector<28x512xf32>, vector<6x512xf32> -> vector<6x512xf32>
    %63 = arith.addf %45, %62 : vector<6x512xf32>
    %c0_82 = arith.constant 0 : index
    %c2_83 = arith.constant 2 : index
    %c1_84 = arith.constant 1 : index
    %c0_85 = arith.constant 0 : index
    %64 = vector.load %arg1[%c0_82, %c2_83, %c1_84, %c0_85] : memref<1x4x7x28xf32, #tpu.memory_space<vmem>>, vector<1x1x6x28xf32>
    %65 = vector.shape_cast %64 : vector<1x1x6x28xf32> to vector<6x28xf32>
    %cst_86 = arith.constant dense<0.000000e+00> : vector<6x512xf32>
    %66 = tpu.matmul %65, %51, %cst_86 {dimension_numbers = #tpu.dot_dimension_numbers<[1], [0], [0], [1], [0, 0, 1, 1], [], []>} : vector<6x28xf32>, vector<28x512xf32>, vector<6x512xf32> -> vector<6x512xf32>
    %67 = arith.addf %49, %66 : vector<6x512xf32>
    %c4 = arith.constant 4 : index
    %c0_87 = arith.constant 0 : index
    %c0_88 = arith.constant 0 : index
    %68 = vector.load %arg2[%c4, %c0_87, %c0_88] : memref<5x28x512xf32, #tpu.memory_space<vmem>>, vector<1x28x512xf32>
    %69 = vector.shape_cast %68 : vector<1x28x512xf32> to vector<28x512xf32>
    %c0_89 = arith.constant 0 : index
    %c0_90 = arith.constant 0 : index
    %c1_91 = arith.constant 1 : index
    %c0_92 = arith.constant 0 : index
    %70 = vector.load %arg1[%c0_89, %c0_90, %c1_91, %c0_92] : memref<1x4x7x28xf32, #tpu.memory_space<vmem>>, vector<1x1x6x28xf32>
    %71 = vector.shape_cast %70 : vector<1x1x6x28xf32> to vector<6x28xf32>
    %cst_93 = arith.constant dense<0.000000e+00> : vector<6x512xf32>
    %72 = tpu.matmul %71, %69, %cst_93 {dimension_numbers = #tpu.dot_dimension_numbers<[1], [0], [0], [1], [0, 0, 1, 1], [], []>} : vector<6x28xf32>, vector<28x512xf32>, vector<6x512xf32> -> vector<6x512xf32>
    %73 = arith.addf %55, %72 : vector<6x512xf32>
    %c0_94 = arith.constant 0 : index
    %c1_95 = arith.constant 1 : index
    %c1_96 = arith.constant 1 : index
    %c0_97 = arith.constant 0 : index
    %74 = vector.load %arg1[%c0_94, %c1_95, %c1_96, %c0_97] : memref<1x4x7x28xf32, #tpu.memory_space<vmem>>, vector<1x1x6x28xf32>
    %75 = vector.shape_cast %74 : vector<1x1x6x28xf32> to vector<6x28xf32>
    %cst_98 = arith.constant dense<0.000000e+00> : vector<6x512xf32>
    %76 = tpu.matmul %75, %69, %cst_98 {dimension_numbers = #tpu.dot_dimension_numbers<[1], [0], [0], [1], [0, 0, 1, 1], [], []>} : vector<6x28xf32>, vector<28x512xf32>, vector<6x512xf32> -> vector<6x512xf32>
    %77 = arith.addf %59, %76 : vector<6x512xf32>
    %c0_99 = arith.constant 0 : index
    %c2_100 = arith.constant 2 : index
    %c1_101 = arith.constant 1 : index
    %c0_102 = arith.constant 0 : index
    %78 = vector.load %arg1[%c0_99, %c2_100, %c1_101, %c0_102] : memref<1x4x7x28xf32, #tpu.memory_space<vmem>>, vector<1x1x6x28xf32>
    %79 = vector.shape_cast %78 : vector<1x1x6x28xf32> to vector<6x28xf32>
    %cst_103 = arith.constant dense<0.000000e+00> : vector<6x512xf32>
    %80 = tpu.matmul %79, %69, %cst_103 {dimension_numbers = #tpu.dot_dimension_numbers<[1], [0], [0], [1], [0, 0, 1, 1], [], []>} : vector<6x28xf32>, vector<28x512xf32>, vector<6x512xf32> -> vector<6x512xf32>
    %81 = arith.addf %63, %80 : vector<6x512xf32>
    %c0_104 = arith.constant 0 : index
    %c3_105 = arith.constant 3 : index
    %c1_106 = arith.constant 1 : index
    %c0_107 = arith.constant 0 : index
    %82 = vector.load %arg1[%c0_104, %c3_105, %c1_106, %c0_107] : memref<1x4x7x28xf32, #tpu.memory_space<vmem>>, vector<1x1x6x28xf32>
    %83 = vector.shape_cast %82 : vector<1x1x6x28xf32> to vector<6x28xf32>
    %cst_108 = arith.constant dense<0.000000e+00> : vector<6x512xf32>
    %84 = tpu.matmul %83, %69, %cst_108 {dimension_numbers = #tpu.dot_dimension_numbers<[1], [0], [0], [1], [0, 0, 1, 1], [], []>} : vector<6x28xf32>, vector<28x512xf32>, vector<6x512xf32> -> vector<6x512xf32>
    %85 = arith.addf %67, %84 : vector<6x512xf32>
    %86 = arith.maximumf %73, %77 : vector<6x512xf32>
    %87 = vector.extract_strided_slice %86 {offsets = [0, 0], sizes = [6, 256], strides = [1, 1]} : vector<6x512xf32> to vector<6x256xf32>
    %88 = vector.extract_strided_slice %86 {offsets = [0, 256], sizes = [6, 256], strides = [1, 1]} : vector<6x512xf32> to vector<6x256xf32>
    %89 = arith.maximumf %87, %88 : vector<6x256xf32>
    %90 = vector.extract_strided_slice %89 {offsets = [0, 0], sizes = [6, 144], strides = [1, 1]} : vector<6x256xf32> to vector<6x144xf32>
    %c0_109 = arith.constant 0 : index
    %c0_110 = arith.constant 0 : index
    %91 = vector.load %arg3[%c0_109, %c0_110] : memref<1x144xf32, #tpu.memory_space<vmem>>, vector<1x144xf32>
    %92 = vector.broadcast %91 : vector<1x144xf32> to vector<6x144xf32>
    %93 = arith.addf %90, %92 : vector<6x144xf32>
    %cst_111 = arith.constant 1.000000e+00 : f32
    %94 = vector.broadcast %cst_111 : f32 to vector<6x144xf32>
    %95 = arith.cmpf ogt, %93, %94 : vector<6x144xf32>
    %96 = arith.extui %95 : vector<6x144xi1> to vector<6x144xi32>
    %97 = arith.sitofp %96 : vector<6x144xi32> to vector<6x144xf32>
    %c0_112 = arith.constant 0 : index
    %c0_113 = arith.constant 0 : index
    %98 = vector.load %arg10[%c0_112, %c0_113] : memref<6x144xf32, #tpu.memory_space<vmem>>, vector<6x144xf32>
    tpu.vector_store %arg10[%c0_112, %c0_113], %97 {strides = array<i32>} : memref<6x144xf32, #tpu.memory_space<vmem>>, vector<6x144xf32>,
    %99 = arith.maximumf %81, %85 : vector<6x512xf32>
    %100 = vector.extract_strided_slice %99 {offsets = [0, 0], sizes = [6, 256], strides = [1, 1]} : vector<6x512xf32> to vector<6x256xf32>
    %101 = vector.extract_strided_slice %99 {offsets = [0, 256], sizes = [6, 256], strides = [1, 1]} : vector<6x512xf32> to vector<6x256xf32>
    %102 = arith.maximumf %100, %101 : vector<6x256xf32>
    %103 = vector.extract_strided_slice %102 {offsets = [0, 0], sizes = [6, 144], strides = [1, 1]} : vector<6x256xf32> to vector<6x144xf32>
    %c0_114 = arith.constant 0 : index
    %c0_115 = arith.constant 0 : index
    %104 = vector.load %arg3[%c0_114, %c0_115] : memref<1x144xf32, #tpu.memory_space<vmem>>, vector<1x144xf32>
    %105 = vector.broadcast %104 : vector<1x144xf32> to vector<6x144xf32>
    %106 = arith.addf %103, %105 : vector<6x144xf32>
    %cst_116 = arith.constant 1.000000e+00 : f32
    %107 = vector.broadcast %cst_116 : f32 to vector<6x144xf32>
    %108 = arith.cmpf ogt, %106, %107 : vector<6x144xf32>
    %109 = arith.extui %108 : vector<6x144xi1> to vector<6x144xi32>
    %110 = arith.sitofp %109 : vector<6x144xi32> to vector<6x144xf32>
    %c0_117 = arith.constant 0 : index
    %c0_118 = arith.constant 0 : index
    %111 = vector.load %arg11[%c0_117, %c0_118] : memref<6x144xf32, #tpu.memory_space<vmem>>, vector<6x144xf32>
    tpu.vector_store %arg11[%c0_117, %c0_118], %110 {strides = array<i32>} : memref<6x144xf32, #tpu.memory_space<vmem>>, vector<6x144xf32>,
    %c0_119 = arith.constant 0 : index
    %c0_120 = arith.constant 0 : index
    %c0_121 = arith.constant 0 : index
    %112 = vector.load %arg4[%c0_119, %c0_120, %c0_121] : memref<5x144x512xf32, #tpu.memory_space<vmem>>, vector<1x144x512xf32>
    %113 = vector.shape_cast %112 : vector<1x144x512xf32> to vector<144x512xf32>
    %c0_122 = arith.constant 0 : index
    %c0_123 = arith.constant 0 : index
    %114 = vector.load %arg10[%c0_122, %c0_123] : memref<6x144xf32, #tpu.memory_space<vmem>>, vector<4x144xf32>
    %cst_124 = arith.constant dense<0.000000e+00> : vector<4x512xf32>
    %115 = tpu.matmul %114, %113, %cst_124 {dimension_numbers = #tpu.dot_dimension_numbers<[1], [0], [0], [1], [0, 0, 1, 1], [], []>} : vector<4x144xf32>, vector<144x512xf32>, vector<4x512xf32> -> vector<4x512xf32>
    %c0_125 = arith.constant 0 : index
    %c0_126 = arith.constant 0 : index
    %116 = vector.load %arg11[%c0_125, %c0_126] : memref<6x144xf32, #tpu.memory_space<vmem>>, vector<4x144xf32>
    %cst_127 = arith.constant dense<0.000000e+00> : vector<4x512xf32>
    %117 = tpu.matmul %116, %113, %cst_127 {dimension_numbers = #tpu.dot_dimension_numbers<[1], [0], [0], [1], [0, 0, 1, 1], [], []>} : vector<4x144xf32>, vector<144x512xf32>, vector<4x512xf32> -> vector<4x512xf32>
    %c1_128 = arith.constant 1 : index
    %c0_129 = arith.constant 0 : index
    %c0_130 = arith.constant 0 : index
    %118 = vector.load %arg4[%c1_128, %c0_129, %c0_130] : memref<5x144x512xf32, #tpu.memory_space<vmem>>, vector<1x144x512xf32>
    %119 = vector.shape_cast %118 : vector<1x144x512xf32> to vector<144x512xf32>
    %c0_131 = arith.constant 0 : index
    %c0_132 = arith.constant 0 : index
    %120 = vector.load %arg11[%c0_131, %c0_132] : memref<6x144xf32, #tpu.memory_space<vmem>>, vector<4x144xf32>
    %cst_133 = arith.constant dense<0.000000e+00> : vector<4x512xf32>
    %121 = tpu.matmul %120, %119, %cst_133 {dimension_numbers = #tpu.dot_dimension_numbers<[1], [0], [0], [1], [0, 0, 1, 1], [], []>} : vector<4x144xf32>, vector<144x512xf32>, vector<4x512xf32> -> vector<4x512xf32>
    %122 = arith.addf %115, %121 : vector<4x512xf32>
    %c1_134 = arith.constant 1 : index
    %c0_135 = arith.constant 0 : index
    %123 = vector.load %arg10[%c1_134, %c0_135] : memref<6x144xf32, #tpu.memory_space<vmem>>, vector<4x144xf32>
    %cst_136 = arith.constant dense<0.000000e+00> : vector<4x512xf32>
    %124 = tpu.matmul %123, %119, %cst_136 {dimension_numbers = #tpu.dot_dimension_numbers<[1], [0], [0], [1], [0, 0, 1, 1], [], []>} : vector<4x144xf32>, vector<144x512xf32>, vector<4x512xf32> -> vector<4x512xf32>
    %125 = arith.addf %117, %124 : vector<4x512xf32>
    %c2_137 = arith.constant 2 : index
    %c0_138 = arith.constant 0 : index
    %c0_139 = arith.constant 0 : index
    %126 = vector.load %arg4[%c2_137, %c0_138, %c0_139] : memref<5x144x512xf32, #tpu.memory_space<vmem>>, vector<1x144x512xf32>
    %127 = vector.shape_cast %126 : vector<1x144x512xf32> to vector<144x512xf32>
    %c1_140 = arith.constant 1 : index
    %c0_141 = arith.constant 0 : index
    %128 = vector.load %arg10[%c1_140, %c0_141] : memref<6x144xf32, #tpu.memory_space<vmem>>, vector<4x144xf32>
    %cst_142 = arith.constant dense<0.000000e+00> : vector<4x512xf32>
    %129 = tpu.matmul %128, %127, %cst_142 {dimension_numbers = #tpu.dot_dimension_numbers<[1], [0], [0], [1], [0, 0, 1, 1], [], []>} : vector<4x144xf32>, vector<144x512xf32>, vector<4x512xf32> -> vector<4x512xf32>
    %130 = arith.addf %122, %129 : vector<4x512xf32>
    %c1_143 = arith.constant 1 : index
    %c0_144 = arith.constant 0 : index
    %131 = vector.load %arg11[%c1_143, %c0_144] : memref<6x144xf32, #tpu.memory_space<vmem>>, vector<4x144xf32>
    %cst_145 = arith.constant dense<0.000000e+00> : vector<4x512xf32>
    %132 = tpu.matmul %131, %127, %cst_145 {dimension_numbers = #tpu.dot_dimension_numbers<[1], [0], [0], [1], [0, 0, 1, 1], [], []>} : vector<4x144xf32>, vector<144x512xf32>, vector<4x512xf32> -> vector<4x512xf32>
    %133 = arith.addf %125, %132 : vector<4x512xf32>
    %c3_146 = arith.constant 3 : index
    %c0_147 = arith.constant 0 : index
    %c0_148 = arith.constant 0 : index
    %134 = vector.load %arg4[%c3_146, %c0_147, %c0_148] : memref<5x144x512xf32, #tpu.memory_space<vmem>>, vector<1x144x512xf32>
    %135 = vector.shape_cast %134 : vector<1x144x512xf32> to vector<144x512xf32>
    %c1_149 = arith.constant 1 : index
    %c0_150 = arith.constant 0 : index
    %136 = vector.load %arg11[%c1_149, %c0_150] : memref<6x144xf32, #tpu.memory_space<vmem>>, vector<4x144xf32>
    %cst_151 = arith.constant dense<0.000000e+00> : vector<4x512xf32>
    %137 = tpu.matmul %136, %135, %cst_151 {dimension_numbers = #tpu.dot_dimension_numbers<[1], [0], [0], [1], [0, 0, 1, 1], [], []>} : vector<4x144xf32>, vector<144x512xf32>, vector<4x512xf32> -> vector<4x512xf32>
    %138 = arith.addf %130, %137 : vector<4x512xf32>
    %c2_152 = arith.constant 2 : index
    %c0_153 = arith.constant 0 : index
    %139 = vector.load %arg10[%c2_152, %c0_153] : memref<6x144xf32, #tpu.memory_space<vmem>>, vector<4x144xf32>
    %cst_154 = arith.constant dense<0.000000e+00> : vector<4x512xf32>
    %140 = tpu.matmul %139, %135, %cst_154 {dimension_numbers = #tpu.dot_dimension_numbers<[1], [0], [0], [1], [0, 0, 1, 1], [], []>} : vector<4x144xf32>, vector<144x512xf32>, vector<4x512xf32> -> vector<4x512xf32>
    %141 = arith.addf %133, %140 : vector<4x512xf32>
    %c4_155 = arith.constant 4 : index
    %c0_156 = arith.constant 0 : index
    %c0_157 = arith.constant 0 : index
    %142 = vector.load %arg4[%c4_155, %c0_156, %c0_157] : memref<5x144x512xf32, #tpu.memory_space<vmem>>, vector<1x144x512xf32>
    %143 = vector.shape_cast %142 : vector<1x144x512xf32> to vector<144x512xf32>
    %c2_158 = arith.constant 2 : index
    %c0_159 = arith.constant 0 : index
    %144 = vector.load %arg10[%c2_158, %c0_159] : memref<6x144xf32, #tpu.memory_space<vmem>>, vector<4x144xf32>
    %cst_160 = arith.constant dense<0.000000e+00> : vector<4x512xf32>
    %145 = tpu.matmul %144, %143, %cst_160 {dimension_numbers = #tpu.dot_dimension_numbers<[1], [0], [0], [1], [0, 0, 1, 1], [], []>} : vector<4x144xf32>, vector<144x512xf32>, vector<4x512xf32> -> vector<4x512xf32>
    %146 = arith.addf %138, %145 : vector<4x512xf32>
    %c2_161 = arith.constant 2 : index
    %c0_162 = arith.constant 0 : index
    %147 = vector.load %arg11[%c2_161, %c0_162] : memref<6x144xf32, #tpu.memory_space<vmem>>, vector<4x144xf32>
    %cst_163 = arith.constant dense<0.000000e+00> : vector<4x512xf32>
    %148 = tpu.matmul %147, %143, %cst_163 {dimension_numbers = #tpu.dot_dimension_numbers<[1], [0], [0], [1], [0, 0, 1, 1], [], []>} : vector<4x144xf32>, vector<144x512xf32>, vector<4x512xf32> -> vector<4x512xf32>
    %149 = arith.addf %141, %148 : vector<4x512xf32>
    %150 = arith.maximumf %146, %149 : vector<4x512xf32>
    %151 = vector.extract_strided_slice %150 {offsets = [0, 0], sizes = [4, 256], strides = [1, 1]} : vector<4x512xf32> to vector<4x256xf32>
    %152 = vector.extract_strided_slice %150 {offsets = [0, 256], sizes = [4, 256], strides = [1, 1]} : vector<4x512xf32> to vector<4x256xf32>
    %153 = arith.maximumf %151, %152 : vector<4x256xf32>
    %c0_164 = arith.constant 0 : index
    %c0_165 = arith.constant 0 : index
    %154 = vector.load %arg5[%c0_164, %c0_165] : memref<1x256xf32, #tpu.memory_space<vmem>>, vector<1x256xf32>
    %155 = vector.broadcast %154 : vector<1x256xf32> to vector<4x256xf32>
    %156 = arith.addf %153, %155 : vector<4x256xf32>
    %cst_166 = arith.constant 1.000000e+00 : f32
    %157 = vector.broadcast %cst_166 : f32 to vector<4x256xf32>
    %158 = arith.cmpf ogt, %156, %157 : vector<4x256xf32>
    %159 = arith.extui %158 : vector<4x256xi1> to vector<4x256xi32>
    %160 = arith.sitofp %159 : vector<4x256xi32> to vector<4x256xf32>
    %c0_167 = arith.constant 0 : index
    %c0_168 = arith.constant 0 : index
    %161 = vector.load %arg12[%c0_167, %c0_168] : memref<4x256xf32, #tpu.memory_space<vmem>>, vector<4x256xf32>
    tpu.vector_store %arg12[%c0_167, %c0_168], %160 {strides = array<i32>} : memref<4x256xf32, #tpu.memory_space<vmem>>, vector<4x256xf32>,
    %c0_169 = arith.constant 0 : index
    %c0_170 = arith.constant 0 : index
    %162 = vector.load %arg7[%c0_169, %c0_170] : memref<1x10xf32, #tpu.memory_space<vmem>>, vector<1x10xf32>
    %c0_171 = arith.constant 0 : index
    %c0_172 = arith.constant 0 : index
    %163 = vector.load %arg12[%c0_171, %c0_172] : memref<4x256xf32, #tpu.memory_space<vmem>>, vector<1x256xf32>
    %c0_173 = arith.constant 0 : index
    %c0_174 = arith.constant 0 : index
    %c0_175 = arith.constant 0 : index
    %164 = vector.load %arg6[%c0_173, %c0_174, %c0_175] : memref<4x256x10xf32, #tpu.memory_space<vmem>>, vector<1x256x10xf32>
    %165 = vector.shape_cast %164 : vector<1x256x10xf32> to vector<256x10xf32>
    %cst_176 = arith.constant dense<0.000000e+00> : vector<1x10xf32>
    %166 = tpu.matmul %163, %165, %cst_176 {dimension_numbers = #tpu.dot_dimension_numbers<[1], [0], [0], [1], [0, 0, 1, 1], [], []>} : vector<1x256xf32>, vector<256x10xf32>, vector<1x10xf32> -> vector<1x10xf32>
    %167 = arith.addf %162, %166 : vector<1x10xf32>
    %c1_177 = arith.constant 1 : index
    %c0_178 = arith.constant 0 : index
    %168 = vector.load %arg12[%c1_177, %c0_178] : memref<4x256xf32, #tpu.memory_space<vmem>>, vector<1x256xf32>
    %c1_179 = arith.constant 1 : index
    %c0_180 = arith.constant 0 : index
    %c0_181 = arith.constant 0 : index
    %169 = vector.load %arg6[%c1_179, %c0_180, %c0_181] : memref<4x256x10xf32, #tpu.memory_space<vmem>>, vector<1x256x10xf32>
    %170 = vector.shape_cast %169 : vector<1x256x10xf32> to vector<256x10xf32>
    %cst_182 = arith.constant dense<0.000000e+00> : vector<1x10xf32>
    %171 = tpu.matmul %168, %170, %cst_182 {dimension_numbers = #tpu.dot_dimension_numbers<[1], [0], [0], [1], [0, 0, 1, 1], [], []>} : vector<1x256xf32>, vector<256x10xf32>, vector<1x10xf32> -> vector<1x10xf32>
    %172 = arith.addf %167, %171 : vector<1x10xf32>
    %c2_183 = arith.constant 2 : index
    %c0_184 = arith.constant 0 : index
    %173 = vector.load %arg12[%c2_183, %c0_184] : memref<4x256xf32, #tpu.memory_space<vmem>>, vector<1x256xf32>
    %c2_185 = arith.constant 2 : index
    %c0_186 = arith.constant 0 : index
    %c0_187 = arith.constant 0 : index
    %174 = vector.load %arg6[%c2_185, %c0_186, %c0_187] : memref<4x256x10xf32, #tpu.memory_space<vmem>>, vector<1x256x10xf32>
    %175 = vector.shape_cast %174 : vector<1x256x10xf32> to vector<256x10xf32>
    %cst_188 = arith.constant dense<0.000000e+00> : vector<1x10xf32>
    %176 = tpu.matmul %173, %175, %cst_188 {dimension_numbers = #tpu.dot_dimension_numbers<[1], [0], [0], [1], [0, 0, 1, 1], [], []>} : vector<1x256xf32>, vector<256x10xf32>, vector<1x10xf32> -> vector<1x10xf32>
    %177 = arith.addf %172, %176 : vector<1x10xf32>
    %c3_189 = arith.constant 3 : index
    %c0_190 = arith.constant 0 : index
    %178 = vector.load %arg12[%c3_189, %c0_190] : memref<4x256xf32, #tpu.memory_space<vmem>>, vector<1x256xf32>
    %c3_191 = arith.constant 3 : index
    %c0_192 = arith.constant 0 : index
    %c0_193 = arith.constant 0 : index
    %179 = vector.load %arg6[%c3_191, %c0_192, %c0_193] : memref<4x256x10xf32, #tpu.memory_space<vmem>>, vector<1x256x10xf32>
    %180 = vector.shape_cast %179 : vector<1x256x10xf32> to vector<256x10xf32>
    %cst_194 = arith.constant dense<0.000000e+00> : vector<1x10xf32>
    %181 = tpu.matmul %178, %180, %cst_194 {dimension_numbers = #tpu.dot_dimension_numbers<[1], [0], [0], [1], [0, 0, 1, 1], [], []>} : vector<1x256xf32>, vector<256x10xf32>, vector<1x10xf32> -> vector<1x10xf32>
    %182 = arith.addf %177, %181 : vector<1x10xf32>
    %c0_195 = arith.constant 0 : index
    %c0_196 = arith.constant 0 : index
    %c0_197 = arith.constant 0 : index
    %183 = vector.load %arg9[%c0_195, %c0_196, %c0_197] : memref<1x1x10xf32, #tpu.memory_space<vmem>>, vector<1x1x10xf32>
    %184 = vector.shape_cast %183 : vector<1x1x10xf32> to vector<1x10xf32>
    %185 = vector.shape_cast %182 : vector<1x10xf32> to vector<1x1x10xf32>
    tpu.vector_store %arg9[%c0_195, %c0_196, %c0_197], %185 {strides = array<i32>} : memref<1x1x10xf32, #tpu.memory_space<vmem>>, vector<1x1x10xf32>,
    %cst_198 = arith.constant 1.000000e+00 : f32
    %186 = vector.broadcast %cst_198 : f32 to vector<1x10xf32>
    %187 = arith.cmpf ogt, %182, %186 : vector<1x10xf32>
    %188 = arith.extui %187 : vector<1x10xi1> to vector<1x10xi32>
    %189 = arith.sitofp %188 : vector<1x10xi32> to vector<1x10xf32>
    %c0_199 = arith.constant 0 : index
    %c0_200 = arith.constant 0 : index
    %c0_201 = arith.constant 0 : index
    %190 = vector.load %arg8[%c0_199, %c0_200, %c0_201] : memref<1x1x10xf32, #tpu.memory_space<vmem>>, vector<1x1x10xf32>
    %191 = vector.shape_cast %190 : vector<1x1x10xf32> to vector<1x10xf32>
    %192 = vector.shape_cast %189 : vector<1x10xf32> to vector<1x1x10xf32>
    tpu.vector_store %arg8[%c0_199, %c0_200, %c0_201], %192 {strides = array<i32>} : memref<1x1x10xf32, #tpu.memory_space<vmem>>, vector<1x1x10xf32>,
    return
  }
  func.func @transform_0(%arg0: i32) -> (i32, i32, i32, i32) {
    %c0_i32 = arith.constant 0 : i32
    %c0_i32_0 = arith.constant 0 : i32
    %c0_i32_1 = arith.constant 0 : i32
    %c0_i32_2 = arith.constant 0 : i32
    return %arg0, %c0_i32, %c0_i32_0, %c0_i32_1 : i32, i32, i32, i32
  }
  func.func @transform_1(%arg0: i32) -> (i32, i32, i32) {
    %c0_i32 = arith.constant 0 : i32
    %c0_i32_0 = arith.constant 0 : i32
    %c0_i32_1 = arith.constant 0 : i32
    %c0_i32_2 = arith.constant 0 : i32
    return %c0_i32, %c0_i32_0, %c0_i32_1 : i32, i32, i32
  }
  func.func @transform_2(%arg0: i32) -> (i32, i32) {
    %c0_i32 = arith.constant 0 : i32
    %c0_i32_0 = arith.constant 0 : i32
    %c0_i32_1 = arith.constant 0 : i32
    return %c0_i32, %c0_i32_0 : i32, i32
  }
  func.func @transform_3(%arg0: i32) -> (i32, i32, i32) {
    %c0_i32 = arith.constant 0 : i32
    %c0_i32_0 = arith.constant 0 : i32
    %c0_i32_1 = arith.constant 0 : i32
    %c0_i32_2 = arith.constant 0 : i32
    return %c0_i32, %c0_i32_0, %c0_i32_1 : i32, i32, i32
  }
  func.func @transform_4(%arg0: i32) -> (i32, i32) {
    %c0_i32 = arith.constant 0 : i32
    %c0_i32_0 = arith.constant 0 : i32
    %c0_i32_1 = arith.constant 0 : i32
    return %c0_i32, %c0_i32_0 : i32, i32
  }
  func.func @transform_5(%arg0: i32) -> (i32, i32, i32) {
    %c0_i32 = arith.constant 0 : i32
    %c0_i32_0 = arith.constant 0 : i32
    %c0_i32_1 = arith.constant 0 : i32
    %c0_i32_2 = arith.constant 0 : i32
    return %c0_i32, %c0_i32_0, %c0_i32_1 : i32, i32, i32
  }
  func.func @transform_6(%arg0: i32) -> (i32, i32) {
    %c0_i32 = arith.constant 0 : i32
    %c0_i32_0 = arith.constant 0 : i32
    %c0_i32_1 = arith.constant 0 : i32
    return %c0_i32, %c0_i32_0 : i32, i32
  }
  func.func @transform_7(%arg0: i32) -> (i32, i32, i32) {
    %c0_i32 = arith.constant 0 : i32
    %c0_i32_0 = arith.constant 0 : i32
    %c0_i32_1 = arith.constant 0 : i32
    return %arg0, %c0_i32, %c0_i32_0 : i32, i32, i32
  }
  func.func @transform_8(%arg0: i32) -> (i32, i32, i32) {
    %c0_i32 = arith.constant 0 : i32
    %c0_i32_0 = arith.constant 0 : i32
    %c0_i32_1 = arith.constant 0 : i32
    return %arg0, %c0_i32, %c0_i32_0 : i32, i32, i32
  }
}

</mosaic_0001>

<llo_original>
// kernel: _net_forward.1
$region0: #{_net_forward.1}
  #allocation0 [shape = 'u32[]', space=smem, size = 0x4, offset = 0x4, fixed_abs, tag = 'smem constant byte address 0x4 - core index']
  #allocation1 [shape = 'u32[72,128]{1,0:T(1,128)}', space=vmem, size = 0x9000, scoped, tag = 'internal scratch']
  #allocation2 [shape = 'f32[6,144]{1,0:T(8,128)}', space=vmem, size = 0x2000, scoped, tag = 'scratch operand']
  #allocation3 [shape = 'f32[6,144]{1,0:T(8,128)}', space=vmem, size = 0x2000, scoped, tag = 'scratch operand']
  #allocation4 [shape = 'f32[4,256]{1,0:T(4,128)}', space=vmem, size = 0x1000, scoped, tag = 'scratch operand']
  %s0 = inlined_call_operand.vmem [shape: f32[2,4,7,28], index: 0, kind: input, shape index: {}]
  %s1 = inlined_call_operand.hbm [shape: f32[5,28,512], index: 1, kind: input, shape index: {}]
  %s2 = inlined_call_operand.hbm [shape: f32[1,144], index: 2, kind: input, shape index: {}]
  %s3 = inlined_call_operand.hbm [shape: f32[5,144,512], index: 3, kind: input, shape index: {}]
  %s4 = inlined_call_operand.hbm [shape: f32[1,256], index: 4, kind: input, shape index: {}]
  %s5 = inlined_call_operand.vmem [shape: f32[4,256,10], index: 5, kind: input, shape index: {}]
  %s6 = inlined_call_operand.hbm [shape: f32[1,10], index: 6, kind: input, shape index: {}]
  %s7 = inlined_call_operand.hbm [shape: f32[2,1,10], index: 7, kind: output, shape index: {0}]
  %s8 = inlined_call_operand.hbm [shape: f32[2,1,10], index: 8, kind: output, shape index: {1}]
  %9 = xla_tuple %s7, %s8
  %s10 = sld [smem:[#allocation0]]
  $region89: #{_net_forward.1} parent=0
    _
  %s12 = ssub.s32 1, %s10
  %s13 = scalar_select 0, %s12, %s10
  $region1: #{_net_forward.1} parent=0
    #allocation5 [shape = 'u8[327680]{0}', space=vmem, size = 0x50000, scoped, tag = 'input window, operand 1, single buffered']
    #allocation6 [shape = 's32[2]{0}', space=sflag, size = 0x8, scoped, tag = 'scoped memory for _net_forward.1']
    #allocation7 [shape = 's32[2]{0}', space=sflag, size = 0x8, scoped, tag = 'scoped memory for _net_forward.1']
    #allocation8 [shape = 'u8[1024]{0}', space=vmem, size = 0x400, scoped, tag = 'input window, operand 2, single buffered']
    #allocation9 [shape = 's32[1]{0}', space=sflag, size = 0x4, scoped, tag = 'scoped memory for _net_forward.1']
    #allocation10 [shape = 'u8[1474560]{0}', space=vmem, size = 0x168000, scoped, tag = 'input window, operand 3, single buffered']
    #allocation11 [shape = 'u8[1024]{0}', space=vmem, size = 0x400, scoped, tag = 'input window, operand 4, single buffered']
    #allocation12 [shape = 's32[1]{0}', space=sflag, size = 0x4, scoped, tag = 'scoped memory for _net_forward.1']
    #allocation13 [shape = 'u8[512]{0}', space=vmem, size = 0x400, scoped, tag = 'input window, operand 6, single buffered']
    #allocation14 [shape = 'u8[1024]{0}', space=vmem, size = 0x400, scoped, tag = 'output window, operand 0']
    #allocation15 [shape = 'u8[1024]{0}', space=vmem, size = 0x400, scoped, tag = 'output window, operand 1']
    #allocation16 [shape = 's32[2]{0}', space=sflag, size = 0x8, scoped, tag = 'scoped memory for _net_forward.1']
    %14 = vsyncpa [#allocation6], 0
    %15 = vsyncpa [#allocation9], 0
    %16 = vsyncpa [#allocation12], 0
    %17 = vsyncpa [#allocation7], 0
    %s18 = scalar_lea.sflag [#allocation7], 1
    %19 = vsyncpa %s18, 0
    %20 = vsyncpa [#allocation16], 0
    %s21 = scalar_lea.sflag [#allocation16], 1
    %22 = vsyncpa %s21, 0
    loop: start=0, step=1, limit=4
    $region2: #{_net_forward.1} parent=1 // loop_pre_header
      _
    $region3: #{_net_forward.1} parent=1 // loop_header
      %s24 = sphi 0, %s28
      %p25 = scmp.ge.s32.totalorder %s24, 4
      %s34 = sphi 0, %s36
      %s37 = sphi 0, %s34
      %s38 = sphi 0, %s37
      %s54 = sphi 0, %s38
      %s58 = sphi 0, %s58
      %s60 = sphi 0, %s58
      %s61 = sphi 0, %s60
      %s75 = sphi 0, %s61
      %s79 = sphi 0, %s79
      %s81 = sphi 0, %s79
      %s82 = sphi 0, %s81
      %s96 = sphi 0, %s82
      %s100 = sphi 0, %s100
      %s102 = sphi 0, %s100
      %s103 = sphi 0, %s102
      %s117 = sphi 0, %s103
      %s121 = sphi 0, %s121
      %s123 = sphi 0, %s121
      %s124 = sphi 0, %s123
      %s138 = sphi 0, %s124
      %s142 = sphi 0, %s142
      %s144 = sphi 0, %s142
      %s145 = sphi 0, %s144
      %s159 = sphi 0, %s145
      %s163 = sphi 0, %s163
      %s165 = sphi 0, %s163
      %s166 = sphi 0, %s165
      %s180 = sphi 0, %s166
      %s186 = sphi 0, %s188
      %s189 = sphi 0, %s186
      %s190 = sphi 0, %s189
      %s206 = sphi 0, %s190
      %s212 = sphi 0, %s214
      %s215 = sphi 0, %s212
      %s216 = sphi 0, %s215
      %s232 = sphi 0, %s216
    $region4: #{_net_forward.1} parent=1 // loop_header_branch
      %27 = sbr.rel (%p25) target = $region8
    $region5: #{_net_forward.1} parent=1 // loop_body
      %s29 = ssub.s32 %s24, 1
      %s30 = ssub.s32 %s24, 2
      %s31 = sadd.s32 %s24, 1
      %s32 = ssub.s32 %s24, %s31
      %p33 = scmp.eq.s32.totalorder %s32, 0
      %s35 = sadd.s32 %s34, 1
      %s36 = scalar_select %p33, %s34, %s35
      %p39 = pneg %p33
      %p40 = scmp.eq.s32.totalorder %s24, 1
      %p41 = por %p39, %p40
      %p42 = scmp.ne.s32.totalorder %s34, %s37
      %p43 = scmp.eq.s32.totalorder %s24, 0
      %p44 = por %p42, %p43
      %p45 = scmp.ne.s32.totalorder %s34, %s37
      %p46 = scmp.eq.s32.totalorder %s29, 1
      %p47 = por %p45, %p46
      %p48 = scmp.ne.s32.totalorder %s37, %s38
      %p49 = scmp.eq.s32.totalorder %s29, 0
      %p50 = por %p48, %p49
      %p51 = scmp.ne.s32.totalorder %s37, %s38
      %p52 = scmp.eq.s32.totalorder %s30, 1
      %p53 = por %p51, %p52
      %p55 = scmp.ne.s32.totalorder %s38, %s54
      %p56 = scmp.eq.s32.totalorder %s30, 0
      %p57 = por %p55, %p56
      %s59 = sadd.s32 %s58, 1
      %p62 = scmp.eq.s32.totalorder %s24, 1
      %p63 = scmp.ne.s32.totalorder %s58, %s60
      %p64 = scmp.eq.s32.totalorder %s24, 0
      %p65 = por %p63, %p64
      %p66 = scmp.ne.s32.totalorder %s58, %s60
      %p67 = scmp.eq.s32.totalorder %s29, 1
      %p68 = por %p66, %p67
      %p69 = scmp.ne.s32.totalorder %s60, %s61
      %p70 = scmp.eq.s32.totalorder %s29, 0
      %p71 = por %p69, %p70
      %p72 = scmp.ne.s32.totalorder %s60, %s61
      %p73 = scmp.eq.s32.totalorder %s30, 1
      %p74 = por %p72, %p73
      %p76 = scmp.ne.s32.totalorder %s61, %s75
      %p77 = scmp.eq.s32.totalorder %s30, 0
      %p78 = por %p76, %p77
      %s80 = sadd.s32 %s79, 1
      %p83 = scmp.eq.s32.totalorder %s24, 1
      %p84 = scmp.ne.s32.totalorder %s79, %s81
      %p85 = scmp.eq.s32.totalorder %s24, 0
      %p86 = por %p84, %p85
      %p87 = scmp.ne.s32.totalorder %s79, %s81
      %p88 = scmp.eq.s32.totalorder %s29, 1
      %p89 = por %p87, %p88
      %p90 = scmp.ne.s32.totalorder %s81, %s82
      %p91 = scmp.eq.s32.totalorder %s29, 0
      %p92 = por %p90, %p91
      %p93 = scmp.ne.s32.totalorder %s81, %s82
      %p94 = scmp.eq.s32.totalorder %s30, 1
      %p95 = por %p93, %p94
      %p97 = scmp.ne.s32.totalorder %s82, %s96
      %p98 = scmp.eq.s32.totalorder %s30, 0
      %p99 = por %p97, %p98
      %s101 = sadd.s32 %s100, 1
      %p104 = scmp.eq.s32.totalorder %s24, 1
      %p105 = scmp.ne.s32.totalorder %s100, %s102
      %p106 = scmp.eq.s32.totalorder %s24, 0
      %p107 = por %p105, %p106
      %p108 = scmp.ne.s32.totalorder %s100, %s102
      %p109 = scmp.eq.s32.totalorder %s29, 1
      %p110 = por %p108, %p109
      %p111 = scmp.ne.s32.totalorder %s102, %s103
      %p112 = scmp.eq.s32.totalorder %s29, 0
      %p113 = por %p111, %p112
      %p114 = scmp.ne.s32.totalorder %s102, %s103
      %p115 = scmp.eq.s32.totalorder %s30, 1
      %p116 = por %p114, %p115
      %p118 = scmp.ne.s32.totalorder %s103, %s117
      %p119 = scmp.eq.s32.totalorder %s30, 0
      %p120 = por %p118, %p119
      %s122 = sadd.s32 %s121, 1
      %p125 = scmp.eq.s32.totalorder %s24, 1
      %p126 = scmp.ne.s32.totalorder %s121, %s123
      %p127 = scmp.eq.s32.totalorder %s24, 0
      %p128 = por %p126, %p127
      %p129 = scmp.ne.s32.totalorder %s121, %s123
      %p130 = scmp.eq.s32.totalorder %s29, 1
      %p131 = por %p129, %p130
      %p132 = scmp.ne.s32.totalorder %s123, %s124
      %p133 = scmp.eq.s32.totalorder %s29, 0
      %p134 = por %p132, %p133
      %p135 = scmp.ne.s32.totalorder %s123, %s124
      %p136 = scmp.eq.s32.totalorder %s30, 1
      %p137 = por %p135, %p136
      %p139 = scmp.ne.s32.totalorder %s124, %s138
      %p140 = scmp.eq.s32.totalorder %s30, 0
      %p141 = por %p139, %p140
      %s143 = sadd.s32 %s142, 1
      %p146 = scmp.eq.s32.totalorder %s24, 1
      %p147 = scmp.ne.s32.totalorder %s142, %s144
      %p148 = scmp.eq.s32.totalorder %s24, 0
      %p149 = por %p147, %p148
      %p150 = scmp.ne.s32.totalorder %s142, %s144
      %p151 = scmp.eq.s32.totalorder %s29, 1
      %p152 = por %p150, %p151
      %p153 = scmp.ne.s32.totalorder %s144, %s145
      %p154 = scmp.eq.s32.totalorder %s29, 0
      %p155 = por %p153, %p154
      %p156 = scmp.ne.s32.totalorder %s144, %s145
      %p157 = scmp.eq.s32.totalorder %s30, 1
      %p158 = por %p156, %p157
      %p160 = scmp.ne.s32.totalorder %s145, %s159
      %p161 = scmp.eq.s32.totalorder %s30, 0
      %p162 = por %p160, %p161
      %s164 = sadd.s32 %s163, 1
      %p167 = scmp.eq.s32.totalorder %s24, 1
      %p168 = scmp.ne.s32.totalorder %s163, %s165
      %p169 = scmp.eq.s32.totalorder %s24, 0
      %p170 = por %p168, %p169
      %p171 = scmp.ne.s32.totalorder %s163, %s165
      %p172 = scmp.eq.s32.totalorder %s29, 1
      %p173 = por %p171, %p172
      %p174 = scmp.ne.s32.totalorder %s165, %s166
      %p175 = scmp.eq.s32.totalorder %s29, 0
      %p176 = por %p174, %p175
      %p177 = scmp.ne.s32.totalorder %s165, %s166
      %p178 = scmp.eq.s32.totalorder %s30, 1
      %p179 = por %p177, %p178
      %p181 = scmp.ne.s32.totalorder %s166, %s180
      %p182 = scmp.eq.s32.totalorder %s30, 0
      %p183 = por %p181, %p182
      %s184 = ssub.s32 %s24, %s31
      %p185 = scmp.eq.s32.totalorder %s184, 0
      %s187 = sadd.s32 %s186, 1
      %s188 = scalar_select %p185, %s186, %s187
      %p191 = pneg %p185
      %p192 = scmp.eq.s32.totalorder %s24, 1
      %p193 = por %p191, %p192
      %p194 = scmp.ne.s32.totalorder %s186, %s189
      %p195 = scmp.eq.s32.totalorder %s24, 0
      %p196 = por %p194, %p195
      %p197 = scmp.ne.s32.totalorder %s186, %s189
      %p198 = scmp.eq.s32.totalorder %s29, 1
      %p199 = por %p197, %p198
      %p200 = scmp.ne.s32.totalorder %s189, %s190
      %p201 = scmp.eq.s32.totalorder %s29, 0
      %p202 = por %p200, %p201
      %p203 = scmp.ne.s32.totalorder %s189, %s190
      %p204 = scmp.eq.s32.totalorder %s30, 1
      %p205 = por %p203, %p204
      %p207 = scmp.ne.s32.totalorder %s190, %s206
      %p208 = scmp.eq.s32.totalorder %s30, 0
      %p209 = por %p207, %p208
      %s210 = ssub.s32 %s24, %s31
      %p211 = scmp.eq.s32.totalorder %s210, 0
      %s213 = sadd.s32 %s212, 1
      %s214 = scalar_select %p211, %s212, %s213
      %p217 = pneg %p211
      %p218 = scmp.eq.s32.totalorder %s24, 1
      %p219 = por %p217, %p218
      %p220 = scmp.ne.s32.totalorder %s212, %s215
      %p221 = scmp.eq.s32.totalorder %s24, 0
      %p222 = por %p220, %p221
      %p223 = scmp.ne.s32.totalorder %s212, %s215
      %p224 = scmp.eq.s32.totalorder %s29, 1
      %p225 = por %p223, %p224
      %p226 = scmp.ne.s32.totalorder %s215, %s216
      %p227 = scmp.eq.s32.totalorder %s29, 0
      %p228 = por %p226, %p227
      %p229 = scmp.ne.s32.totalorder %s215, %s216
      %p230 = scmp.eq.s32.totalorder %s30, 1
      %p231 = por %p229, %p230
      %p233 = scmp.ne.s32.totalorder %s216, %s232
      %p234 = scmp.eq.s32.totalorder %s30, 0
      %p235 = por %p233, %p234
      %p236 = scmp.le.s32.totalorder 1, %s24
      %p237 = scmp.lt.s32.totalorder %s24, 3
      %p238 = pnand %p236, %p237
      %p239 = pneg %p238
      // Predicated region
      $region9: #{_net_forward.1} parent=5 // pred_check
        _
      $region10: #{_net_forward.1} parent=5 // pred_check_branch
        %241 = sbr.rel (%p238) target = $region12
      $region11: #{_net_forward.1} parent=5 // pred_region
        %s242 = ssub.s32 %s24, 1
        // Predicated region
        $region13: #{_net_forward.1} parent=11 // pred_check
          %p243 = pneg %p71
        $region14: #{_net_forward.1} parent=11 // pred_check_branch
          %245 = sbr.rel (%p243) target = $region16
        $region15: #{_net_forward.1} parent=11 // pred_region
          %247 = vsyncadd [#allocation6], 0
          %s248 = sshll.u32 %s1, 4
          %s249 = int_to_ptr.hbm [resolvable:$true] %s248
          %s250 = sshll.u32 [#allocation5], 4
          %s251 = int_to_ptr.vmem [resolvable:$true] %s250
          %256 = dma.hbm_to_vmem [thread:$0]  %s249, 10240, %s251, [#allocation6], 512, 512, 32
        $region16: #{_net_forward.1} parent=11 // pred_fallthru
          _
        // Predicated region
        $region17: #{_net_forward.1} parent=11 // pred_check
          %p257 = pneg %p92
        $region18: #{_net_forward.1} parent=11 // pred_check_branch
          %259 = sbr.rel (%p257) target = $region20
        $region19: #{_net_forward.1} parent=11 // pred_region
          %261 = vsyncadd [#allocation9], 0
          %s263 = sshll.u32 %s2, 4
          %s264 = int_to_ptr.hbm [resolvable:$true] %s263
          %s265 = sshll.u32 [#allocation8], 4
          %s266 = int_to_ptr.vmem [resolvable:$true] %s265
          %268 = dma.hbm_to_vmem [thread:$0]  %s264, 32, %s266, [#allocation9]
        $region20: #{_net_forward.1} parent=11 // pred_fallthru
          _
        // Predicated region
        $region21: #{_net_forward.1} parent=11 // pred_check
          %p269 = pneg %p113
        $region22: #{_net_forward.1} parent=11 // pred_check_branch
          %271 = sbr.rel (%p269) target = $region24
        $region23: #{_net_forward.1} parent=11 // pred_region
          %273 = vsyncadd [#allocation9], 0
          %s274 = sshll.u32 %s3, 4
          %s275 = int_to_ptr.hbm [resolvable:$true] %s274
          %s276 = sshll.u32 [#allocation10], 4
          %s277 = int_to_ptr.vmem [resolvable:$true] %s276
          %282 = dma.hbm_to_vmem [thread:$0]  %s275, 46080, %s277, [#allocation9], 512, 512, 32
        $region24: #{_net_forward.1} parent=11 // pred_fallthru
          _
        // Predicated region
        $region25: #{_net_forward.1} parent=11 // pred_check
          %p283 = pneg %p134
        $region26: #{_net_forward.1} parent=11 // pred_check_branch
          %285 = sbr.rel (%p283) target = $region28
        $region27: #{_net_forward.1} parent=11 // pred_region
          %287 = vsyncadd [#allocation12], 0
          %s289 = sshll.u32 %s4, 4
          %s290 = int_to_ptr.hbm [resolvable:$true] %s289
          %s291 = sshll.u32 [#allocation11], 4
          %s292 = int_to_ptr.vmem [resolvable:$true] %s291
          %294 = dma.hbm_to_vmem [thread:$0]  %s290, 32, %s292, [#allocation12]
        $region28: #{_net_forward.1} parent=11 // pred_fallthru
          _
        // Predicated region
        $region29: #{_net_forward.1} parent=11 // pred_check
          %p295 = pneg %p155
        $region30: #{_net_forward.1} parent=11 // pred_check_branch
          %297 = sbr.rel (%p295) target = $region32
        $region31: #{_net_forward.1} parent=11 // pred_region
          _
        $region32: #{_net_forward.1} parent=11 // pred_fallthru
          _
        // Predicated region
        $region33: #{_net_forward.1} parent=11 // pred_check
          %p298 = pneg %p176
        $region34: #{_net_forward.1} parent=11 // pred_check_branch
          %300 = sbr.rel (%p298) target = $region36
        $region35: #{_net_forward.1} parent=11 // pred_region
          %302 = vsyncadd [#allocation12], 0
          %s304 = sshll.u32 %s6, 4
          %s305 = int_to_ptr.hbm [resolvable:$true] %s304
          %s306 = sshll.u32 [#allocation13], 4
          %s307 = int_to_ptr.vmem [resolvable:$true] %s306
          %309 = dma.hbm_to_vmem [thread:$0]  %s305, 16, %s307, [#allocation12]
        $region36: #{_net_forward.1} parent=11 // pred_fallthru
          _
      $region12: #{_net_forward.1} parent=5 // pred_fallthru
        _
      %p310 = scmp.lt.s32.totalorder %s24, 2
      // Predicated region
      $region37: #{_net_forward.1} parent=5 // pred_check
        %p311 = pneg %p310
      $region38: #{_net_forward.1} parent=5 // pred_check_branch
        %313 = sbr.rel (%p311) target = $region40
      $region39: #{_net_forward.1} parent=5 // pred_region
        // Predicated region
        $region41: #{_net_forward.1} parent=39 // pred_check
          %p314 = pneg %p44
        $region42: #{_net_forward.1} parent=39 // pred_check_branch
          %316 = sbr.rel (%p314) target = $region44
        $region43: #{_net_forward.1} parent=39 // pred_region
          %p317 = scmp.lt.s32.totalorder %s24, 1
          %s318 = scalar_select %p317, %s24, 1
          %s319 = smul.addr %s318, 4
          %s320 = smul.addr %s319, 8
          %s321 = scalar_lea.vmem %s0, %s320
        $region44: #{_net_forward.1} parent=39 // pred_fallthru
          _
      $region40: #{_net_forward.1} parent=5 // pred_fallthru
        _
      %p322 = scmp.le.s32.totalorder 1, %s24
      %p323 = scmp.lt.s32.totalorder %s24, 3
      %p324 = pnand %p322, %p323
      %p325 = pneg %p324
      // Predicated region
      $region45: #{_net_forward.1} parent=5 // pred_check
        _
      $region46: #{_net_forward.1} parent=5 // pred_check_branch
        %327 = sbr.rel (%p324) target = $region48
      $region47: #{_net_forward.1} parent=5 // pred_region
        %s328 = ssub.s32 %s24, 1
        // Predicated region
        $region49: #{_net_forward.1} parent=47 // pred_check
          %p329 = pneg %p71
        $region50: #{_net_forward.1} parent=47 // pred_check_branch
          %331 = sbr.rel (%p329) target = $region52
        $region51: #{_net_forward.1} parent=47 // pred_region
          %333 = dma.done [#allocation6], 10240
        $region52: #{_net_forward.1} parent=47 // pred_fallthru
          _
        // Predicated region
        $region53: #{_net_forward.1} parent=47 // pred_check
          %p334 = pneg %p92
        $region54: #{_net_forward.1} parent=47 // pred_check_branch
          %336 = sbr.rel (%p334) target = $region56
        $region55: #{_net_forward.1} parent=47 // pred_region
          %338 = dma.done [#allocation9], 32
        $region56: #{_net_forward.1} parent=47 // pred_fallthru
          _
        // Predicated region
        $region57: #{_net_forward.1} parent=47 // pred_check
          %p339 = pneg %p113
        $region58: #{_net_forward.1} parent=47 // pred_check_branch
          %341 = sbr.rel (%p339) target = $region60
        $region59: #{_net_forward.1} parent=47 // pred_region
          %343 = dma.done [#allocation9], 46080
        $region60: #{_net_forward.1} parent=47 // pred_fallthru
          _
        // Predicated region
        $region61: #{_net_forward.1} parent=47 // pred_check
          %p344 = pneg %p134
        $region62: #{_net_forward.1} parent=47 // pred_check_branch
          %346 = sbr.rel (%p344) target = $region64
        $region63: #{_net_forward.1} parent=47 // pred_region
          %348 = dma.done [#allocation12], 32
        $region64: #{_net_forward.1} parent=47 // pred_fallthru
          _
        // Predicated region
        $region65: #{_net_forward.1} parent=47 // pred_check
          %p349 = pneg %p176
        $region66: #{_net_forward.1} parent=47 // pred_check_branch
          %351 = sbr.rel (%p349) target = $region68
        $region67: #{_net_forward.1} parent=47 // pred_region
          %353 = dma.done [#allocation12], 16
        $region68: #{_net_forward.1} parent=47 // pred_fallthru
          _
        %p354 = scmp.lt.s32.totalorder %s29, 1
        %s355 = scalar_select %p354, %s29, 1
        %s356 = smul.addr %s355, 4
        %s357 = smul.addr %s356, 8
        %s358 = scalar_lea.vmem %s0, %s357
        %p359 = pneg %p50
        %p360 = pneg %p47
        %p361 = pneg %p71
        %p362 = pneg %p68
        %p363 = pneg %p92
        %p364 = pneg %p89
        %p365 = pneg %p113
        %p366 = pneg %p110
        %p367 = pneg %p134
        %p368 = pneg %p131
        %p369 = pneg %p155
        %p370 = pneg %p152
        %p371 = pneg %p176
        %p372 = pneg %p173
        %p373 = pneg %p202
        %p374 = pneg %p199
        %s375 = sand.u32 %s189, 1
        %s376 = scalar_lea.sflag [#allocation7], %s375
        %s377 = sand.u32 %s189, 1
        %s378 = scalar_lea.vmem [#allocation14], %s377
        %p379 = pneg %p228
        %p380 = pneg %p225
        %s381 = sand.u32 %s215, 1
        %s382 = scalar_lea.sflag [#allocation16], %s381
        %s383 = sand.u32 %s215, 1
        %s384 = scalar_lea.vmem [#allocation15], %s383
        %p385 = scmp.lt.s32.totalorder %s29, 1
        %s386 = scalar_select %p385, %s29, 1
        %s387 = smul.addr %s386, 4
        %s388 = smul.addr %s387, 8
        %s389 = scalar_lea.vmem %s0, %s388
        %v390 = vld [vmem:[#allocation5] sm:$0xff]
        %v391 = vld [vmem:[#allocation5 + $0x8] sm:$0xff]
        %v392 = vld [vmem:[#allocation5 + $0x10] sm:$0xff]
        %v393 = vld [vmem:[#allocation5 + $0x18] sm:$0xff]
        %v394 = vld [vmem:[#allocation5 + $0x20] sm:$0xff]
        %v395 = vld [vmem:[#allocation5 + $0x28] sm:$0xff]
        %v396 = vld [vmem:[#allocation5 + $0x30] sm:$0xff]
        %v397 = vld [vmem:[#allocation5 + $0x38] sm:$0xff]
        %v398 = vld [vmem:[#allocation5 + $0x40] sm:$0xff]
        %v399 = vld [vmem:[#allocation5 + $0x48] sm:$0xff]
        %v400 = vld [vmem:[#allocation5 + $0x50] sm:$0xff]
        %v401 = vld [vmem:[#allocation5 + $0x58] sm:$0xff]
        %v402 = vld [vmem:[#allocation5 + $0x60] sm:$0xf]
        %v403 = vld [vmem:[#allocation5 + $0x68] sm:$0xf]
        %v404 = vld [vmem:[#allocation5 + $0x70] sm:$0xf]
        %v405 = vld [vmem:[#allocation5 + $0x78] sm:$0xf]
        %v406 = vld [vmem:[%s389] sm:$0x3f]
        %s407 = scalar_lea.vmem %s389, 8
        %v408 = vld [vmem:[%s407] sm:$0x3f]
        %s409 = scalar_lea.vmem %s389, 16
        %v410 = vld [vmem:[%s409] sm:$0x3f]
        %s411 = scalar_lea.vmem %s389, 24
        %v412 = vld [vmem:[%s411] sm:$0x3f]
        %s413 = scalar_lea.vmem [#allocation5], 128
        %v414 = vld [vmem:[%s413] sm:$0xff]
        %v415 = vld [vmem:[%s413 + $0x8] sm:$0xff]
        %v416 = vld [vmem:[%s413 + $0x10] sm:$0xff]
        %v417 = vld [vmem:[%s413 + $0x18] sm:$0xff]
        %v418 = vld [vmem:[%s413 + $0x20] sm:$0xff]
        %v419 = vld [vmem:[%s413 + $0x28] sm:$0xff]
        %v420 = vld [vmem:[%s413 + $0x30] sm:$0xff]
        %v421 = vld [vmem:[%s413 + $0x38] sm:$0xff]
        %v422 = vld [vmem:[%s413 + $0x40] sm:$0xff]
        %v423 = vld [vmem:[%s413 + $0x48] sm:$0xff]
        %v424 = vld [vmem:[%s413 + $0x50] sm:$0xff]
        %v425 = vld [vmem:[%s413 + $0x58] sm:$0xff]
        %v426 = vld [vmem:[%s413 + $0x60] sm:$0xf]
        %v427 = vld [vmem:[%s413 + $0x68] sm:$0xf]
        %v428 = vld [vmem:[%s413 + $0x70] sm:$0xf]
        %v429 = vld [vmem:[%s413 + $0x78] sm:$0xf]
        %vm430 = vcmask 228352
        %v432 = vsel %vm430, %v408, 0
        %vm434 = vcmask 1043456
        %v436 = vsel %vm434, %v426, 0
        %v439 = vsel %vm434, %v427, 0
        %v442 = vsel %vm434, %v428, 0
        %v445 = vsel %vm434, %v429, 0
        %447 = vmatpush.msra.mxu0 0.0
        %448 = vmatpush.msra.mxu0 0.0
        %449 = vmatpush.msra.mxu0 0.0
        %450 = vmatpush.msra.mxu0 0.0
        %451 = vmatpush.msra.mxu0 0.0
        %452 = vmatpush.msra.mxu0 0.0
        %453 = vmatpush.msra.mxu0 0.0
        %454 = vmatpush.msra.mxu0 0.0
        %455 = vmatpush.msra.mxu0 0.0
        %456 = vmatpush.msra.mxu0 0.0
        %457 = vmatpush.msra.mxu0 0.0
        %458 = vmatpush.msra.mxu0 0.0
        %459 = vmatpush.msra.mxu0 %v436
        %460 = vmatpush.msra.mxu0 %v422
        %461 = vmatpush.msra.mxu0 %v418
        %462 = vmatpush.msra.mxu0 %v414
        %463 = vmatmul.f32.gmra.mxu0 %v432
        %v464 = vpop.f32.mrf.mxu0
        %v465 = vadd.f32 0.0, %v464
        %466 = vdwg.mxu0
        %467 = vmatpush.msra.mxu0 0.0
        %468 = vmatpush.msra.mxu0 0.0
        %469 = vmatpush.msra.mxu0 0.0
        %470 = vmatpush.msra.mxu0 0.0
        %471 = vmatpush.msra.mxu0 0.0
        %472 = vmatpush.msra.mxu0 0.0
        %473 = vmatpush.msra.mxu0 0.0
        %474 = vmatpush.msra.mxu0 0.0
        %475 = vmatpush.msra.mxu0 0.0
        %476 = vmatpush.msra.mxu0 0.0
        %477 = vmatpush.msra.mxu0 0.0
        %478 = vmatpush.msra.mxu0 0.0
        %479 = vmatpush.msra.mxu0 %v439
        %480 = vmatpush.msra.mxu0 %v423
        %481 = vmatpush.msra.mxu0 %v419
        %482 = vmatpush.msra.mxu0 %v415
        %483 = vmatmul.f32.gmra.mxu0 %v432
        %v484 = vpop.f32.mrf.mxu0
        %v485 = vadd.f32 0.0, %v484
        %486 = vdwg.mxu0
        %487 = vmatpush.msra.mxu0 0.0
        %488 = vmatpush.msra.mxu0 0.0
        %489 = vmatpush.msra.mxu0 0.0
        %490 = vmatpush.msra.mxu0 0.0
        %491 = vmatpush.msra.mxu0 0.0
        %492 = vmatpush.msra.mxu0 0.0
        %493 = vmatpush.msra.mxu0 0.0
        %494 = vmatpush.msra.mxu0 0.0
        %495 = vmatpush.msra.mxu0 0.0
        %496 = vmatpush.msra.mxu0 0.0
        %497 = vmatpush.msra.mxu0 0.0
        %498 = vmatpush.msra.mxu0 0.0
        %499 = vmatpush.msra.mxu0 %v442
        %500 = vmatpush.msra.mxu0 %v424
        %501 = vmatpush.msra.mxu0 %v420
        %502 = vmatpush.msra.mxu0 %v416
        %503 = vmatmul.f32.gmra.mxu0 %v432
        %v504 = vpop.f32.mrf.mxu0
        %v505 = vadd.f32 0.0, %v504
        %506 = vdwg.mxu0
        %507 = vmatpush.msra.mxu0 0.0
        %508 = vmatpush.msra.mxu0 0.0
        %509 = vmatpush.msra.mxu0 0.0
        %510 = vmatpush.msra.mxu0 0.0
        %511 = vmatpush.msra.mxu0 0.0
        %512 = vmatpush.msra.mxu0 0.0
        %513 = vmatpush.msra.mxu0 0.0
        %514 = vmatpush.msra.mxu0 0.0
        %515 = vmatpush.msra.mxu0 0.0
        %516 = vmatpush.msra.mxu0 0.0
        %517 = vmatpush.msra.mxu0 0.0
        %518 = vmatpush.msra.mxu0 0.0
        %519 = vmatpush.msra.mxu0 %v445
        %520 = vmatpush.msra.mxu0 %v425
        %521 = vmatpush.msra.mxu0 %v421
        %522 = vmatpush.msra.mxu0 %v417
        %523 = vmatmul.f32.gmra.mxu0 %v432
        %v524 = vpop.f32.mrf.mxu0
        %v525 = vadd.f32 0.0, %v524
        %526 = vdwg.mxu0
        %v528 = vsel %vm430, %v406, 0
        %v531 = vsel %vm434, %v402, 0
        %v534 = vsel %vm434, %v403, 0
        %v537 = vsel %vm434, %v404, 0
        %v540 = vsel %vm434, %v405, 0
        %542 = vmatpush.msra.mxu0 0.0
        %543 = vmatpush.msra.mxu0 0.0
        %544 = vmatpush.msra.mxu0 0.0
        %545 = vmatpush.msra.mxu0 0.0
        %546 = vmatpush.msra.mxu0 0.0
        %547 = vmatpush.msra.mxu0 0.0
        %548 = vmatpush.msra.mxu0 0.0
        %549 = vmatpush.msra.mxu0 0.0
        %550 = vmatpush.msra.mxu0 0.0
        %551 = vmatpush.msra.mxu0 0.0
        %552 = vmatpush.msra.mxu0 0.0
        %553 = vmatpush.msra.mxu0 0.0
        %554 = vmatpush.msra.mxu0 %v531
        %555 = vmatpush.msra.mxu0 %v398
        %556 = vmatpush.msra.mxu0 %v394
        %557 = vmatpush.msra.mxu0 %v390
        %558 = vmatmul.f32.gmra.mxu0 %v528
        %v559 = vpop.f32.mrf.mxu0
        %v560 = vadd.f32 %v465, %v559
        %561 = vdwg.mxu0
        %562 = vmatpush.msra.mxu0 0.0
        %563 = vmatpush.msra.mxu0 0.0
        %564 = vmatpush.msra.mxu0 0.0
        %565 = vmatpush.msra.mxu0 0.0
        %566 = vmatpush.msra.mxu0 0.0
        %567 = vmatpush.msra.mxu0 0.0
        %568 = vmatpush.msra.mxu0 0.0
        %569 = vmatpush.msra.mxu0 0.0
        %570 = vmatpush.msra.mxu0 0.0
        %571 = vmatpush.msra.mxu0 0.0
        %572 = vmatpush.msra.mxu0 0.0
        %573 = vmatpush.msra.mxu0 0.0
        %574 = vmatpush.msra.mxu0 %v534
        %575 = vmatpush.msra.mxu0 %v399
        %576 = vmatpush.msra.mxu0 %v395
        %577 = vmatpush.msra.mxu0 %v391
        %578 = vmatmul.f32.gmra.mxu0 %v528
        %v579 = vpop.f32.mrf.mxu0
        %v580 = vadd.f32 %v485, %v579
        %581 = vdwg.mxu0
        %582 = vmatpush.msra.mxu0 0.0
        %583 = vmatpush.msra.mxu0 0.0
        %584 = vmatpush.msra.mxu0 0.0
        %585 = vmatpush.msra.mxu0 0.0
        %586 = vmatpush.msra.mxu0 0.0
        %587 = vmatpush.msra.mxu0 0.0
        %588 = vmatpush.msra.mxu0 0.0
        %589 = vmatpush.msra.mxu0 0.0
        %590 = vmatpush.msra.mxu0 0.0
        %591 = vmatpush.msra.mxu0 0.0
        %592 = vmatpush.msra.mxu0 0.0
        %593 = vmatpush.msra.mxu0 0.0
        %594 = vmatpush.msra.mxu0 %v537
        %595 = vmatpush.msra.mxu0 %v400
        %596 = vmatpush.msra.mxu0 %v396
        %597 = vmatpush.msra.mxu0 %v392
        %598 = vmatmul.f32.gmra.mxu0 %v528
        %v599 = vpop.f32.mrf.mxu0
        %v600 = vadd.f32 %v505, %v599
        %601 = vdwg.mxu0
        %602 = vmatpush.msra.mxu0 0.0
        %603 = vmatpush.msra.mxu0 0.0
        %604 = vmatpush.msra.mxu0 0.0
        %605 = vmatpush.msra.mxu0 0.0
        %606 = vmatpush.msra.mxu0 0.0
        %607 = vmatpush.msra.mxu0 0.0
        %608 = vmatpush.msra.mxu0 0.0
        %609 = vmatpush.msra.mxu0 0.0
        %610 = vmatpush.msra.mxu0 0.0
        %611 = vmatpush.msra.mxu0 0.0
        %612 = vmatpush.msra.mxu0 0.0
        %613 = vmatpush.msra.mxu0 0.0
        %614 = vmatpush.msra.mxu0 %v540
        %615 = vmatpush.msra.mxu0 %v401
        %616 = vmatpush.msra.mxu0 %v397
        %617 = vmatpush.msra.mxu0 %v393
        %618 = vmatmul.f32.gmra.mxu0 %v528
        %v619 = vpop.f32.mrf.mxu0
        %v620 = vadd.f32 %v525, %v619
        %621 = vdwg.mxu0
        %v623 = vsel %vm430, %v410, 0
        %625 = vmatpush.msra.mxu0 0.0
        %626 = vmatpush.msra.mxu0 0.0
        %627 = vmatpush.msra.mxu0 0.0
        %628 = vmatpush.msra.mxu0 0.0
        %629 = vmatpush.msra.mxu0 0.0
        %630 = vmatpush.msra.mxu0 0.0
        %631 = vmatpush.msra.mxu0 0.0
        %632 = vmatpush.msra.mxu0 0.0
        %633 = vmatpush.msra.mxu0 0.0
        %634 = vmatpush.msra.mxu0 0.0
        %635 = vmatpush.msra.mxu0 0.0
        %636 = vmatpush.msra.mxu0 0.0
        %637 = vmatpush.msra.mxu0 %v436
        %638 = vmatpush.msra.mxu0 %v422
        %639 = vmatpush.msra.mxu0 %v418
        %640 = vmatpush.msra.mxu0 %v414
        %641 = vmatmul.f32.gmra.mxu0 %v623
        %v642 = vpop.f32.mrf.mxu0
        %v643 = vadd.f32 0.0, %v642
        %644 = vdwg.mxu0
        %645 = vmatpush.msra.mxu0 0.0
        %646 = vmatpush.msra.mxu0 0.0
        %647 = vmatpush.msra.mxu0 0.0
        %648 = vmatpush.msra.mxu0 0.0
        %649 = vmatpush.msra.mxu0 0.0
        %650 = vmatpush.msra.mxu0 0.0
        %651 = vmatpush.msra.mxu0 0.0
        %652 = vmatpush.msra.mxu0 0.0
        %653 = vmatpush.msra.mxu0 0.0
        %654 = vmatpush.msra.mxu0 0.0
        %655 = vmatpush.msra.mxu0 0.0
        %656 = vmatpush.msra.mxu0 0.0
        %657 = vmatpush.msra.mxu0 %v439
        %658 = vmatpush.msra.mxu0 %v423
        %659 = vmatpush.msra.mxu0 %v419
        %660 = vmatpush.msra.mxu0 %v415
        %661 = vmatmul.f32.gmra.mxu0 %v623
        %v662 = vpop.f32.mrf.mxu0
        %v663 = vadd.f32 0.0, %v662
        %664 = vdwg.mxu0
        %665 = vmatpush.msra.mxu0 0.0
        %666 = vmatpush.msra.mxu0 0.0
        %667 = vmatpush.msra.mxu0 0.0
        %668 = vmatpush.msra.mxu0 0.0
        %669 = vmatpush.msra.mxu0 0.0
        %670 = vmatpush.msra.mxu0 0.0
        %671 = vmatpush.msra.mxu0 0.0
        %672 = vmatpush.msra.mxu0 0.0
        %673 = vmatpush.msra.mxu0 0.0
        %674 = vmatpush.msra.mxu0 0.0
        %675 = vmatpush.msra.mxu0 0.0
        %676 = vmatpush.msra.mxu0 0.0
        %677 = vmatpush.msra.mxu0 %v442
        %678 = vmatpush.msra.mxu0 %v424
        %679 = vmatpush.msra.mxu0 %v420
        %680 = vmatpush.msra.mxu0 %v416
        %681 = vmatmul.f32.gmra.mxu0 %v623
        %v682 = vpop.f32.mrf.mxu0
        %v683 = vadd.f32 0.0, %v682
        %684 = vdwg.mxu0
        %685 = vmatpush.msra.mxu0 0.0
        %686 = vmatpush.msra.mxu0 0.0
        %687 = vmatpush.msra.mxu0 0.0
        %688 = vmatpush.msra.mxu0 0.0
        %689 = vmatpush.msra.mxu0 0.0
        %690 = vmatpush.msra.mxu0 0.0
        %691 = vmatpush.msra.mxu0 0.0
        %692 = vmatpush.msra.mxu0 0.0
        %693 = vmatpush.msra.mxu0 0.0
        %694 = vmatpush.msra.mxu0 0.0
        %695 = vmatpush.msra.mxu0 0.0
        %696 = vmatpush.msra.mxu0 0.0
        %697 = vmatpush.msra.mxu0 %v445
        %698 = vmatpush.msra.mxu0 %v425
        %699 = vmatpush.msra.mxu0 %v421
        %700 = vmatpush.msra.mxu0 %v417
        %701 = vmatmul.f32.gmra.mxu0 %v623
        %v702 = vpop.f32.mrf.mxu0
        %v703 = vadd.f32 0.0, %v702
        %704 = vdwg.mxu0
        %705 = vmatpush.msra.mxu0 0.0
        %706 = vmatpush.msra.mxu0 0.0
        %707 = vmatpush.msra.mxu0 0.0
        %708 = vmatpush.msra.mxu0 0.0
        %709 = vmatpush.msra.mxu0 0.0
        %710 = vmatpush.msra.mxu0 0.0
        %711 = vmatpush.msra.mxu0 0.0
        %712 = vmatpush.msra.mxu0 0.0
        %713 = vmatpush.msra.mxu0 0.0
        %714 = vmatpush.msra.mxu0 0.0
        %715 = vmatpush.msra.mxu0 0.0
        %716 = vmatpush.msra.mxu0 0.0
        %717 = vmatpush.msra.mxu0 %v531
        %718 = vmatpush.msra.mxu0 %v398
        %719 = vmatpush.msra.mxu0 %v394
        %720 = vmatpush.msra.mxu0 %v390
        %721 = vmatmul.f32.gmra.mxu0 %v432
        %v722 = vpop.f32.mrf.mxu0
        %v723 = vadd.f32 %v643, %v722
        %724 = vdwg.mxu0
        %725 = vmatpush.msra.mxu0 0.0
        %726 = vmatpush.msra.mxu0 0.0
        %727 = vmatpush.msra.mxu0 0.0
        %728 = vmatpush.msra.mxu0 0.0
        %729 = vmatpush.msra.mxu0 0.0
        %730 = vmatpush.msra.mxu0 0.0
        %731 = vmatpush.msra.mxu0 0.0
        %732 = vmatpush.msra.mxu0 0.0
        %733 = vmatpush.msra.mxu0 0.0
        %734 = vmatpush.msra.mxu0 0.0
        %735 = vmatpush.msra.mxu0 0.0
        %736 = vmatpush.msra.mxu0 0.0
        %737 = vmatpush.msra.mxu0 %v534
        %738 = vmatpush.msra.mxu0 %v399
        %739 = vmatpush.msra.mxu0 %v395
        %740 = vmatpush.msra.mxu0 %v391
        %741 = vmatmul.f32.gmra.mxu0 %v432
        %v742 = vpop.f32.mrf.mxu0
        %v743 = vadd.f32 %v663, %v742
        %744 = vdwg.mxu0
        %745 = vmatpush.msra.mxu0 0.0
        %746 = vmatpush.msra.mxu0 0.0
        %747 = vmatpush.msra.mxu0 0.0
        %748 = vmatpush.msra.mxu0 0.0
        %749 = vmatpush.msra.mxu0 0.0
        %750 = vmatpush.msra.mxu0 0.0
        %751 = vmatpush.msra.mxu0 0.0
        %752 = vmatpush.msra.mxu0 0.0
        %753 = vmatpush.msra.mxu0 0.0
        %754 = vmatpush.msra.mxu0 0.0
        %755 = vmatpush.msra.mxu0 0.0
        %756 = vmatpush.msra.mxu0 0.0
        %757 = vmatpush.msra.mxu0 %v537
        %758 = vmatpush.msra.mxu0 %v400
        %759 = vmatpush.msra.mxu0 %v396
        %760 = vmatpush.msra.mxu0 %v392
        %761 = vmatmul.f32.gmra.mxu0 %v432
        %v762 = vpop.f32.mrf.mxu0
        %v763 = vadd.f32 %v683, %v762
        %764 = vdwg.mxu0
        %765 = vmatpush.msra.mxu0 0.0
        %766 = vmatpush.msra.mxu0 0.0
        %767 = vmatpush.msra.mxu0 0.0
        %768 = vmatpush.msra.mxu0 0.0
        %769 = vmatpush.msra.mxu0 0.0
        %770 = vmatpush.msra.mxu0 0.0
        %771 = vmatpush.msra.mxu0 0.0
        %772 = vmatpush.msra.mxu0 0.0
        %773 = vmatpush.msra.mxu0 0.0
        %774 = vmatpush.msra.mxu0 0.0
        %775 = vmatpush.msra.mxu0 0.0
        %776 = vmatpush.msra.mxu0 0.0
        %777 = vmatpush.msra.mxu0 %v540
        %778 = vmatpush.msra.mxu0 %v401
        %779 = vmatpush.msra.mxu0 %v397
        %780 = vmatpush.msra.mxu0 %v393
        %781 = vmatmul.f32.gmra.mxu0 %v432
        %v782 = vpop.f32.mrf.mxu0
        %v783 = vadd.f32 %v703, %v782
        %784 = vdwg.mxu0
        %v786 = vsel %vm430, %v412, 0
        %788 = vmatpush.msra.mxu0 0.0
        %789 = vmatpush.msra.mxu0 0.0
        %790 = vmatpush.msra.mxu0 0.0
        %791 = vmatpush.msra.mxu0 0.0
        %792 = vmatpush.msra.mxu0 0.0
        %793 = vmatpush.msra.mxu0 0.0
        %794 = vmatpush.msra.mxu0 0.0
        %795 = vmatpush.msra.mxu0 0.0
        %796 = vmatpush.msra.mxu0 0.0
        %797 = vmatpush.msra.mxu0 0.0
        %798 = vmatpush.msra.mxu0 0.0
        %799 = vmatpush.msra.mxu0 0.0
        %800 = vmatpush.msra.mxu0 %v436
        %801 = vmatpush.msra.mxu0 %v422
        %802 = vmatpush.msra.mxu0 %v418
        %803 = vmatpush.msra.mxu0 %v414
        %804 = vmatmul.f32.gmra.mxu0 %v786
        %v805 = vpop.f32.mrf.mxu0
        %v806 = vadd.f32 0.0, %v805
        %807 = vdwg.mxu0
        %808 = vmatpush.msra.mxu0 0.0
        %809 = vmatpush.msra.mxu0 0.0
        %810 = vmatpush.msra.mxu0 0.0
        %811 = vmatpush.msra.mxu0 0.0
        %812 = vmatpush.msra.mxu0 0.0
        %813 = vmatpush.msra.mxu0 0.0
        %814 = vmatpush.msra.mxu0 0.0
        %815 = vmatpush.msra.mxu0 0.0
        %816 = vmatpush.msra.mxu0 0.0
        %817 = vmatpush.msra.mxu0 0.0
        %818 = vmatpush.msra.mxu0 0.0
        %819 = vmatpush.msra.mxu0 0.0
        %820 = vmatpush.msra.mxu0 %v439
        %821 = vmatpush.msra.mxu0 %v423
        %822 = vmatpush.msra.mxu0 %v419
        %823 = vmatpush.msra.mxu0 %v415
        %824 = vmatmul.f32.gmra.mxu0 %v786
        %v825 = vpop.f32.mrf.mxu0
        %v826 = vadd.f32 0.0, %v825
        %827 = vdwg.mxu0
        %828 = vmatpush.msra.mxu0 0.0
        %829 = vmatpush.msra.mxu0 0.0
        %830 = vmatpush.msra.mxu0 0.0
        %831 = vmatpush.msra.mxu0 0.0
        %832 = vmatpush.msra.mxu0 0.0
        %833 = vmatpush.msra.mxu0 0.0
        %834 = vmatpush.msra.mxu0 0.0
        %835 = vmatpush.msra.mxu0 0.0
        %836 = vmatpush.msra.mxu0 0.0
        %837 = vmatpush.msra.mxu0 0.0
        %838 = vmatpush.msra.mxu0 0.0
        %839 = vmatpush.msra.mxu0 0.0
        %840 = vmatpush.msra.mxu0 %v442
        %841 = vmatpush.msra.mxu0 %v424
        %842 = vmatpush.msra.mxu0 %v420
        %843 = vmatpush.msra.mxu0 %v416
        %844 = vmatmul.f32.gmra.mxu0 %v786
        %v845 = vpop.f32.mrf.mxu0
        %v846 = vadd.f32 0.0, %v845
        %847 = vdwg.mxu0
        %848 = vmatpush.msra.mxu0 0.0
        %849 = vmatpush.msra.mxu0 0.0
        %850 = vmatpush.msra.mxu0 0.0
        %851 = vmatpush.msra.mxu0 0.0
        %852 = vmatpush.msra.mxu0 0.0
        %853 = vmatpush.msra.mxu0 0.0
        %854 = vmatpush.msra.mxu0 0.0
        %855 = vmatpush.msra.mxu0 0.0
        %856 = vmatpush.msra.mxu0 0.0
        %857 = vmatpush.msra.mxu0 0.0
        %858 = vmatpush.msra.mxu0 0.0
        %859 = vmatpush.msra.mxu0 0.0
        %860 = vmatpush.msra.mxu0 %v445
        %861 = vmatpush.msra.mxu0 %v425
        %862 = vmatpush.msra.mxu0 %v421
        %863 = vmatpush.msra.mxu0 %v417
        %864 = vmatmul.f32.gmra.mxu0 %v786
        %v865 = vpop.f32.mrf.mxu0
        %v866 = vadd.f32 0.0, %v865
        %867 = vdwg.mxu0
        %868 = vmatpush.msra.mxu0 0.0
        %869 = vmatpush.msra.mxu0 0.0
        %870 = vmatpush.msra.mxu0 0.0
        %871 = vmatpush.msra.mxu0 0.0
        %872 = vmatpush.msra.mxu0 0.0
        %873 = vmatpush.msra.mxu0 0.0
        %874 = vmatpush.msra.mxu0 0.0
        %875 = vmatpush.msra.mxu0 0.0
        %876 = vmatpush.msra.mxu0 0.0
        %877 = vmatpush.msra.mxu0 0.0
        %878 = vmatpush.msra.mxu0 0.0
        %879 = vmatpush.msra.mxu0 0.0
        %880 = vmatpush.msra.mxu0 %v531
        %881 = vmatpush.msra.mxu0 %v398
        %882 = vmatpush.msra.mxu0 %v394
        %883 = vmatpush.msra.mxu0 %v390
        %884 = vmatmul.f32.gmra.mxu0 %v623
        %v885 = vpop.f32.mrf.mxu0
        %v886 = vadd.f32 %v806, %v885
        %887 = vdwg.mxu0
        %888 = vmatpush.msra.mxu0 0.0
        %889 = vmatpush.msra.mxu0 0.0
        %890 = vmatpush.msra.mxu0 0.0
        %891 = vmatpush.msra.mxu0 0.0
        %892 = vmatpush.msra.mxu0 0.0
        %893 = vmatpush.msra.mxu0 0.0
        %894 = vmatpush.msra.mxu0 0.0
        %895 = vmatpush.msra.mxu0 0.0
        %896 = vmatpush.msra.mxu0 0.0
        %897 = vmatpush.msra.mxu0 0.0
        %898 = vmatpush.msra.mxu0 0.0
        %899 = vmatpush.msra.mxu0 0.0
        %900 = vmatpush.msra.mxu0 %v534
        %901 = vmatpush.msra.mxu0 %v399
        %902 = vmatpush.msra.mxu0 %v395
        %903 = vmatpush.msra.mxu0 %v391
        %904 = vmatmul.f32.gmra.mxu0 %v623
        %v905 = vpop.f32.mrf.mxu0
        %v906 = vadd.f32 %v826, %v905
        %907 = vdwg.mxu0
        %908 = vmatpush.msra.mxu0 0.0
        %909 = vmatpush.msra.mxu0 0.0
        %910 = vmatpush.msra.mxu0 0.0
        %911 = vmatpush.msra.mxu0 0.0
        %912 = vmatpush.msra.mxu0 0.0
        %913 = vmatpush.msra.mxu0 0.0
        %914 = vmatpush.msra.mxu0 0.0
        %915 = vmatpush.msra.mxu0 0.0
        %916 = vmatpush.msra.mxu0 0.0
        %917 = vmatpush.msra.mxu0 0.0
        %918 = vmatpush.msra.mxu0 0.0
        %919 = vmatpush.msra.mxu0 0.0
        %920 = vmatpush.msra.mxu0 %v537
        %921 = vmatpush.msra.mxu0 %v400
        %922 = vmatpush.msra.mxu0 %v396
        %923 = vmatpush.msra.mxu0 %v392
        %924 = vmatmul.f32.gmra.mxu0 %v623
        %v925 = vpop.f32.mrf.mxu0
        %v926 = vadd.f32 %v846, %v925
        %927 = vdwg.mxu0
        %928 = vmatpush.msra.mxu0 0.0
        %929 = vmatpush.msra.mxu0 0.0
        %930 = vmatpush.msra.mxu0 0.0
        %931 = vmatpush.msra.mxu0 0.0
        %932 = vmatpush.msra.mxu0 0.0
        %933 = vmatpush.msra.mxu0 0.0
        %934 = vmatpush.msra.mxu0 0.0
        %935 = vmatpush.msra.mxu0 0.0
        %936 = vmatpush.msra.mxu0 0.0
        %937 = vmatpush.msra.mxu0 0.0
        %938 = vmatpush.msra.mxu0 0.0
        %939 = vmatpush.msra.mxu0 0.0
        %940 = vmatpush.msra.mxu0 %v540
        %941 = vmatpush.msra.mxu0 %v401
        %942 = vmatpush.msra.mxu0 %v397
        %943 = vmatpush.msra.mxu0 %v393
        %944 = vmatmul.f32.gmra.mxu0 %v623
        %v945 = vpop.f32.mrf.mxu0
        %v946 = vadd.f32 %v866, %v945
        %947 = vdwg.mxu0
        %v948 = vld [vmem:[%s389 + $0x1] sm:$0x3f]
        %v950 = vsel %vm430, %v948, 0
        %952 = vmatpush.msra.mxu0 0.0
        %953 = vmatpush.msra.mxu0 0.0
        %954 = vmatpush.msra.mxu0 0.0
        %955 = vmatpush.msra.mxu0 0.0
        %956 = vmatpush.msra.mxu0 0.0
        %957 = vmatpush.msra.mxu0 0.0
        %958 = vmatpush.msra.mxu0 0.0
        %959 = vmatpush.msra.mxu0 0.0
        %960 = vmatpush.msra.mxu0 0.0
        %961 = vmatpush.msra.mxu0 0.0
        %962 = vmatpush.msra.mxu0 0.0
        %963 = vmatpush.msra.mxu0 0.0
        %964 = vmatpush.msra.mxu0 %v436
        %965 = vmatpush.msra.mxu0 %v422
        %966 = vmatpush.msra.mxu0 %v418
        %967 = vmatpush.msra.mxu0 %v414
        %968 = vmatmul.f32.gmra.mxu0 %v950
        %v969 = vpop.f32.mrf.mxu0
        %v970 = vadd.f32 0.0, %v969
        %971 = vdwg.mxu0
        %972 = vmatpush.msra.mxu0 0.0
        %973 = vmatpush.msra.mxu0 0.0
        %974 = vmatpush.msra.mxu0 0.0
        %975 = vmatpush.msra.mxu0 0.0
        %976 = vmatpush.msra.mxu0 0.0
        %977 = vmatpush.msra.mxu0 0.0
        %978 = vmatpush.msra.mxu0 0.0
        %979 = vmatpush.msra.mxu0 0.0
        %980 = vmatpush.msra.mxu0 0.0
        %981 = vmatpush.msra.mxu0 0.0
        %982 = vmatpush.msra.mxu0 0.0
        %983 = vmatpush.msra.mxu0 0.0
        %984 = vmatpush.msra.mxu0 %v439
        %985 = vmatpush.msra.mxu0 %v423
        %986 = vmatpush.msra.mxu0 %v419
        %987 = vmatpush.msra.mxu0 %v415
        %988 = vmatmul.f32.gmra.mxu0 %v950
        %v989 = vpop.f32.mrf.mxu0
        %v990 = vadd.f32 0.0, %v989
        %991 = vdwg.mxu0
        %992 = vmatpush.msra.mxu0 0.0
        %993 = vmatpush.msra.mxu0 0.0
        %994 = vmatpush.msra.mxu0 0.0
        %995 = vmatpush.msra.mxu0 0.0
        %996 = vmatpush.msra.mxu0 0.0
        %997 = vmatpush.msra.mxu0 0.0
        %998 = vmatpush.msra.mxu0 0.0
        %999 = vmatpush.msra.mxu0 0.0
        %1000 = vmatpush.msra.mxu0 0.0
        %1001 = vmatpush.msra.mxu0 0.0
        %1002 = vmatpush.msra.mxu0 0.0
        %1003 = vmatpush.msra.mxu0 0.0
        %1004 = vmatpush.msra.mxu0 %v442
        %1005 = vmatpush.msra.mxu0 %v424
        %1006 = vmatpush.msra.mxu0 %v420
        %1007 = vmatpush.msra.mxu0 %v416
        %1008 = vmatmul.f32.gmra.mxu0 %v950
        %v1009 = vpop.f32.mrf.mxu0
        %v1010 = vadd.f32 0.0, %v1009
        %1011 = vdwg.mxu0
        %1012 = vmatpush.msra.mxu0 0.0
        %1013 = vmatpush.msra.mxu0 0.0
        %1014 = vmatpush.msra.mxu0 0.0
        %1015 = vmatpush.msra.mxu0 0.0
        %1016 = vmatpush.msra.mxu0 0.0
        %1017 = vmatpush.msra.mxu0 0.0
        %1018 = vmatpush.msra.mxu0 0.0
        %1019 = vmatpush.msra.mxu0 0.0
        %1020 = vmatpush.msra.mxu0 0.0
        %1021 = vmatpush.msra.mxu0 0.0
        %1022 = vmatpush.msra.mxu0 0.0
        %1023 = vmatpush.msra.mxu0 0.0
        %1024 = vmatpush.msra.mxu0 %v445
        %1025 = vmatpush.msra.mxu0 %v425
        %1026 = vmatpush.msra.mxu0 %v421
        %1027 = vmatpush.msra.mxu0 %v417
        %1028 = vmatmul.f32.gmra.mxu0 %v950
        %v1029 = vpop.f32.mrf.mxu0
        %v1030 = vadd.f32 0.0, %v1029
        %1031 = vdwg.mxu0
        %1032 = vmatpush.msra.mxu0 0.0
        %1033 = vmatpush.msra.mxu0 0.0
        %1034 = vmatpush.msra.mxu0 0.0
        %1035 = vmatpush.msra.mxu0 0.0
        %1036 = vmatpush.msra.mxu0 0.0
        %1037 = vmatpush.msra.mxu0 0.0
        %1038 = vmatpush.msra.mxu0 0.0
        %1039 = vmatpush.msra.mxu0 0.0
        %1040 = vmatpush.msra.mxu0 0.0
        %1041 = vmatpush.msra.mxu0 0.0
        %1042 = vmatpush.msra.mxu0 0.0
        %1043 = vmatpush.msra.mxu0 0.0
        %1044 = vmatpush.msra.mxu0 %v531
        %1045 = vmatpush.msra.mxu0 %v398
        %1046 = vmatpush.msra.mxu0 %v394
        %1047 = vmatpush.msra.mxu0 %v390
        %1048 = vmatmul.f32.gmra.mxu0 %v786
        %v1049 = vpop.f32.mrf.mxu0
        %v1050 = vadd.f32 %v970, %v1049
        %1051 = vdwg.mxu0
        %1052 = vmatpush.msra.mxu0 0.0
        %1053 = vmatpush.msra.mxu0 0.0
        %1054 = vmatpush.msra.mxu0 0.0
        %1055 = vmatpush.msra.mxu0 0.0
        %1056 = vmatpush.msra.mxu0 0.0
        %1057 = vmatpush.msra.mxu0 0.0
        %1058 = vmatpush.msra.mxu0 0.0
        %1059 = vmatpush.msra.mxu0 0.0
        %1060 = vmatpush.msra.mxu0 0.0
        %1061 = vmatpush.msra.mxu0 0.0
        %1062 = vmatpush.msra.mxu0 0.0
        %1063 = vmatpush.msra.mxu0 0.0
        %1064 = vmatpush.msra.mxu0 %v534
        %1065 = vmatpush.msra.mxu0 %v399
        %1066 = vmatpush.msra.mxu0 %v395
        %1067 = vmatpush.msra.mxu0 %v391
        %1068 = vmatmul.f32.gmra.mxu0 %v786
        %v1069 = vpop.f32.mrf.mxu0
        %v1070 = vadd.f32 %v990, %v1069
        %1071 = vdwg.mxu0
        %1072 = vmatpush.msra.mxu0 0.0
        %1073 = vmatpush.msra.mxu0 0.0
        %1074 = vmatpush.msra.mxu0 0.0
        %1075 = vmatpush.msra.mxu0 0.0
        %1076 = vmatpush.msra.mxu0 0.0
        %1077 = vmatpush.msra.mxu0 0.0
        %1078 = vmatpush.msra.mxu0 0.0
        %1079 = vmatpush.msra.mxu0 0.0
        %1080 = vmatpush.msra.mxu0 0.0
        %1081 = vmatpush.msra.mxu0 0.0
        %1082 = vmatpush.msra.mxu0 0.0
        %1083 = vmatpush.msra.mxu0 0.0
        %1084 = vmatpush.msra.mxu0 %v537
        %1085 = vmatpush.msra.mxu0 %v400
        %1086 = vmatpush.msra.mxu0 %v396
        %1087 = vmatpush.msra.mxu0 %v392
        %1088 = vmatmul.f32.gmra.mxu0 %v786
        %v1089 = vpop.f32.mrf.mxu0
        %v1090 = vadd.f32 %v1010, %v1089
        %1091 = vdwg.mxu0
        %1092 = vmatpush.msra.mxu0 0.0
        %1093 = vmatpush.msra.mxu0 0.0
        %1094 = vmatpush.msra.mxu0 0.0
        %1095 = vmatpush.msra.mxu0 0.0
        %1096 = vmatpush.msra.mxu0 0.0
        %1097 = vmatpush.msra.mxu0 0.0
        %1098 = vmatpush.msra.mxu0 0.0
        %1099 = vmatpush.msra.mxu0 0.0
        %1100 = vmatpush.msra.mxu0 0.0
        %1101 = vmatpush.msra.mxu0 0.0
        %1102 = vmatpush.msra.mxu0 0.0
        %1103 = vmatpush.msra.mxu0 0.0
        %1104 = vmatpush.msra.mxu0 %v540
        %1105 = vmatpush.msra.mxu0 %v401
        %1106 = vmatpush.msra.mxu0 %v397
        %1107 = vmatpush.msra.mxu0 %v393
        %1108 = vmatmul.f32.gmra.mxu0 %v786
        %v1109 = vpop.f32.mrf.mxu0
        %v1110 = vadd.f32 %v1030, %v1109
        %1111 = vdwg.mxu0
        %s1112 = scalar_lea.vmem [#allocation5], 256
        %v1113 = vld [vmem:[%s1112] sm:$0xff]
        %v1114 = vld [vmem:[%s1112 + $0x8] sm:$0xff]
        %v1115 = vld [vmem:[%s1112 + $0x10] sm:$0xff]
        %v1116 = vld [vmem:[%s1112 + $0x18] sm:$0xff]
        %v1117 = vld [vmem:[%s1112 + $0x20] sm:$0xff]
        %v1118 = vld [vmem:[%s1112 + $0x28] sm:$0xff]
        %v1119 = vld [vmem:[%s1112 + $0x30] sm:$0xff]
        %v1120 = vld [vmem:[%s1112 + $0x38] sm:$0xff]
        %v1121 = vld [vmem:[%s1112 + $0x40] sm:$0xff]
        %v1122 = vld [vmem:[%s1112 + $0x48] sm:$0xff]
        %v1123 = vld [vmem:[%s1112 + $0x50] sm:$0xff]
        %v1124 = vld [vmem:[%s1112 + $0x58] sm:$0xff]
        %v1125 = vld [vmem:[%s1112 + $0x60] sm:$0xf]
        %v1126 = vld [vmem:[%s1112 + $0x68] sm:$0xf]
        %v1127 = vld [vmem:[%s1112 + $0x70] sm:$0xf]
        %v1128 = vld [vmem:[%s1112 + $0x78] sm:$0xf]
        %v1130 = vsel %vm434, %v1125, 0
        %v1133 = vsel %vm434, %v1126, 0
        %v1136 = vsel %vm434, %v1127, 0
        %v1139 = vsel %vm434, %v1128, 0
        %1141 = vmatpush.msra.mxu0 0.0
        %1142 = vmatpush.msra.mxu0 0.0
        %1143 = vmatpush.msra.mxu0 0.0
        %1144 = vmatpush.msra.mxu0 0.0
        %1145 = vmatpush.msra.mxu0 0.0
        %1146 = vmatpush.msra.mxu0 0.0
        %1147 = vmatpush.msra.mxu0 0.0
        %1148 = vmatpush.msra.mxu0 0.0
        %1149 = vmatpush.msra.mxu0 0.0
        %1150 = vmatpush.msra.mxu0 0.0
        %1151 = vmatpush.msra.mxu0 0.0
        %1152 = vmatpush.msra.mxu0 0.0
        %1153 = vmatpush.msra.mxu0 %v1130
        %1154 = vmatpush.msra.mxu0 %v1121
        %1155 = vmatpush.msra.mxu0 %v1117
        %1156 = vmatpush.msra.mxu0 %v1113
        %1157 = vmatmul.f32.gmra.mxu0 %v623
        %v1158 = vpop.f32.mrf.mxu0
        %v1159 = vadd.f32 0.0, %v1158
        %1160 = vdwg.mxu0
        %1161 = vmatpush.msra.mxu0 0.0
        %1162 = vmatpush.msra.mxu0 0.0
        %1163 = vmatpush.msra.mxu0 0.0
        %1164 = vmatpush.msra.mxu0 0.0
        %1165 = vmatpush.msra.mxu0 0.0
        %1166 = vmatpush.msra.mxu0 0.0
        %1167 = vmatpush.msra.mxu0 0.0
        %1168 = vmatpush.msra.mxu0 0.0
        %1169 = vmatpush.msra.mxu0 0.0
        %1170 = vmatpush.msra.mxu0 0.0
        %1171 = vmatpush.msra.mxu0 0.0
        %1172 = vmatpush.msra.mxu0 0.0
        %1173 = vmatpush.msra.mxu0 %v1133
        %1174 = vmatpush.msra.mxu0 %v1122
        %1175 = vmatpush.msra.mxu0 %v1118
        %1176 = vmatpush.msra.mxu0 %v1114
        %1177 = vmatmul.f32.gmra.mxu0 %v623
        %v1178 = vpop.f32.mrf.mxu0
        %v1179 = vadd.f32 0.0, %v1178
        %1180 = vdwg.mxu0
        %1181 = vmatpush.msra.mxu0 0.0
        %1182 = vmatpush.msra.mxu0 0.0
        %1183 = vmatpush.msra.mxu0 0.0
        %1184 = vmatpush.msra.mxu0 0.0
        %1185 = vmatpush.msra.mxu0 0.0
        %1186 = vmatpush.msra.mxu0 0.0
        %1187 = vmatpush.msra.mxu0 0.0
        %1188 = vmatpush.msra.mxu0 0.0
        %1189 = vmatpush.msra.mxu0 0.0
        %1190 = vmatpush.msra.mxu0 0.0
        %1191 = vmatpush.msra.mxu0 0.0
        %1192 = vmatpush.msra.mxu0 0.0
        %1193 = vmatpush.msra.mxu0 %v1136
        %1194 = vmatpush.msra.mxu0 %v1123
        %1195 = vmatpush.msra.mxu0 %v1119
        %1196 = vmatpush.msra.mxu0 %v1115
        %1197 = vmatmul.f32.gmra.mxu0 %v623
        %v1198 = vpop.f32.mrf.mxu0
        %v1199 = vadd.f32 0.0, %v1198
        %1200 = vdwg.mxu0
        %1201 = vmatpush.msra.mxu0 0.0
        %1202 = vmatpush.msra.mxu0 0.0
        %1203 = vmatpush.msra.mxu0 0.0
        %1204 = vmatpush.msra.mxu0 0.0
        %1205 = vmatpush.msra.mxu0 0.0
        %1206 = vmatpush.msra.mxu0 0.0
        %1207 = vmatpush.msra.mxu0 0.0
        %1208 = vmatpush.msra.mxu0 0.0
        %1209 = vmatpush.msra.mxu0 0.0
        %1210 = vmatpush.msra.mxu0 0.0
        %1211 = vmatpush.msra.mxu0 0.0
        %1212 = vmatpush.msra.mxu0 0.0
        %1213 = vmatpush.msra.mxu0 %v1139
        %1214 = vmatpush.msra.mxu0 %v1124
        %1215 = vmatpush.msra.mxu0 %v1120
        %1216 = vmatpush.msra.mxu0 %v1116
        %1217 = vmatmul.f32.gmra.mxu0 %v623
        %v1218 = vpop.f32.mrf.mxu0
        %v1219 = vadd.f32 0.0, %v1218
        %1220 = vdwg.mxu0
        %v1221 = vadd.f32 %v560, %v1159
        %v1222 = vadd.f32 %v580, %v1179
        %v1223 = vadd.f32 %v600, %v1199
        %v1224 = vadd.f32 %v620, %v1219
        %1225 = vmatpush.msra.mxu0 0.0
        %1226 = vmatpush.msra.mxu0 0.0
        %1227 = vmatpush.msra.mxu0 0.0
        %1228 = vmatpush.msra.mxu0 0.0
        %1229 = vmatpush.msra.mxu0 0.0
        %1230 = vmatpush.msra.mxu0 0.0
        %1231 = vmatpush.msra.mxu0 0.0
        %1232 = vmatpush.msra.mxu0 0.0
        %1233 = vmatpush.msra.mxu0 0.0
        %1234 = vmatpush.msra.mxu0 0.0
        %1235 = vmatpush.msra.mxu0 0.0
        %1236 = vmatpush.msra.mxu0 0.0
        %1237 = vmatpush.msra.mxu0 %v1130
        %1238 = vmatpush.msra.mxu0 %v1121
        %1239 = vmatpush.msra.mxu0 %v1117
        %1240 = vmatpush.msra.mxu0 %v1113
        %1241 = vmatmul.f32.gmra.mxu0 %v786
        %v1242 = vpop.f32.mrf.mxu0
        %v1243 = vadd.f32 0.0, %v1242
        %1244 = vdwg.mxu0
        %1245 = vmatpush.msra.mxu0 0.0
        %1246 = vmatpush.msra.mxu0 0.0
        %1247 = vmatpush.msra.mxu0 0.0
        %1248 = vmatpush.msra.mxu0 0.0
        %1249 = vmatpush.msra.mxu0 0.0
        %1250 = vmatpush.msra.mxu0 0.0
        %1251 = vmatpush.msra.mxu0 0.0
        %1252 = vmatpush.msra.mxu0 0.0
        %1253 = vmatpush.msra.mxu0 0.0
        %1254 = vmatpush.msra.mxu0 0.0
        %1255 = vmatpush.msra.mxu0 0.0
        %1256 = vmatpush.msra.mxu0 0.0
        %1257 = vmatpush.msra.mxu0 %v1133
        %1258 = vmatpush.msra.mxu0 %v1122
        %1259 = vmatpush.msra.mxu0 %v1118
        %1260 = vmatpush.msra.mxu0 %v1114
        %1261 = vmatmul.f32.gmra.mxu0 %v786
        %v1262 = vpop.f32.mrf.mxu0
        %v1263 = vadd.f32 0.0, %v1262
        %1264 = vdwg.mxu0
        %1265 = vmatpush.msra.mxu0 0.0
        %1266 = vmatpush.msra.mxu0 0.0
        %1267 = vmatpush.msra.mxu0 0.0
        %1268 = vmatpush.msra.mxu0 0.0
        %1269 = vmatpush.msra.mxu0 0.0
        %1270 = vmatpush.msra.mxu0 0.0
        %1271 = vmatpush.msra.mxu0 0.0
        %1272 = vmatpush.msra.mxu0 0.0
        %1273 = vmatpush.msra.mxu0 0.0
        %1274 = vmatpush.msra.mxu0 0.0
        %1275 = vmatpush.msra.mxu0 0.0
        %1276 = vmatpush.msra.mxu0 0.0
        %1277 = vmatpush.msra.mxu0 %v1136
        %1278 = vmatpush.msra.mxu0 %v1123
        %1279 = vmatpush.msra.mxu0 %v1119
        %1280 = vmatpush.msra.mxu0 %v1115
        %1281 = vmatmul.f32.gmra.mxu0 %v786
        %v1282 = vpop.f32.mrf.mxu0
        %v1283 = vadd.f32 0.0, %v1282
        %1284 = vdwg.mxu0
        %1285 = vmatpush.msra.mxu0 0.0
        %1286 = vmatpush.msra.mxu0 0.0
        %1287 = vmatpush.msra.mxu0 0.0
        %1288 = vmatpush.msra.mxu0 0.0
        %1289 = vmatpush.msra.mxu0 0.0
        %1290 = vmatpush.msra.mxu0 0.0
        %1291 = vmatpush.msra.mxu0 0.0
        %1292 = vmatpush.msra.mxu0 0.0
        %1293 = vmatpush.msra.mxu0 0.0
        %1294 = vmatpush.msra.mxu0 0.0
        %1295 = vmatpush.msra.mxu0 0.0
        %1296 = vmatpush.msra.mxu0 0.0
        %1297 = vmatpush.msra.mxu0 %v1139
        %1298 = vmatpush.msra.mxu0 %v1124
        %1299 = vmatpush.msra.mxu0 %v1120
        %1300 = vmatpush.msra.mxu0 %v1116
        %1301 = vmatmul.f32.gmra.mxu0 %v786
        %v1302 = vpop.f32.mrf.mxu0
        %v1303 = vadd.f32 0.0, %v1302
        %1304 = vdwg.mxu0
        %v1305 = vadd.f32 %v723, %v1243
        %v1306 = vadd.f32 %v743, %v1263
        %v1307 = vadd.f32 %v763, %v1283
        %v1308 = vadd.f32 %v783, %v1303
        %1309 = vmatpush.msra.mxu0 0.0
        %1310 = vmatpush.msra.mxu0 0.0
        %1311 = vmatpush.msra.mxu0 0.0
        %1312 = vmatpush.msra.mxu0 0.0
        %1313 = vmatpush.msra.mxu0 0.0
        %1314 = vmatpush.msra.mxu0 0.0
        %1315 = vmatpush.msra.mxu0 0.0
        %1316 = vmatpush.msra.mxu0 0.0
        %1317 = vmatpush.msra.mxu0 0.0
        %1318 = vmatpush.msra.mxu0 0.0
        %1319 = vmatpush.msra.mxu0 0.0
        %1320 = vmatpush.msra.mxu0 0.0
        %1321 = vmatpush.msra.mxu0 %v1130
        %1322 = vmatpush.msra.mxu0 %v1121
        %1323 = vmatpush.msra.mxu0 %v1117
        %1324 = vmatpush.msra.mxu0 %v1113
        %1325 = vmatmul.f32.gmra.mxu0 %v950
        %v1326 = vpop.f32.mrf.mxu0
        %v1327 = vadd.f32 0.0, %v1326
        %1328 = vdwg.mxu0
        %1329 = vmatpush.msra.mxu0 0.0
        %1330 = vmatpush.msra.mxu0 0.0
        %1331 = vmatpush.msra.mxu0 0.0
        %1332 = vmatpush.msra.mxu0 0.0
        %1333 = vmatpush.msra.mxu0 0.0
        %1334 = vmatpush.msra.mxu0 0.0
        %1335 = vmatpush.msra.mxu0 0.0
        %1336 = vmatpush.msra.mxu0 0.0
        %1337 = vmatpush.msra.mxu0 0.0
        %1338 = vmatpush.msra.mxu0 0.0
        %1339 = vmatpush.msra.mxu0 0.0
        %1340 = vmatpush.msra.mxu0 0.0
        %1341 = vmatpush.msra.mxu0 %v1133
        %1342 = vmatpush.msra.mxu0 %v1122
        %1343 = vmatpush.msra.mxu0 %v1118
        %1344 = vmatpush.msra.mxu0 %v1114
        %1345 = vmatmul.f32.gmra.mxu0 %v950
        %v1346 = vpop.f32.mrf.mxu0
        %v1347 = vadd.f32 0.0, %v1346
        %1348 = vdwg.mxu0
        %1349 = vmatpush.msra.mxu0 0.0
        %1350 = vmatpush.msra.mxu0 0.0
        %1351 = vmatpush.msra.mxu0 0.0
        %1352 = vmatpush.msra.mxu0 0.0
        %1353 = vmatpush.msra.mxu0 0.0
        %1354 = vmatpush.msra.mxu0 0.0
        %1355 = vmatpush.msra.mxu0 0.0
        %1356 = vmatpush.msra.mxu0 0.0
        %1357 = vmatpush.msra.mxu0 0.0
        %1358 = vmatpush.msra.mxu0 0.0
        %1359 = vmatpush.msra.mxu0 0.0
        %1360 = vmatpush.msra.mxu0 0.0
        %1361 = vmatpush.msra.mxu0 %v1136
        %1362 = vmatpush.msra.mxu0 %v1123
        %1363 = vmatpush.msra.mxu0 %v1119
        %1364 = vmatpush.msra.mxu0 %v1115
        %1365 = vmatmul.f32.gmra.mxu0 %v950
        %v1366 = vpop.f32.mrf.mxu0
        %v1367 = vadd.f32 0.0, %v1366
        %1368 = vdwg.mxu0
        %1369 = vmatpush.msra.mxu0 0.0
        %1370 = vmatpush.msra.mxu0 0.0
        %1371 = vmatpush.msra.mxu0 0.0
        %1372 = vmatpush.msra.mxu0 0.0
        %1373 = vmatpush.msra.mxu0 0.0
        %1374 = vmatpush.msra.mxu0 0.0
        %1375 = vmatpush.msra.mxu0 0.0
        %1376 = vmatpush.msra.mxu0 0.0
        %1377 = vmatpush.msra.mxu0 0.0
        %1378 = vmatpush.msra.mxu0 0.0
        %1379 = vmatpush.msra.mxu0 0.0
        %1380 = vmatpush.msra.mxu0 0.0
        %1381 = vmatpush.msra.mxu0 %v1139
        %1382 = vmatpush.msra.mxu0 %v1124
        %1383 = vmatpush.msra.mxu0 %v1120
        %1384 = vmatpush.msra.mxu0 %v1116
        %1385 = vmatmul.f32.gmra.mxu0 %v950
        %v1386 = vpop.f32.mrf.mxu0
        %v1387 = vadd.f32 0.0, %v1386
        %1388 = vdwg.mxu0
        %v1389 = vadd.f32 %v886, %v1327
        %v1390 = vadd.f32 %v906, %v1347
        %v1391 = vadd.f32 %v926, %v1367
        %v1392 = vadd.f32 %v946, %v1387
        %v1393 = vld [vmem:[%s407 + $0x1] sm:$0x3f]
        %v1395 = vsel %vm430, %v1393, 0
        %1397 = vmatpush.msra.mxu0 0.0
        %1398 = vmatpush.msra.mxu0 0.0
        %1399 = vmatpush.msra.mxu0 0.0
        %1400 = vmatpush.msra.mxu0 0.0
        %1401 = vmatpush.msra.mxu0 0.0
        %1402 = vmatpush.msra.mxu0 0.0
        %1403 = vmatpush.msra.mxu0 0.0
        %1404 = vmatpush.msra.mxu0 0.0
        %1405 = vmatpush.msra.mxu0 0.0
        %1406 = vmatpush.msra.mxu0 0.0
        %1407 = vmatpush.msra.mxu0 0.0
        %1408 = vmatpush.msra.mxu0 0.0
        %1409 = vmatpush.msra.mxu0 %v1130
        %1410 = vmatpush.msra.mxu0 %v1121
        %1411 = vmatpush.msra.mxu0 %v1117
        %1412 = vmatpush.msra.mxu0 %v1113
        %1413 = vmatmul.f32.gmra.mxu0 %v1395
        %v1414 = vpop.f32.mrf.mxu0
        %v1415 = vadd.f32 0.0, %v1414
        %1416 = vdwg.mxu0
        %1417 = vmatpush.msra.mxu0 0.0
        %1418 = vmatpush.msra.mxu0 0.0
        %1419 = vmatpush.msra.mxu0 0.0
        %1420 = vmatpush.msra.mxu0 0.0
        %1421 = vmatpush.msra.mxu0 0.0
        %1422 = vmatpush.msra.mxu0 0.0
        %1423 = vmatpush.msra.mxu0 0.0
        %1424 = vmatpush.msra.mxu0 0.0
        %1425 = vmatpush.msra.mxu0 0.0
        %1426 = vmatpush.msra.mxu0 0.0
        %1427 = vmatpush.msra.mxu0 0.0
        %1428 = vmatpush.msra.mxu0 0.0
        %1429 = vmatpush.msra.mxu0 %v1133
        %1430 = vmatpush.msra.mxu0 %v1122
        %1431 = vmatpush.msra.mxu0 %v1118
        %1432 = vmatpush.msra.mxu0 %v1114
        %1433 = vmatmul.f32.gmra.mxu0 %v1395
        %v1434 = vpop.f32.mrf.mxu0
        %v1435 = vadd.f32 0.0, %v1434
        %1436 = vdwg.mxu0
        %1437 = vmatpush.msra.mxu0 0.0
        %1438 = vmatpush.msra.mxu0 0.0
        %1439 = vmatpush.msra.mxu0 0.0
        %1440 = vmatpush.msra.mxu0 0.0
        %1441 = vmatpush.msra.mxu0 0.0
        %1442 = vmatpush.msra.mxu0 0.0
        %1443 = vmatpush.msra.mxu0 0.0
        %1444 = vmatpush.msra.mxu0 0.0
        %1445 = vmatpush.msra.mxu0 0.0
        %1446 = vmatpush.msra.mxu0 0.0
        %1447 = vmatpush.msra.mxu0 0.0
        %1448 = vmatpush.msra.mxu0 0.0
        %1449 = vmatpush.msra.mxu0 %v1136
        %1450 = vmatpush.msra.mxu0 %v1123
        %1451 = vmatpush.msra.mxu0 %v1119
        %1452 = vmatpush.msra.mxu0 %v1115
        %1453 = vmatmul.f32.gmra.mxu0 %v1395
        %v1454 = vpop.f32.mrf.mxu0
        %v1455 = vadd.f32 0.0, %v1454
        %1456 = vdwg.mxu0
        %1457 = vmatpush.msra.mxu0 0.0
        %1458 = vmatpush.msra.mxu0 0.0
        %1459 = vmatpush.msra.mxu0 0.0
        %1460 = vmatpush.msra.mxu0 0.0
        %1461 = vmatpush.msra.mxu0 0.0
        %1462 = vmatpush.msra.mxu0 0.0
        %1463 = vmatpush.msra.mxu0 0.0
        %1464 = vmatpush.msra.mxu0 0.0
        %1465 = vmatpush.msra.mxu0 0.0
        %1466 = vmatpush.msra.mxu0 0.0
        %1467 = vmatpush.msra.mxu0 0.0
        %1468 = vmatpush.msra.mxu0 0.0
        %1469 = vmatpush.msra.mxu0 %v1139
        %1470 = vmatpush.msra.mxu0 %v1124
        %1471 = vmatpush.msra.mxu0 %v1120
        %1472 = vmatpush.msra.mxu0 %v1116
        %1473 = vmatmul.f32.gmra.mxu0 %v1395
        %v1474 = vpop.f32.mrf.mxu0
        %v1475 = vadd.f32 0.0, %v1474
        %1476 = vdwg.mxu0
        %v1477 = vadd.f32 %v1050, %v1415
        %v1478 = vadd.f32 %v1070, %v1435
        %v1479 = vadd.f32 %v1090, %v1455
        %v1480 = vadd.f32 %v1110, %v1475
        %s1481 = scalar_lea.vmem [#allocation5], 384
        %v1482 = vld [vmem:[%s1481] sm:$0xff]
        %v1483 = vld [vmem:[%s1481 + $0x8] sm:$0xff]
        %v1484 = vld [vmem:[%s1481 + $0x10] sm:$0xff]
        %v1485 = vld [vmem:[%s1481 + $0x18] sm:$0xff]
        %v1486 = vld [vmem:[%s1481 + $0x20] sm:$0xff]
        %v1487 = vld [vmem:[%s1481 + $0x28] sm:$0xff]
        %v1488 = vld [vmem:[%s1481 + $0x30] sm:$0xff]
        %v1489 = vld [vmem:[%s1481 + $0x38] sm:$0xff]
        %v1490 = vld [vmem:[%s1481 + $0x40] sm:$0xff]
        %v1491 = vld [vmem:[%s1481 + $0x48] sm:$0xff]
        %v1492 = vld [vmem:[%s1481 + $0x50] sm:$0xff]
        %v1493 = vld [vmem:[%s1481 + $0x58] sm:$0xff]
        %v1494 = vld [vmem:[%s1481 + $0x60] sm:$0xf]
        %v1495 = vld [vmem:[%s1481 + $0x68] sm:$0xf]
        %v1496 = vld [vmem:[%s1481 + $0x70] sm:$0xf]
        %v1497 = vld [vmem:[%s1481 + $0x78] sm:$0xf]
        %v1499 = vsel %vm434, %v1494, 0
        %v1502 = vsel %vm434, %v1495, 0
        %v1505 = vsel %vm434, %v1496, 0
        %v1508 = vsel %vm434, %v1497, 0
        %1510 = vmatpush.msra.mxu0 0.0
        %1511 = vmatpush.msra.mxu0 0.0
        %1512 = vmatpush.msra.mxu0 0.0
        %1513 = vmatpush.msra.mxu0 0.0
        %1514 = vmatpush.msra.mxu0 0.0
        %1515 = vmatpush.msra.mxu0 0.0
        %1516 = vmatpush.msra.mxu0 0.0
        %1517 = vmatpush.msra.mxu0 0.0
        %1518 = vmatpush.msra.mxu0 0.0
        %1519 = vmatpush.msra.mxu0 0.0
        %1520 = vmatpush.msra.mxu0 0.0
        %1521 = vmatpush.msra.mxu0 0.0
        %1522 = vmatpush.msra.mxu0 %v1499
        %1523 = vmatpush.msra.mxu0 %v1490
        %1524 = vmatpush.msra.mxu0 %v1486
        %1525 = vmatpush.msra.mxu0 %v1482
        %1526 = vmatmul.f32.gmra.mxu0 %v786
        %v1527 = vpop.f32.mrf.mxu0
        %v1528 = vadd.f32 0.0, %v1527
        %1529 = vdwg.mxu0
        %1530 = vmatpush.msra.mxu0 0.0
        %1531 = vmatpush.msra.mxu0 0.0
        %1532 = vmatpush.msra.mxu0 0.0
        %1533 = vmatpush.msra.mxu0 0.0
        %1534 = vmatpush.msra.mxu0 0.0
        %1535 = vmatpush.msra.mxu0 0.0
        %1536 = vmatpush.msra.mxu0 0.0
        %1537 = vmatpush.msra.mxu0 0.0
        %1538 = vmatpush.msra.mxu0 0.0
        %1539 = vmatpush.msra.mxu0 0.0
        %1540 = vmatpush.msra.mxu0 0.0
        %1541 = vmatpush.msra.mxu0 0.0
        %1542 = vmatpush.msra.mxu0 %v1502
        %1543 = vmatpush.msra.mxu0 %v1491
        %1544 = vmatpush.msra.mxu0 %v1487
        %1545 = vmatpush.msra.mxu0 %v1483
        %1546 = vmatmul.f32.gmra.mxu0 %v786
        %v1547 = vpop.f32.mrf.mxu0
        %v1548 = vadd.f32 0.0, %v1547
        %1549 = vdwg.mxu0
        %1550 = vmatpush.msra.mxu0 0.0
        %1551 = vmatpush.msra.mxu0 0.0
        %1552 = vmatpush.msra.mxu0 0.0
        %1553 = vmatpush.msra.mxu0 0.0
        %1554 = vmatpush.msra.mxu0 0.0
        %1555 = vmatpush.msra.mxu0 0.0
        %1556 = vmatpush.msra.mxu0 0.0
        %1557 = vmatpush.msra.mxu0 0.0
        %1558 = vmatpush.msra.mxu0 0.0
        %1559 = vmatpush.msra.mxu0 0.0
        %1560 = vmatpush.msra.mxu0 0.0
        %1561 = vmatpush.msra.mxu0 0.0
        %1562 = vmatpush.msra.mxu0 %v1505
        %1563 = vmatpush.msra.mxu0 %v1492
        %1564 = vmatpush.msra.mxu0 %v1488
        %1565 = vmatpush.msra.mxu0 %v1484
        %1566 = vmatmul.f32.gmra.mxu0 %v786
        %v1567 = vpop.f32.mrf.mxu0
        %v1568 = vadd.f32 0.0, %v1567
        %1569 = vdwg.mxu0
        %1570 = vmatpush.msra.mxu0 0.0
        %1571 = vmatpush.msra.mxu0 0.0
        %1572 = vmatpush.msra.mxu0 0.0
        %1573 = vmatpush.msra.mxu0 0.0
        %1574 = vmatpush.msra.mxu0 0.0
        %1575 = vmatpush.msra.mxu0 0.0
        %1576 = vmatpush.msra.mxu0 0.0
        %1577 = vmatpush.msra.mxu0 0.0
        %1578 = vmatpush.msra.mxu0 0.0
        %1579 = vmatpush.msra.mxu0 0.0
        %1580 = vmatpush.msra.mxu0 0.0
        %1581 = vmatpush.msra.mxu0 0.0
        %1582 = vmatpush.msra.mxu0 %v1508
        %1583 = vmatpush.msra.mxu0 %v1493
        %1584 = vmatpush.msra.mxu0 %v1489
        %1585 = vmatpush.msra.mxu0 %v1485
        %1586 = vmatmul.f32.gmra.mxu0 %v786
        %v1587 = vpop.f32.mrf.mxu0
        %v1588 = vadd.f32 0.0, %v1587
        %1589 = vdwg.mxu0
        %v1590 = vadd.f32 %v1221, %v1528
        %v1591 = vadd.f32 %v1222, %v1548
        %v1592 = vadd.f32 %v1223, %v1568
        %v1593 = vadd.f32 %v1224, %v1588
        %1594 = vmatpush.msra.mxu0 0.0
        %1595 = vmatpush.msra.mxu0 0.0
        %1596 = vmatpush.msra.mxu0 0.0
        %1597 = vmatpush.msra.mxu0 0.0
        %1598 = vmatpush.msra.mxu0 0.0
        %1599 = vmatpush.msra.mxu0 0.0
        %1600 = vmatpush.msra.mxu0 0.0
        %1601 = vmatpush.msra.mxu0 0.0
        %1602 = vmatpush.msra.mxu0 0.0
        %1603 = vmatpush.msra.mxu0 0.0
        %1604 = vmatpush.msra.mxu0 0.0
        %1605 = vmatpush.msra.mxu0 0.0
        %1606 = vmatpush.msra.mxu0 %v1499
        %1607 = vmatpush.msra.mxu0 %v1490
        %1608 = vmatpush.msra.mxu0 %v1486
        %1609 = vmatpush.msra.mxu0 %v1482
        %1610 = vmatmul.f32.gmra.mxu0 %v950
        %v1611 = vpop.f32.mrf.mxu0
        %v1612 = vadd.f32 0.0, %v1611
        %1613 = vdwg.mxu0
        %1614 = vmatpush.msra.mxu0 0.0
        %1615 = vmatpush.msra.mxu0 0.0
        %1616 = vmatpush.msra.mxu0 0.0
        %1617 = vmatpush.msra.mxu0 0.0
        %1618 = vmatpush.msra.mxu0 0.0
        %1619 = vmatpush.msra.mxu0 0.0
        %1620 = vmatpush.msra.mxu0 0.0
        %1621 = vmatpush.msra.mxu0 0.0
        %1622 = vmatpush.msra.mxu0 0.0
        %1623 = vmatpush.msra.mxu0 0.0
        %1624 = vmatpush.msra.mxu0 0.0
        %1625 = vmatpush.msra.mxu0 0.0
        %1626 = vmatpush.msra.mxu0 %v1502
        %1627 = vmatpush.msra.mxu0 %v1491
        %1628 = vmatpush.msra.mxu0 %v1487
        %1629 = vmatpush.msra.mxu0 %v1483
        %1630 = vmatmul.f32.gmra.mxu0 %v950
        %v1631 = vpop.f32.mrf.mxu0
        %v1632 = vadd.f32 0.0, %v1631
        %1633 = vdwg.mxu0
        %1634 = vmatpush.msra.mxu0 0.0
        %1635 = vmatpush.msra.mxu0 0.0
        %1636 = vmatpush.msra.mxu0 0.0
        %1637 = vmatpush.msra.mxu0 0.0
        %1638 = vmatpush.msra.mxu0 0.0
        %1639 = vmatpush.msra.mxu0 0.0
        %1640 = vmatpush.msra.mxu0 0.0
        %1641 = vmatpush.msra.mxu0 0.0
        %1642 = vmatpush.msra.mxu0 0.0
        %1643 = vmatpush.msra.mxu0 0.0
        %1644 = vmatpush.msra.mxu0 0.0
        %1645 = vmatpush.msra.mxu0 0.0
        %1646 = vmatpush.msra.mxu0 %v1505
        %1647 = vmatpush.msra.mxu0 %v1492
        %1648 = vmatpush.msra.mxu0 %v1488
        %1649 = vmatpush.msra.mxu0 %v1484
        %1650 = vmatmul.f32.gmra.mxu0 %v950
        %v1651 = vpop.f32.mrf.mxu0
        %v1652 = vadd.f32 0.0, %v1651
        %1653 = vdwg.mxu0
        %1654 = vmatpush.msra.mxu0 0.0
        %1655 = vmatpush.msra.mxu0 0.0
        %1656 = vmatpush.msra.mxu0 0.0
        %1657 = vmatpush.msra.mxu0 0.0
        %1658 = vmatpush.msra.mxu0 0.0
        %1659 = vmatpush.msra.mxu0 0.0
        %1660 = vmatpush.msra.mxu0 0.0
        %1661 = vmatpush.msra.mxu0 0.0
        %1662 = vmatpush.msra.mxu0 0.0
        %1663 = vmatpush.msra.mxu0 0.0
        %1664 = vmatpush.msra.mxu0 0.0
        %1665 = vmatpush.msra.mxu0 0.0
        %1666 = vmatpush.msra.mxu0 %v1508
        %1667 = vmatpush.msra.mxu0 %v1493
        %1668 = vmatpush.msra.mxu0 %v1489
        %1669 = vmatpush.msra.mxu0 %v1485
        %1670 = vmatmul.f32.gmra.mxu0 %v950
        %v1671 = vpop.f32.mrf.mxu0
        %v1672 = vadd.f32 0.0, %v1671
        %1673 = vdwg.mxu0
        %v1674 = vadd.f32 %v1305, %v1612
        %v1675 = vadd.f32 %v1306, %v1632
        %v1676 = vadd.f32 %v1307, %v1652
        %v1677 = vadd.f32 %v1308, %v1672
        %1678 = vmatpush.msra.mxu0 0.0
        %1679 = vmatpush.msra.mxu0 0.0
        %1680 = vmatpush.msra.mxu0 0.0
        %1681 = vmatpush.msra.mxu0 0.0
        %1682 = vmatpush.msra.mxu0 0.0
        %1683 = vmatpush.msra.mxu0 0.0
        %1684 = vmatpush.msra.mxu0 0.0
        %1685 = vmatpush.msra.mxu0 0.0
        %1686 = vmatpush.msra.mxu0 0.0
        %1687 = vmatpush.msra.mxu0 0.0
        %1688 = vmatpush.msra.mxu0 0.0
        %1689 = vmatpush.msra.mxu0 0.0
        %1690 = vmatpush.msra.mxu0 %v1499
        %1691 = vmatpush.msra.mxu0 %v1490
        %1692 = vmatpush.msra.mxu0 %v1486
        %1693 = vmatpush.msra.mxu0 %v1482
        %1694 = vmatmul.f32.gmra.mxu0 %v1395
        %v1695 = vpop.f32.mrf.mxu0
        %v1696 = vadd.f32 0.0, %v1695
        %1697 = vdwg.mxu0
        %1698 = vmatpush.msra.mxu0 0.0
        %1699 = vmatpush.msra.mxu0 0.0
        %1700 = vmatpush.msra.mxu0 0.0
        %1701 = vmatpush.msra.mxu0 0.0
        %1702 = vmatpush.msra.mxu0 0.0
        %1703 = vmatpush.msra.mxu0 0.0
        %1704 = vmatpush.msra.mxu0 0.0
        %1705 = vmatpush.msra.mxu0 0.0
        %1706 = vmatpush.msra.mxu0 0.0
        %1707 = vmatpush.msra.mxu0 0.0
        %1708 = vmatpush.msra.mxu0 0.0
        %1709 = vmatpush.msra.mxu0 0.0
        %1710 = vmatpush.msra.mxu0 %v1502
        %1711 = vmatpush.msra.mxu0 %v1491
        %1712 = vmatpush.msra.mxu0 %v1487
        %1713 = vmatpush.msra.mxu0 %v1483
        %1714 = vmatmul.f32.gmra.mxu0 %v1395
        %v1715 = vpop.f32.mrf.mxu0
        %v1716 = vadd.f32 0.0, %v1715
        %1717 = vdwg.mxu0
        %1718 = vmatpush.msra.mxu0 0.0
        %1719 = vmatpush.msra.mxu0 0.0
        %1720 = vmatpush.msra.mxu0 0.0
        %1721 = vmatpush.msra.mxu0 0.0
        %1722 = vmatpush.msra.mxu0 0.0
        %1723 = vmatpush.msra.mxu0 0.0
        %1724 = vmatpush.msra.mxu0 0.0
        %1725 = vmatpush.msra.mxu0 0.0
        %1726 = vmatpush.msra.mxu0 0.0
        %1727 = vmatpush.msra.mxu0 0.0
        %1728 = vmatpush.msra.mxu0 0.0
        %1729 = vmatpush.msra.mxu0 0.0
        %1730 = vmatpush.msra.mxu0 %v1505
        %1731 = vmatpush.msra.mxu0 %v1492
        %1732 = vmatpush.msra.mxu0 %v1488
        %1733 = vmatpush.msra.mxu0 %v1484
        %1734 = vmatmul.f32.gmra.mxu0 %v1395
        %v1735 = vpop.f32.mrf.mxu0
        %v1736 = vadd.f32 0.0, %v1735
        %1737 = vdwg.mxu0
        %1738 = vmatpush.msra.mxu0 0.0
        %1739 = vmatpush.msra.mxu0 0.0
        %1740 = vmatpush.msra.mxu0 0.0
        %1741 = vmatpush.msra.mxu0 0.0
        %1742 = vmatpush.msra.mxu0 0.0
        %1743 = vmatpush.msra.mxu0 0.0
        %1744 = vmatpush.msra.mxu0 0.0
        %1745 = vmatpush.msra.mxu0 0.0
        %1746 = vmatpush.msra.mxu0 0.0
        %1747 = vmatpush.msra.mxu0 0.0
        %1748 = vmatpush.msra.mxu0 0.0
        %1749 = vmatpush.msra.mxu0 0.0
        %1750 = vmatpush.msra.mxu0 %v1508
        %1751 = vmatpush.msra.mxu0 %v1493
        %1752 = vmatpush.msra.mxu0 %v1489
        %1753 = vmatpush.msra.mxu0 %v1485
        %1754 = vmatmul.f32.gmra.mxu0 %v1395
        %v1755 = vpop.f32.mrf.mxu0
        %v1756 = vadd.f32 0.0, %v1755
        %1757 = vdwg.mxu0
        %v1758 = vadd.f32 %v1389, %v1696
        %v1759 = vadd.f32 %v1390, %v1716
        %v1760 = vadd.f32 %v1391, %v1736
        %v1761 = vadd.f32 %v1392, %v1756
        %v1762 = vld [vmem:[%s409 + $0x1] sm:$0x3f]
        %v1764 = vsel %vm430, %v1762, 0
        %1766 = vmatpush.msra.mxu0 0.0
        %1767 = vmatpush.msra.mxu0 0.0
        %1768 = vmatpush.msra.mxu0 0.0
        %1769 = vmatpush.msra.mxu0 0.0
        %1770 = vmatpush.msra.mxu0 0.0
        %1771 = vmatpush.msra.mxu0 0.0
        %1772 = vmatpush.msra.mxu0 0.0
        %1773 = vmatpush.msra.mxu0 0.0
        %1774 = vmatpush.msra.mxu0 0.0
        %1775 = vmatpush.msra.mxu0 0.0
        %1776 = vmatpush.msra.mxu0 0.0
        %1777 = vmatpush.msra.mxu0 0.0
        %1778 = vmatpush.msra.mxu0 %v1499
        %1779 = vmatpush.msra.mxu0 %v1490
        %1780 = vmatpush.msra.mxu0 %v1486
        %1781 = vmatpush.msra.mxu0 %v1482
        %1782 = vmatmul.f32.gmra.mxu0 %v1764
        %v1783 = vpop.f32.mrf.mxu0
        %v1784 = vadd.f32 0.0, %v1783
        %1785 = vdwg.mxu0
        %1786 = vmatpush.msra.mxu0 0.0
        %1787 = vmatpush.msra.mxu0 0.0
        %1788 = vmatpush.msra.mxu0 0.0
        %1789 = vmatpush.msra.mxu0 0.0
        %1790 = vmatpush.msra.mxu0 0.0
        %1791 = vmatpush.msra.mxu0 0.0
        %1792 = vmatpush.msra.mxu0 0.0
        %1793 = vmatpush.msra.mxu0 0.0
        %1794 = vmatpush.msra.mxu0 0.0
        %1795 = vmatpush.msra.mxu0 0.0
        %1796 = vmatpush.msra.mxu0 0.0
        %1797 = vmatpush.msra.mxu0 0.0
        %1798 = vmatpush.msra.mxu0 %v1502
        %1799 = vmatpush.msra.mxu0 %v1491
        %1800 = vmatpush.msra.mxu0 %v1487
        %1801 = vmatpush.msra.mxu0 %v1483
        %1802 = vmatmul.f32.gmra.mxu0 %v1764
        %v1803 = vpop.f32.mrf.mxu0
        %v1804 = vadd.f32 0.0, %v1803
        %1805 = vdwg.mxu0
        %1806 = vmatpush.msra.mxu0 0.0
        %1807 = vmatpush.msra.mxu0 0.0
        %1808 = vmatpush.msra.mxu0 0.0
        %1809 = vmatpush.msra.mxu0 0.0
        %1810 = vmatpush.msra.mxu0 0.0
        %1811 = vmatpush.msra.mxu0 0.0
        %1812 = vmatpush.msra.mxu0 0.0
        %1813 = vmatpush.msra.mxu0 0.0
        %1814 = vmatpush.msra.mxu0 0.0
        %1815 = vmatpush.msra.mxu0 0.0
        %1816 = vmatpush.msra.mxu0 0.0
        %1817 = vmatpush.msra.mxu0 0.0
        %1818 = vmatpush.msra.mxu0 %v1505
        %1819 = vmatpush.msra.mxu0 %v1492
        %1820 = vmatpush.msra.mxu0 %v1488
        %1821 = vmatpush.msra.mxu0 %v1484
        %1822 = vmatmul.f32.gmra.mxu0 %v1764
        %v1823 = vpop.f32.mrf.mxu0
        %v1824 = vadd.f32 0.0, %v1823
        %1825 = vdwg.mxu0
        %1826 = vmatpush.msra.mxu0 0.0
        %1827 = vmatpush.msra.mxu0 0.0
        %1828 = vmatpush.msra.mxu0 0.0
        %1829 = vmatpush.msra.mxu0 0.0
        %1830 = vmatpush.msra.mxu0 0.0
        %1831 = vmatpush.msra.mxu0 0.0
        %1832 = vmatpush.msra.mxu0 0.0
        %1833 = vmatpush.msra.mxu0 0.0
        %1834 = vmatpush.msra.mxu0 0.0
        %1835 = vmatpush.msra.mxu0 0.0
        %1836 = vmatpush.msra.mxu0 0.0
        %1837 = vmatpush.msra.mxu0 0.0
        %1838 = vmatpush.msra.mxu0 %v1508
        %1839 = vmatpush.msra.mxu0 %v1493
        %1840 = vmatpush.msra.mxu0 %v1489
        %1841 = vmatpush.msra.mxu0 %v1485
        %1842 = vmatmul.f32.gmra.mxu0 %v1764
        %v1843 = vpop.f32.mrf.mxu0
        %v1844 = vadd.f32 0.0, %v1843
        %1845 = vdwg.mxu0
        %v1846 = vadd.f32 %v1477, %v1784
        %v1847 = vadd.f32 %v1478, %v1804
        %v1848 = vadd.f32 %v1479, %v1824
        %v1849 = vadd.f32 %v1480, %v1844
        %s1850 = scalar_lea.vmem [#allocation5], 512
        %v1851 = vld [vmem:[%s1850] sm:$0xff]
        %v1852 = vld [vmem:[%s1850 + $0x8] sm:$0xff]
        %v1853 = vld [vmem:[%s1850 + $0x10] sm:$0xff]
        %v1854 = vld [vmem:[%s1850 + $0x18] sm:$0xff]
        %v1855 = vld [vmem:[%s1850 + $0x20] sm:$0xff]
        %v1856 = vld [vmem:[%s1850 + $0x28] sm:$0xff]
        %v1857 = vld [vmem:[%s1850 + $0x30] sm:$0xff]
        %v1858 = vld [vmem:[%s1850 + $0x38] sm:$0xff]
        %v1859 = vld [vmem:[%s1850 + $0x40] sm:$0xff]
        %v1860 = vld [vmem:[%s1850 + $0x48] sm:$0xff]
        %v1861 = vld [vmem:[%s1850 + $0x50] sm:$0xff]
        %v1862 = vld [vmem:[%s1850 + $0x58] sm:$0xff]
        %v1863 = vld [vmem:[%s1850 + $0x60] sm:$0xf]
        %v1864 = vld [vmem:[%s1850 + $0x68] sm:$0xf]
        %v1865 = vld [vmem:[%s1850 + $0x70] sm:$0xf]
        %v1866 = vld [vmem:[%s1850 + $0x78] sm:$0xf]
        %v1868 = vsel %vm434, %v1863, 0
        %v1871 = vsel %vm434, %v1864, 0
        %v1874 = vsel %vm434, %v1865, 0
        %v1877 = vsel %vm434, %v1866, 0
        %1879 = vmatpush.msra.mxu0 0.0
        %1880 = vmatpush.msra.mxu0 0.0
        %1881 = vmatpush.msra.mxu0 0.0
        %1882 = vmatpush.msra.mxu0 0.0
        %1883 = vmatpush.msra.mxu0 0.0
        %1884 = vmatpush.msra.mxu0 0.0
        %1885 = vmatpush.msra.mxu0 0.0
        %1886 = vmatpush.msra.mxu0 0.0
        %1887 = vmatpush.msra.mxu0 0.0
        %1888 = vmatpush.msra.mxu0 0.0
        %1889 = vmatpush.msra.mxu0 0.0
        %1890 = vmatpush.msra.mxu0 0.0
        %1891 = vmatpush.msra.mxu0 %v1868
        %1892 = vmatpush.msra.mxu0 %v1859
        %1893 = vmatpush.msra.mxu0 %v1855
        %1894 = vmatpush.msra.mxu0 %v1851
        %1895 = vmatmul.f32.gmra.mxu0 %v950
        %v1896 = vpop.f32.mrf.mxu0
        %v1897 = vadd.f32 0.0, %v1896
        %1898 = vdwg.mxu0
        %1899 = vmatpush.msra.mxu0 0.0
        %1900 = vmatpush.msra.mxu0 0.0
        %1901 = vmatpush.msra.mxu0 0.0
        %1902 = vmatpush.msra.mxu0 0.0
        %1903 = vmatpush.msra.mxu0 0.0
        %1904 = vmatpush.msra.mxu0 0.0
        %1905 = vmatpush.msra.mxu0 0.0
        %1906 = vmatpush.msra.mxu0 0.0
        %1907 = vmatpush.msra.mxu0 0.0
        %1908 = vmatpush.msra.mxu0 0.0
        %1909 = vmatpush.msra.mxu0 0.0
        %1910 = vmatpush.msra.mxu0 0.0
        %1911 = vmatpush.msra.mxu0 %v1871
        %1912 = vmatpush.msra.mxu0 %v1860
        %1913 = vmatpush.msra.mxu0 %v1856
        %1914 = vmatpush.msra.mxu0 %v1852
        %1915 = vmatmul.f32.gmra.mxu0 %v950
        %v1916 = vpop.f32.mrf.mxu0
        %v1917 = vadd.f32 0.0, %v1916
        %1918 = vdwg.mxu0
        %1919 = vmatpush.msra.mxu0 0.0
        %1920 = vmatpush.msra.mxu0 0.0
        %1921 = vmatpush.msra.mxu0 0.0
        %1922 = vmatpush.msra.mxu0 0.0
        %1923 = vmatpush.msra.mxu0 0.0
        %1924 = vmatpush.msra.mxu0 0.0
        %1925 = vmatpush.msra.mxu0 0.0
        %1926 = vmatpush.msra.mxu0 0.0
        %1927 = vmatpush.msra.mxu0 0.0
        %1928 = vmatpush.msra.mxu0 0.0
        %1929 = vmatpush.msra.mxu0 0.0
        %1930 = vmatpush.msra.mxu0 0.0
        %1931 = vmatpush.msra.mxu0 %v1874
        %1932 = vmatpush.msra.mxu0 %v1861
        %1933 = vmatpush.msra.mxu0 %v1857
        %1934 = vmatpush.msra.mxu0 %v1853
        %1935 = vmatmul.f32.gmra.mxu0 %v950
        %v1936 = vpop.f32.mrf.mxu0
        %v1937 = vadd.f32 0.0, %v1936
        %1938 = vdwg.mxu0
        %1939 = vmatpush.msra.mxu0 0.0
        %1940 = vmatpush.msra.mxu0 0.0
        %1941 = vmatpush.msra.mxu0 0.0
        %1942 = vmatpush.msra.mxu0 0.0
        %1943 = vmatpush.msra.mxu0 0.0
        %1944 = vmatpush.msra.mxu0 0.0
        %1945 = vmatpush.msra.mxu0 0.0
        %1946 = vmatpush.msra.mxu0 0.0
        %1947 = vmatpush.msra.mxu0 0.0
        %1948 = vmatpush.msra.mxu0 0.0
        %1949 = vmatpush.msra.mxu0 0.0
        %1950 = vmatpush.msra.mxu0 0.0
        %1951 = vmatpush.msra.mxu0 %v1877
        %1952 = vmatpush.msra.mxu0 %v1862
        %1953 = vmatpush.msra.mxu0 %v1858
        %1954 = vmatpush.msra.mxu0 %v1854
        %1955 = vmatmul.f32.gmra.mxu0 %v950
        %v1956 = vpop.f32.mrf.mxu0
        %v1957 = vadd.f32 0.0, %v1956
        %1958 = vdwg.mxu0
        %v1959 = vadd.f32 %v1590, %v1897
        %v1960 = vadd.f32 %v1591, %v1917
        %v1961 = vadd.f32 %v1592, %v1937
        %v1962 = vadd.f32 %v1593, %v1957
        %1963 = vmatpush.msra.mxu0 0.0
        %1964 = vmatpush.msra.mxu0 0.0
        %1965 = vmatpush.msra.mxu0 0.0
        %1966 = vmatpush.msra.mxu0 0.0
        %1967 = vmatpush.msra.mxu0 0.0
        %1968 = vmatpush.msra.mxu0 0.0
        %1969 = vmatpush.msra.mxu0 0.0
        %1970 = vmatpush.msra.mxu0 0.0
        %1971 = vmatpush.msra.mxu0 0.0
        %1972 = vmatpush.msra.mxu0 0.0
        %1973 = vmatpush.msra.mxu0 0.0
        %1974 = vmatpush.msra.mxu0 0.0
        %1975 = vmatpush.msra.mxu0 %v1868
        %1976 = vmatpush.msra.mxu0 %v1859
        %1977 = vmatpush.msra.mxu0 %v1855
        %1978 = vmatpush.msra.mxu0 %v1851
        %1979 = vmatmul.f32.gmra.mxu0 %v1395
        %v1980 = vpop.f32.mrf.mxu0
        %v1981 = vadd.f32 0.0, %v1980
        %1982 = vdwg.mxu0
        %1983 = vmatpush.msra.mxu0 0.0
        %1984 = vmatpush.msra.mxu0 0.0
        %1985 = vmatpush.msra.mxu0 0.0
        %1986 = vmatpush.msra.mxu0 0.0
        %1987 = vmatpush.msra.mxu0 0.0
        %1988 = vmatpush.msra.mxu0 0.0
        %1989 = vmatpush.msra.mxu0 0.0
        %1990 = vmatpush.msra.mxu0 0.0
        %1991 = vmatpush.msra.mxu0 0.0
        %1992 = vmatpush.msra.mxu0 0.0
        %1993 = vmatpush.msra.mxu0 0.0
        %1994 = vmatpush.msra.mxu0 0.0
        %1995 = vmatpush.msra.mxu0 %v1871
        %1996 = vmatpush.msra.mxu0 %v1860
        %1997 = vmatpush.msra.mxu0 %v1856
        %1998 = vmatpush.msra.mxu0 %v1852
        %1999 = vmatmul.f32.gmra.mxu0 %v1395
        %v2000 = vpop.f32.mrf.mxu0
        %v2001 = vadd.f32 0.0, %v2000
        %2002 = vdwg.mxu0
        %2003 = vmatpush.msra.mxu0 0.0
        %2004 = vmatpush.msra.mxu0 0.0
        %2005 = vmatpush.msra.mxu0 0.0
        %2006 = vmatpush.msra.mxu0 0.0
        %2007 = vmatpush.msra.mxu0 0.0
        %2008 = vmatpush.msra.mxu0 0.0
        %2009 = vmatpush.msra.mxu0 0.0
        %2010 = vmatpush.msra.mxu0 0.0
        %2011 = vmatpush.msra.mxu0 0.0
        %2012 = vmatpush.msra.mxu0 0.0
        %2013 = vmatpush.msra.mxu0 0.0
        %2014 = vmatpush.msra.mxu0 0.0
        %2015 = vmatpush.msra.mxu0 %v1874
        %2016 = vmatpush.msra.mxu0 %v1861
        %2017 = vmatpush.msra.mxu0 %v1857
        %2018 = vmatpush.msra.mxu0 %v1853
        %2019 = vmatmul.f32.gmra.mxu0 %v1395
        %v2020 = vpop.f32.mrf.mxu0
        %v2021 = vadd.f32 0.0, %v2020
        %2022 = vdwg.mxu0
        %2023 = vmatpush.msra.mxu0 0.0
        %2024 = vmatpush.msra.mxu0 0.0
        %2025 = vmatpush.msra.mxu0 0.0
        %2026 = vmatpush.msra.mxu0 0.0
        %2027 = vmatpush.msra.mxu0 0.0
        %2028 = vmatpush.msra.mxu0 0.0
        %2029 = vmatpush.msra.mxu0 0.0
        %2030 = vmatpush.msra.mxu0 0.0
        %2031 = vmatpush.msra.mxu0 0.0
        %2032 = vmatpush.msra.mxu0 0.0
        %2033 = vmatpush.msra.mxu0 0.0
        %2034 = vmatpush.msra.mxu0 0.0
        %2035 = vmatpush.msra.mxu0 %v1877
        %2036 = vmatpush.msra.mxu0 %v1862
        %2037 = vmatpush.msra.mxu0 %v1858
        %2038 = vmatpush.msra.mxu0 %v1854
        %2039 = vmatmul.f32.gmra.mxu0 %v1395
        %v2040 = vpop.f32.mrf.mxu0
        %v2041 = vadd.f32 0.0, %v2040
        %2042 = vdwg.mxu0
        %v2043 = vadd.f32 %v1674, %v1981
        %v2044 = vadd.f32 %v1675, %v2001
        %v2045 = vadd.f32 %v1676, %v2021
        %v2046 = vadd.f32 %v1677, %v2041
        %2047 = vmatpush.msra.mxu0 0.0
        %2048 = vmatpush.msra.mxu0 0.0
        %2049 = vmatpush.msra.mxu0 0.0
        %2050 = vmatpush.msra.mxu0 0.0
        %2051 = vmatpush.msra.mxu0 0.0
        %2052 = vmatpush.msra.mxu0 0.0
        %2053 = vmatpush.msra.mxu0 0.0
        %2054 = vmatpush.msra.mxu0 0.0
        %2055 = vmatpush.msra.mxu0 0.0
        %2056 = vmatpush.msra.mxu0 0.0
        %2057 = vmatpush.msra.mxu0 0.0
        %2058 = vmatpush.msra.mxu0 0.0
        %2059 = vmatpush.msra.mxu0 %v1868
        %2060 = vmatpush.msra.mxu0 %v1859
        %2061 = vmatpush.msra.mxu0 %v1855
        %2062 = vmatpush.msra.mxu0 %v1851
        %2063 = vmatmul.f32.gmra.mxu0 %v1764
        %v2064 = vpop.f32.mrf.mxu0
        %v2065 = vadd.f32 0.0, %v2064
        %2066 = vdwg.mxu0
        %2067 = vmatpush.msra.mxu0 0.0
        %2068 = vmatpush.msra.mxu0 0.0
        %2069 = vmatpush.msra.mxu0 0.0
        %2070 = vmatpush.msra.mxu0 0.0
        %2071 = vmatpush.msra.mxu0 0.0
        %2072 = vmatpush.msra.mxu0 0.0
        %2073 = vmatpush.msra.mxu0 0.0
        %2074 = vmatpush.msra.mxu0 0.0
        %2075 = vmatpush.msra.mxu0 0.0
        %2076 = vmatpush.msra.mxu0 0.0
        %2077 = vmatpush.msra.mxu0 0.0
        %2078 = vmatpush.msra.mxu0 0.0
        %2079 = vmatpush.msra.mxu0 %v1871
        %2080 = vmatpush.msra.mxu0 %v1860
        %2081 = vmatpush.msra.mxu0 %v1856
        %2082 = vmatpush.msra.mxu0 %v1852
        %2083 = vmatmul.f32.gmra.mxu0 %v1764
        %v2084 = vpop.f32.mrf.mxu0
        %v2085 = vadd.f32 0.0, %v2084
        %2086 = vdwg.mxu0
        %2087 = vmatpush.msra.mxu0 0.0
        %2088 = vmatpush.msra.mxu0 0.0
        %2089 = vmatpush.msra.mxu0 0.0
        %2090 = vmatpush.msra.mxu0 0.0
        %2091 = vmatpush.msra.mxu0 0.0
        %2092 = vmatpush.msra.mxu0 0.0
        %2093 = vmatpush.msra.mxu0 0.0
        %2094 = vmatpush.msra.mxu0 0.0
        %2095 = vmatpush.msra.mxu0 0.0
        %2096 = vmatpush.msra.mxu0 0.0
        %2097 = vmatpush.msra.mxu0 0.0
        %2098 = vmatpush.msra.mxu0 0.0
        %2099 = vmatpush.msra.mxu0 %v1874
        %2100 = vmatpush.msra.mxu0 %v1861
        %2101 = vmatpush.msra.mxu0 %v1857
        %2102 = vmatpush.msra.mxu0 %v1853
        %2103 = vmatmul.f32.gmra.mxu0 %v1764
        %v2104 = vpop.f32.mrf.mxu0
        %v2105 = vadd.f32 0.0, %v2104
        %2106 = vdwg.mxu0
        %2107 = vmatpush.msra.mxu0 0.0
        %2108 = vmatpush.msra.mxu0 0.0
        %2109 = vmatpush.msra.mxu0 0.0
        %2110 = vmatpush.msra.mxu0 0.0
        %2111 = vmatpush.msra.mxu0 0.0
        %2112 = vmatpush.msra.mxu0 0.0
        %2113 = vmatpush.msra.mxu0 0.0
        %2114 = vmatpush.msra.mxu0 0.0
        %2115 = vmatpush.msra.mxu0 0.0
        %2116 = vmatpush.msra.mxu0 0.0
        %2117 = vmatpush.msra.mxu0 0.0
        %2118 = vmatpush.msra.mxu0 0.0
        %2119 = vmatpush.msra.mxu0 %v1877
        %2120 = vmatpush.msra.mxu0 %v1862
        %2121 = vmatpush.msra.mxu0 %v1858
        %2122 = vmatpush.msra.mxu0 %v1854
        %2123 = vmatmul.f32.gmra.mxu0 %v1764
        %v2124 = vpop.f32.mrf.mxu0
        %v2125 = vadd.f32 0.0, %v2124
        %2126 = vdwg.mxu0
        %v2127 = vadd.f32 %v1758, %v2065
        %v2128 = vadd.f32 %v1759, %v2085
        %v2129 = vadd.f32 %v1760, %v2105
        %v2130 = vadd.f32 %v1761, %v2125
        %v2131 = vld [vmem:[%s411 + $0x1] sm:$0x3f]
        %v2133 = vsel %vm430, %v2131, 0
        %2135 = vmatpush.msra.mxu0 0.0
        %2136 = vmatpush.msra.mxu0 0.0
        %2137 = vmatpush.msra.mxu0 0.0
        %2138 = vmatpush.msra.mxu0 0.0
        %2139 = vmatpush.msra.mxu0 0.0
        %2140 = vmatpush.msra.mxu0 0.0
        %2141 = vmatpush.msra.mxu0 0.0
        %2142 = vmatpush.msra.mxu0 0.0
        %2143 = vmatpush.msra.mxu0 0.0
        %2144 = vmatpush.msra.mxu0 0.0
        %2145 = vmatpush.msra.mxu0 0.0
        %2146 = vmatpush.msra.mxu0 0.0
        %2147 = vmatpush.msra.mxu0 %v1868
        %2148 = vmatpush.msra.mxu0 %v1859
        %2149 = vmatpush.msra.mxu0 %v1855
        %2150 = vmatpush.msra.mxu0 %v1851
        %2151 = vmatmul.f32.gmra.mxu0 %v2133
        %v2152 = vpop.f32.mrf.mxu0
        %v2153 = vadd.f32 0.0, %v2152
        %2154 = vdwg.mxu0
        %2155 = vmatpush.msra.mxu0 0.0
        %2156 = vmatpush.msra.mxu0 0.0
        %2157 = vmatpush.msra.mxu0 0.0
        %2158 = vmatpush.msra.mxu0 0.0
        %2159 = vmatpush.msra.mxu0 0.0
        %2160 = vmatpush.msra.mxu0 0.0
        %2161 = vmatpush.msra.mxu0 0.0
        %2162 = vmatpush.msra.mxu0 0.0
        %2163 = vmatpush.msra.mxu0 0.0
        %2164 = vmatpush.msra.mxu0 0.0
        %2165 = vmatpush.msra.mxu0 0.0
        %2166 = vmatpush.msra.mxu0 0.0
        %2167 = vmatpush.msra.mxu0 %v1871
        %2168 = vmatpush.msra.mxu0 %v1860
        %2169 = vmatpush.msra.mxu0 %v1856
        %2170 = vmatpush.msra.mxu0 %v1852
        %2171 = vmatmul.f32.gmra.mxu0 %v2133
        %v2172 = vpop.f32.mrf.mxu0
        %v2173 = vadd.f32 0.0, %v2172
        %2174 = vdwg.mxu0
        %2175 = vmatpush.msra.mxu0 0.0
        %2176 = vmatpush.msra.mxu0 0.0
        %2177 = vmatpush.msra.mxu0 0.0
        %2178 = vmatpush.msra.mxu0 0.0
        %2179 = vmatpush.msra.mxu0 0.0
        %2180 = vmatpush.msra.mxu0 0.0
        %2181 = vmatpush.msra.mxu0 0.0
        %2182 = vmatpush.msra.mxu0 0.0
        %2183 = vmatpush.msra.mxu0 0.0
        %2184 = vmatpush.msra.mxu0 0.0
        %2185 = vmatpush.msra.mxu0 0.0
        %2186 = vmatpush.msra.mxu0 0.0
        %2187 = vmatpush.msra.mxu0 %v1874
        %2188 = vmatpush.msra.mxu0 %v1861
        %2189 = vmatpush.msra.mxu0 %v1857
        %2190 = vmatpush.msra.mxu0 %v1853
        %2191 = vmatmul.f32.gmra.mxu0 %v2133
        %v2192 = vpop.f32.mrf.mxu0
        %v2193 = vadd.f32 0.0, %v2192
        %2194 = vdwg.mxu0
        %2195 = vmatpush.msra.mxu0 0.0
        %2196 = vmatpush.msra.mxu0 0.0
        %2197 = vmatpush.msra.mxu0 0.0
        %2198 = vmatpush.msra.mxu0 0.0
        %2199 = vmatpush.msra.mxu0 0.0
        %2200 = vmatpush.msra.mxu0 0.0
        %2201 = vmatpush.msra.mxu0 0.0
        %2202 = vmatpush.msra.mxu0 0.0
        %2203 = vmatpush.msra.mxu0 0.0
        %2204 = vmatpush.msra.mxu0 0.0
        %2205 = vmatpush.msra.mxu0 0.0
        %2206 = vmatpush.msra.mxu0 0.0
        %2207 = vmatpush.msra.mxu0 %v1877
        %2208 = vmatpush.msra.mxu0 %v1862
        %2209 = vmatpush.msra.mxu0 %v1858
        %2210 = vmatpush.msra.mxu0 %v1854
        %2211 = vmatmul.f32.gmra.mxu0 %v2133
        %v2212 = vpop.f32.mrf.mxu0
        %v2213 = vadd.f32 0.0, %v2212
        %2214 = vdwg.mxu0
        %v2215 = vadd.f32 %v1846, %v2153
        %v2216 = vadd.f32 %v1847, %v2173
        %v2217 = vadd.f32 %v1848, %v2193
        %v2218 = vadd.f32 %v1849, %v2213
        %v2219 = vmax.f32 %v1959, %v2043
        %v2220 = vmax.f32 %v1960, %v2044
        %v2221 = vmax.f32 %v1961, %v2045
        %v2222 = vmax.f32 %v1962, %v2046
        %v2223 = vmax.f32 %v2219, %v2221
        %v2224 = vmax.f32 %v2220, %v2222
        %v2225 = vld [vmem:[#allocation8] sm:$0x3]
        %v2227 = vperm.slane %v2225, 0
        %v2228 = vperm.slane %v2225, 1
        %v2231 = vadd.f32 %v2223, %v2227
        %v2232 = vadd.f32 %v2224, %v2228
        %vm2233 = vcmp.gt.f32.partialorder %v2231, 1.0
        %vm2234 = vcmp.gt.f32.partialorder %v2232, 1.0
        %v2235 = vsel %vm2233, 1, 0
        %v2236 = vsel %vm2234, 1, 0
        %v2237 = vcvt.s32.f32 %v2235
        %v2238 = vcvt.s32.f32 %v2236
        %2239 = vst [vmem:[#allocation2] sm:$0x3f] %v2237
        %vm2240 = vcmask 128000
        %2241 = vst.msk [vmem:[#allocation2 + $0x8] sm:$0x3f] %vm2240, %v2238
        %v2242 = vmax.f32 %v2127, %v2215
        %v2243 = vmax.f32 %v2128, %v2216
        %v2244 = vmax.f32 %v2129, %v2217
        %v2245 = vmax.f32 %v2130, %v2218
        %v2246 = vmax.f32 %v2242, %v2244
        %v2247 = vmax.f32 %v2243, %v2245
        %v2248 = vld [vmem:[#allocation8] sm:$0x3]
        %v2250 = vperm.slane %v2248, 0
        %v2251 = vperm.slane %v2248, 1
        %v2254 = vadd.f32 %v2246, %v2250
        %v2255 = vadd.f32 %v2247, %v2251
        %vm2256 = vcmp.gt.f32.partialorder %v2254, 1.0
        %vm2257 = vcmp.gt.f32.partialorder %v2255, 1.0
        %v2258 = vsel %vm2256, 1, 0
        %v2259 = vsel %vm2257, 1, 0
        %v2260 = vcvt.s32.f32 %v2258
        %v2261 = vcvt.s32.f32 %v2259
        %2262 = vst [vmem:[#allocation3] sm:$0x3f] %v2260
        %2263 = vst.msk [vmem:[#allocation3 + $0x8] sm:$0x3f] %vm2240, %v2261
        %v2264 = vld [vmem:[#allocation10] sm:$0xff]
        %v2265 = vld [vmem:[#allocation10 + $0x8] sm:$0xff]
        %v2266 = vld [vmem:[#allocation10 + $0x10] sm:$0xff]
        %v2267 = vld [vmem:[#allocation10 + $0x18] sm:$0xff]
        %v2268 = vld [vmem:[#allocation10 + $0x20] sm:$0xff]
        %v2269 = vld [vmem:[#allocation10 + $0x28] sm:$0xff]
        %v2270 = vld [vmem:[#allocation10 + $0x30] sm:$0xff]
        %v2271 = vld [vmem:[#allocation10 + $0x38] sm:$0xff]
        %v2272 = vld [vmem:[#allocation10 + $0x40] sm:$0xff]
        %v2273 = vld [vmem:[#allocation10 + $0x48] sm:$0xff]
        %v2274 = vld [vmem:[#allocation10 + $0x50] sm:$0xff]
        %v2275 = vld [vmem:[#allocation10 + $0x58] sm:$0xff]
        %v2276 = vld [vmem:[#allocation10 + $0x60] sm:$0xff]
        %v2277 = vld [vmem:[#allocation10 + $0x68] sm:$0xff]
        %v2278 = vld [vmem:[#allocation10 + $0x70] sm:$0xff]
        %v2279 = vld [vmem:[#allocation10 + $0x78] sm:$0xff]
        %v2280 = vld [vmem:[#allocation10 + $0x80] sm:$0xff]
        %v2281 = vld [vmem:[#allocation10 + $0x88] sm:$0xff]
        %v2282 = vld [vmem:[#allocation10 + $0x90] sm:$0xff]
        %v2283 = vld [vmem:[#allocation10 + $0x98] sm:$0xff]
        %v2284 = vld [vmem:[#allocation10 + $0xa0] sm:$0xff]
        %v2285 = vld [vmem:[#allocation10 + $0xa8] sm:$0xff]
        %v2286 = vld [vmem:[#allocation10 + $0xb0] sm:$0xff]
        %v2287 = vld [vmem:[#allocation10 + $0xb8] sm:$0xff]
        %v2288 = vld [vmem:[#allocation10 + $0xc0] sm:$0xff]
        %v2289 = vld [vmem:[#allocation10 + $0xc8] sm:$0xff]
        %v2290 = vld [vmem:[#allocation10 + $0xd0] sm:$0xff]
        %v2291 = vld [vmem:[#allocation10 + $0xd8] sm:$0xff]
        %v2292 = vld [vmem:[#allocation10 + $0xe0] sm:$0xff]
        %v2293 = vld [vmem:[#allocation10 + $0xe8] sm:$0xff]
        %v2294 = vld [vmem:[#allocation10 + $0xf0] sm:$0xff]
        %v2295 = vld [vmem:[#allocation10 + $0xf8] sm:$0xff]
        %v2296 = vld [vmem:[#allocation10 + $0x100] sm:$0xff]
        %v2297 = vld [vmem:[#allocation10 + $0x108] sm:$0xff]
        %v2298 = vld [vmem:[#allocation10 + $0x110] sm:$0xff]
        %v2299 = vld [vmem:[#allocation10 + $0x118] sm:$0xff]
        %v2300 = vld [vmem:[#allocation10 + $0x120] sm:$0xff]
        %v2301 = vld [vmem:[#allocation10 + $0x128] sm:$0xff]
        %v2302 = vld [vmem:[#allocation10 + $0x130] sm:$0xff]
        %v2303 = vld [vmem:[#allocation10 + $0x138] sm:$0xff]
        %v2304 = vld [vmem:[#allocation10 + $0x140] sm:$0xff]
        %v2305 = vld [vmem:[#allocation10 + $0x148] sm:$0xff]
        %v2306 = vld [vmem:[#allocation10 + $0x150] sm:$0xff]
        %v2307 = vld [vmem:[#allocation10 + $0x158] sm:$0xff]
        %v2308 = vld [vmem:[#allocation10 + $0x160] sm:$0xff]
        %v2309 = vld [vmem:[#allocation10 + $0x168] sm:$0xff]
        %v2310 = vld [vmem:[#allocation10 + $0x170] sm:$0xff]
        %v2311 = vld [vmem:[#allocation10 + $0x178] sm:$0xff]
        %v2312 = vld [vmem:[#allocation10 + $0x180] sm:$0xff]
        %v2313 = vld [vmem:[#allocation10 + $0x188] sm:$0xff]
        %v2314 = vld [vmem:[#allocation10 + $0x190] sm:$0xff]
        %v2315 = vld [vmem:[#allocation10 + $0x198] sm:$0xff]
        %v2316 = vld [vmem:[#allocation10 + $0x1a0] sm:$0xff]
        %v2317 = vld [vmem:[#allocation10 + $0x1a8] sm:$0xff]
        %v2318 = vld [vmem:[#allocation10 + $0x1b0] sm:$0xff]
        %v2319 = vld [vmem:[#allocation10 + $0x1b8] sm:$0xff]
        %v2320 = vld [vmem:[#allocation10 + $0x1c0] sm:$0xff]
        %v2321 = vld [vmem:[#allocation10 + $0x1c8] sm:$0xff]
        %v2322 = vld [vmem:[#allocation10 + $0x1d0] sm:$0xff]
        %v2323 = vld [vmem:[#allocation10 + $0x1d8] sm:$0xff]
        %v2324 = vld [vmem:[#allocation10 + $0x1e0] sm:$0xff]
        %v2325 = vld [vmem:[#allocation10 + $0x1e8] sm:$0xff]
        %v2326 = vld [vmem:[#allocation10 + $0x1f0] sm:$0xff]
        %v2327 = vld [vmem:[#allocation10 + $0x1f8] sm:$0xff]
        %v2328 = vld [vmem:[#allocation10 + $0x200] sm:$0xff]
        %v2329 = vld [vmem:[#allocation10 + $0x208] sm:$0xff]
        %v2330 = vld [vmem:[#allocation10 + $0x210] sm:$0xff]
        %v2331 = vld [vmem:[#allocation10 + $0x218] sm:$0xff]
        %v2332 = vld [vmem:[#allocation10 + $0x220] sm:$0xff]
        %v2333 = vld [vmem:[#allocation10 + $0x228] sm:$0xff]
        %v2334 = vld [vmem:[#allocation10 + $0x230] sm:$0xff]
        %v2335 = vld [vmem:[#allocation10 + $0x238] sm:$0xff]
        %v2336 = vld [vmem:[#allocation2] sm:$0xf]
        %v2337 = vld [vmem:[#allocation2 + $0x8] sm:$0xf]
        %v2338 = vld [vmem:[#allocation3] sm:$0xf]
        %v2339 = vld [vmem:[#allocation3 + $0x8] sm:$0xf]
        %s2340 = scalar_lea.vmem [#allocation10], 576
        %v2341 = vld [vmem:[%s2340] sm:$0xff]
        %v2342 = vld [vmem:[%s2340 + $0x8] sm:$0xff]
        %v2343 = vld [vmem:[%s2340 + $0x10] sm:$0xff]
        %v2344 = vld [vmem:[%s2340 + $0x18] sm:$0xff]
        %v2345 = vld [vmem:[%s2340 + $0x20] sm:$0xff]
        %v2346 = vld [vmem:[%s2340 + $0x28] sm:$0xff]
        %v2347 = vld [vmem:[%s2340 + $0x30] sm:$0xff]
        %v2348 = vld [vmem:[%s2340 + $0x38] sm:$0xff]
        %v2349 = vld [vmem:[%s2340 + $0x40] sm:$0xff]
        %v2350 = vld [vmem:[%s2340 + $0x48] sm:$0xff]
        %v2351 = vld [vmem:[%s2340 + $0x50] sm:$0xff]
        %v2352 = vld [vmem:[%s2340 + $0x58] sm:$0xff]
        %v2353 = vld [vmem:[%s2340 + $0x60] sm:$0xff]
        %v2354 = vld [vmem:[%s2340 + $0x68] sm:$0xff]
        %v2355 = vld [vmem:[%s2340 + $0x70] sm:$0xff]
        %v2356 = vld [vmem:[%s2340 + $0x78] sm:$0xff]
        %v2357 = vld [vmem:[%s2340 + $0x80] sm:$0xff]
        %v2358 = vld [vmem:[%s2340 + $0x88] sm:$0xff]
        %v2359 = vld [vmem:[%s2340 + $0x90] sm:$0xff]
        %v2360 = vld [vmem:[%s2340 + $0x98] sm:$0xff]
        %v2361 = vld [vmem:[%s2340 + $0xa0] sm:$0xff]
        %v2362 = vld [vmem:[%s2340 + $0xa8] sm:$0xff]
        %v2363 = vld [vmem:[%s2340 + $0xb0] sm:$0xff]
        %v2364 = vld [vmem:[%s2340 + $0xb8] sm:$0xff]
        %v2365 = vld [vmem:[%s2340 + $0xc0] sm:$0xff]
        %v2366 = vld [vmem:[%s2340 + $0xc8] sm:$0xff]
        %v2367 = vld [vmem:[%s2340 + $0xd0] sm:$0xff]
        %v2368 = vld [vmem:[%s2340 + $0xd8] sm:$0xff]
        %v2369 = vld [vmem:[%s2340 + $0xe0] sm:$0xff]
        %v2370 = vld [vmem:[%s2340 + $0xe8] sm:$0xff]
        %v2371 = vld [vmem:[%s2340 + $0xf0] sm:$0xff]
        %v2372 = vld [vmem:[%s2340 + $0xf8] sm:$0xff]
        %v2373 = vld [vmem:[%s2340 + $0x100] sm:$0xff]
        %v2374 = vld [vmem:[%s2340 + $0x108] sm:$0xff]
        %v2375 = vld [vmem:[%s2340 + $0x110] sm:$0xff]
        %v2376 = vld [vmem:[%s2340 + $0x118] sm:$0xff]
        %v2377 = vld [vmem:[%s2340 + $0x120] sm:$0xff]
        %v2378 = vld [vmem:[%s2340 + $0x128] sm:$0xff]
        %v2379 = vld [vmem:[%s2340 + $0x130] sm:$0xff]
        %v2380 = vld [vmem:[%s2340 + $0x138] sm:$0xff]
        %v2381 = vld [vmem:[%s2340 + $0x140] sm:$0xff]
        %v2382 = vld [vmem:[%s2340 + $0x148] sm:$0xff]
        %v2383 = vld [vmem:[%s2340 + $0x150] sm:$0xff]
        %v2384 = vld [vmem:[%s2340 + $0x158] sm:$0xff]
        %v2385 = vld [vmem:[%s2340 + $0x160] sm:$0xff]
        %v2386 = vld [vmem:[%s2340 + $0x168] sm:$0xff]
        %v2387 = vld [vmem:[%s2340 + $0x170] sm:$0xff]
        %v2388 = vld [vmem:[%s2340 + $0x178] sm:$0xff]
        %v2389 = vld [vmem:[%s2340 + $0x180] sm:$0xff]
        %v2390 = vld [vmem:[%s2340 + $0x188] sm:$0xff]
        %v2391 = vld [vmem:[%s2340 + $0x190] sm:$0xff]
        %v2392 = vld [vmem:[%s2340 + $0x198] sm:$0xff]
        %v2393 = vld [vmem:[%s2340 + $0x1a0] sm:$0xff]
        %v2394 = vld [vmem:[%s2340 + $0x1a8] sm:$0xff]
        %v2395 = vld [vmem:[%s2340 + $0x1b0] sm:$0xff]
        %v2396 = vld [vmem:[%s2340 + $0x1b8] sm:$0xff]
        %v2397 = vld [vmem:[%s2340 + $0x1c0] sm:$0xff]
        %v2398 = vld [vmem:[%s2340 + $0x1c8] sm:$0xff]
        %v2399 = vld [vmem:[%s2340 + $0x1d0] sm:$0xff]
        %v2400 = vld [vmem:[%s2340 + $0x1d8] sm:$0xff]
        %v2401 = vld [vmem:[%s2340 + $0x1e0] sm:$0xff]
        %v2402 = vld [vmem:[%s2340 + $0x1e8] sm:$0xff]
        %v2403 = vld [vmem:[%s2340 + $0x1f0] sm:$0xff]
        %v2404 = vld [vmem:[%s2340 + $0x1f8] sm:$0xff]
        %v2405 = vld [vmem:[%s2340 + $0x200] sm:$0xff]
        %v2406 = vld [vmem:[%s2340 + $0x208] sm:$0xff]
        %v2407 = vld [vmem:[%s2340 + $0x210] sm:$0xff]
        %v2408 = vld [vmem:[%s2340 + $0x218] sm:$0xff]
        %v2409 = vld [vmem:[%s2340 + $0x220] sm:$0xff]
        %v2410 = vld [vmem:[%s2340 + $0x228] sm:$0xff]
        %v2411 = vld [vmem:[%s2340 + $0x230] sm:$0xff]
        %v2412 = vld [vmem:[%s2340 + $0x238] sm:$0xff]
        %vm2413 = vcmask 130048
        %v2415 = vsel %vm2413, %v2339, 0
        %2417 = vmatpush.msra.mxu0 %v2401
        %2418 = vmatpush.msra.mxu0 %v2397
        %2419 = vmatpush.msra.mxu0 %v2393
        %2420 = vmatpush.msra.mxu0 %v2389
        %2421 = vmatpush.msra.mxu0 %v2385
        %2422 = vmatpush.msra.mxu0 %v2381
        %2423 = vmatpush.msra.mxu0 %v2377
        %2424 = vmatpush.msra.mxu0 %v2373
        %2425 = vmatpush.msra.mxu0 %v2369
        %2426 = vmatpush.msra.mxu0 %v2365
        %2427 = vmatpush.msra.mxu0 %v2361
        %2428 = vmatpush.msra.mxu0 %v2357
        %2429 = vmatpush.msra.mxu0 %v2353
        %2430 = vmatpush.msra.mxu0 %v2349
        %2431 = vmatpush.msra.mxu0 %v2345
        %2432 = vmatpush.msra.mxu0 %v2341
        %2433 = vmatmul.f32.gmra.mxu0 %v2338
        %v2434 = vpop.f32.mrf.mxu0
        %v2435 = vadd.f32 0.0, %v2434
        %2436 = vdwg.mxu0
        %2437 = vmatpush.msra.mxu0 0.0
        %2438 = vmatpush.msra.mxu0 0.0
        %2439 = vmatpush.msra.mxu0 0.0
        %2440 = vmatpush.msra.mxu0 0.0
        %2441 = vmatpush.msra.mxu0 0.0
        %2442 = vmatpush.msra.mxu0 0.0
        %2443 = vmatpush.msra.mxu0 0.0
        %2444 = vmatpush.msra.mxu0 0.0
        %2445 = vmatpush.msra.mxu0 0.0
        %2446 = vmatpush.msra.mxu0 0.0
        %2447 = vmatpush.msra.mxu0 0.0
        %2448 = vmatpush.msra.mxu0 0.0
        %2449 = vmatpush.msra.mxu0 0.0
        %2450 = vmatpush.msra.mxu0 0.0
        %2451 = vmatpush.msra.mxu0 %v2409
        %2452 = vmatpush.msra.mxu0 %v2405
        %2453 = vmatmul.f32.gmra.mxu0 %v2415
        %v2454 = vpop.f32.mrf.mxu0
        %v2455 = vadd.f32 %v2435, %v2454
        %2456 = vdwg.mxu0
        %2457 = vmatpush.msra.mxu0 %v2402
        %2458 = vmatpush.msra.mxu0 %v2398
        %2459 = vmatpush.msra.mxu0 %v2394
        %2460 = vmatpush.msra.mxu0 %v2390
        %2461 = vmatpush.msra.mxu0 %v2386
        %2462 = vmatpush.msra.mxu0 %v2382
        %2463 = vmatpush.msra.mxu0 %v2378
        %2464 = vmatpush.msra.mxu0 %v2374
        %2465 = vmatpush.msra.mxu0 %v2370
        %2466 = vmatpush.msra.mxu0 %v2366
        %2467 = vmatpush.msra.mxu0 %v2362
        %2468 = vmatpush.msra.mxu0 %v2358
        %2469 = vmatpush.msra.mxu0 %v2354
        %2470 = vmatpush.msra.mxu0 %v2350
        %2471 = vmatpush.msra.mxu0 %v2346
        %2472 = vmatpush.msra.mxu0 %v2342
        %2473 = vmatmul.f32.gmra.mxu0 %v2338
        %v2474 = vpop.f32.mrf.mxu0
        %v2475 = vadd.f32 0.0, %v2474
        %2476 = vdwg.mxu0
        %2477 = vmatpush.msra.mxu0 0.0
        %2478 = vmatpush.msra.mxu0 0.0
        %2479 = vmatpush.msra.mxu0 0.0
        %2480 = vmatpush.msra.mxu0 0.0
        %2481 = vmatpush.msra.mxu0 0.0
        %2482 = vmatpush.msra.mxu0 0.0
        %2483 = vmatpush.msra.mxu0 0.0
        %2484 = vmatpush.msra.mxu0 0.0
        %2485 = vmatpush.msra.mxu0 0.0
        %2486 = vmatpush.msra.mxu0 0.0
        %2487 = vmatpush.msra.mxu0 0.0
        %2488 = vmatpush.msra.mxu0 0.0
        %2489 = vmatpush.msra.mxu0 0.0
        %2490 = vmatpush.msra.mxu0 0.0
        %2491 = vmatpush.msra.mxu0 %v2410
        %2492 = vmatpush.msra.mxu0 %v2406
        %2493 = vmatmul.f32.gmra.mxu0 %v2415
        %v2494 = vpop.f32.mrf.mxu0
        %v2495 = vadd.f32 %v2475, %v2494
        %2496 = vdwg.mxu0
        %2497 = vmatpush.msra.mxu0 %v2403
        %2498 = vmatpush.msra.mxu0 %v2399
        %2499 = vmatpush.msra.mxu0 %v2395
        %2500 = vmatpush.msra.mxu0 %v2391
        %2501 = vmatpush.msra.mxu0 %v2387
        %2502 = vmatpush.msra.mxu0 %v2383
        %2503 = vmatpush.msra.mxu0 %v2379
        %2504 = vmatpush.msra.mxu0 %v2375
        %2505 = vmatpush.msra.mxu0 %v2371
        %2506 = vmatpush.msra.mxu0 %v2367
        %2507 = vmatpush.msra.mxu0 %v2363
        %2508 = vmatpush.msra.mxu0 %v2359
        %2509 = vmatpush.msra.mxu0 %v2355
        %2510 = vmatpush.msra.mxu0 %v2351
        %2511 = vmatpush.msra.mxu0 %v2347
        %2512 = vmatpush.msra.mxu0 %v2343
        %2513 = vmatmul.f32.gmra.mxu0 %v2338
        %v2514 = vpop.f32.mrf.mxu0
        %v2515 = vadd.f32 0.0, %v2514
        %2516 = vdwg.mxu0
        %2517 = vmatpush.msra.mxu0 0.0
        %2518 = vmatpush.msra.mxu0 0.0
        %2519 = vmatpush.msra.mxu0 0.0
        %2520 = vmatpush.msra.mxu0 0.0
        %2521 = vmatpush.msra.mxu0 0.0
        %2522 = vmatpush.msra.mxu0 0.0
        %2523 = vmatpush.msra.mxu0 0.0
        %2524 = vmatpush.msra.mxu0 0.0
        %2525 = vmatpush.msra.mxu0 0.0
        %2526 = vmatpush.msra.mxu0 0.0
        %2527 = vmatpush.msra.mxu0 0.0
        %2528 = vmatpush.msra.mxu0 0.0
        %2529 = vmatpush.msra.mxu0 0.0
        %2530 = vmatpush.msra.mxu0 0.0
        %2531 = vmatpush.msra.mxu0 %v2411
        %2532 = vmatpush.msra.mxu0 %v2407
        %2533 = vmatmul.f32.gmra.mxu0 %v2415
        %v2534 = vpop.f32.mrf.mxu0
        %v2535 = vadd.f32 %v2515, %v2534
        %2536 = vdwg.mxu0
        %2537 = vmatpush.msra.mxu0 %v2404
        %2538 = vmatpush.msra.mxu0 %v2400
        %2539 = vmatpush.msra.mxu0 %v2396
        %2540 = vmatpush.msra.mxu0 %v2392
        %2541 = vmatpush.msra.mxu0 %v2388
        %2542 = vmatpush.msra.mxu0 %v2384
        %2543 = vmatpush.msra.mxu0 %v2380
        %2544 = vmatpush.msra.mxu0 %v2376
        %2545 = vmatpush.msra.mxu0 %v2372
        %2546 = vmatpush.msra.mxu0 %v2368
        %2547 = vmatpush.msra.mxu0 %v2364
        %2548 = vmatpush.msra.mxu0 %v2360
        %2549 = vmatpush.msra.mxu0 %v2356
        %2550 = vmatpush.msra.mxu0 %v2352
        %2551 = vmatpush.msra.mxu0 %v2348
        %2552 = vmatpush.msra.mxu0 %v2344
        %2553 = vmatmul.f32.gmra.mxu0 %v2338
        %v2554 = vpop.f32.mrf.mxu0
        %v2555 = vadd.f32 0.0, %v2554
        %2556 = vdwg.mxu0
        %2557 = vmatpush.msra.mxu0 0.0
        %2558 = vmatpush.msra.mxu0 0.0
        %2559 = vmatpush.msra.mxu0 0.0
        %2560 = vmatpush.msra.mxu0 0.0
        %2561 = vmatpush.msra.mxu0 0.0
        %2562 = vmatpush.msra.mxu0 0.0
        %2563 = vmatpush.msra.mxu0 0.0
        %2564 = vmatpush.msra.mxu0 0.0
        %2565 = vmatpush.msra.mxu0 0.0
        %2566 = vmatpush.msra.mxu0 0.0
        %2567 = vmatpush.msra.mxu0 0.0
        %2568 = vmatpush.msra.mxu0 0.0
        %2569 = vmatpush.msra.mxu0 0.0
        %2570 = vmatpush.msra.mxu0 0.0
        %2571 = vmatpush.msra.mxu0 %v2412
        %2572 = vmatpush.msra.mxu0 %v2408
        %2573 = vmatmul.f32.gmra.mxu0 %v2415
        %v2574 = vpop.f32.mrf.mxu0
        %v2575 = vadd.f32 %v2555, %v2574
        %2576 = vdwg.mxu0
        %v2578 = vsel %vm2413, %v2337, 0
        %2580 = vmatpush.msra.mxu0 %v2324
        %2581 = vmatpush.msra.mxu0 %v2320
        %2582 = vmatpush.msra.mxu0 %v2316
        %2583 = vmatpush.msra.mxu0 %v2312
        %2584 = vmatpush.msra.mxu0 %v2308
        %2585 = vmatpush.msra.mxu0 %v2304
        %2586 = vmatpush.msra.mxu0 %v2300
        %2587 = vmatpush.msra.mxu0 %v2296
        %2588 = vmatpush.msra.mxu0 %v2292
        %2589 = vmatpush.msra.mxu0 %v2288
        %2590 = vmatpush.msra.mxu0 %v2284
        %2591 = vmatpush.msra.mxu0 %v2280
        %2592 = vmatpush.msra.mxu0 %v2276
        %2593 = vmatpush.msra.mxu0 %v2272
        %2594 = vmatpush.msra.mxu0 %v2268
        %2595 = vmatpush.msra.mxu0 %v2264
        %2596 = vmatmul.f32.gmra.mxu0 %v2336
        %v2597 = vpop.f32.mrf.mxu0
        %v2598 = vadd.f32 %v2455, %v2597
        %2599 = vdwg.mxu0
        %2600 = vmatpush.msra.mxu0 0.0
        %2601 = vmatpush.msra.mxu0 0.0
        %2602 = vmatpush.msra.mxu0 0.0
        %2603 = vmatpush.msra.mxu0 0.0
        %2604 = vmatpush.msra.mxu0 0.0
        %2605 = vmatpush.msra.mxu0 0.0
        %2606 = vmatpush.msra.mxu0 0.0
        %2607 = vmatpush.msra.mxu0 0.0
        %2608 = vmatpush.msra.mxu0 0.0
        %2609 = vmatpush.msra.mxu0 0.0
        %2610 = vmatpush.msra.mxu0 0.0
        %2611 = vmatpush.msra.mxu0 0.0
        %2612 = vmatpush.msra.mxu0 0.0
        %2613 = vmatpush.msra.mxu0 0.0
        %2614 = vmatpush.msra.mxu0 %v2332
        %2615 = vmatpush.msra.mxu0 %v2328
        %2616 = vmatmul.f32.gmra.mxu0 %v2578
        %v2617 = vpop.f32.mrf.mxu0
        %v2618 = vadd.f32 %v2598, %v2617
        %2619 = vdwg.mxu0
        %2620 = vmatpush.msra.mxu0 %v2325
        %2621 = vmatpush.msra.mxu0 %v2321
        %2622 = vmatpush.msra.mxu0 %v2317
        %2623 = vmatpush.msra.mxu0 %v2313
        %2624 = vmatpush.msra.mxu0 %v2309
        %2625 = vmatpush.msra.mxu0 %v2305
        %2626 = vmatpush.msra.mxu0 %v2301
        %2627 = vmatpush.msra.mxu0 %v2297
        %2628 = vmatpush.msra.mxu0 %v2293
        %2629 = vmatpush.msra.mxu0 %v2289
        %2630 = vmatpush.msra.mxu0 %v2285
        %2631 = vmatpush.msra.mxu0 %v2281
        %2632 = vmatpush.msra.mxu0 %v2277
        %2633 = vmatpush.msra.mxu0 %v2273
        %2634 = vmatpush.msra.mxu0 %v2269
        %2635 = vmatpush.msra.mxu0 %v2265
        %2636 = vmatmul.f32.gmra.mxu0 %v2336
        %v2637 = vpop.f32.mrf.mxu0
        %v2638 = vadd.f32 %v2495, %v2637
        %2639 = vdwg.mxu0
        %2640 = vmatpush.msra.mxu0 0.0
        %2641 = vmatpush.msra.mxu0 0.0
        %2642 = vmatpush.msra.mxu0 0.0
        %2643 = vmatpush.msra.mxu0 0.0
        %2644 = vmatpush.msra.mxu0 0.0
        %2645 = vmatpush.msra.mxu0 0.0
        %2646 = vmatpush.msra.mxu0 0.0
        %2647 = vmatpush.msra.mxu0 0.0
        %2648 = vmatpush.msra.mxu0 0.0
        %2649 = vmatpush.msra.mxu0 0.0
        %2650 = vmatpush.msra.mxu0 0.0
        %2651 = vmatpush.msra.mxu0 0.0
        %2652 = vmatpush.msra.mxu0 0.0
        %2653 = vmatpush.msra.mxu0 0.0
        %2654 = vmatpush.msra.mxu0 %v2333
        %2655 = vmatpush.msra.mxu0 %v2329
        %2656 = vmatmul.f32.gmra.mxu0 %v2578
        %v2657 = vpop.f32.mrf.mxu0
        %v2658 = vadd.f32 %v2638, %v2657
        %2659 = vdwg.mxu0
        %2660 = vmatpush.msra.mxu0 %v2326
        %2661 = vmatpush.msra.mxu0 %v2322
        %2662 = vmatpush.msra.mxu0 %v2318
        %2663 = vmatpush.msra.mxu0 %v2314
        %2664 = vmatpush.msra.mxu0 %v2310
        %2665 = vmatpush.msra.mxu0 %v2306
        %2666 = vmatpush.msra.mxu0 %v2302
        %2667 = vmatpush.msra.mxu0 %v2298
        %2668 = vmatpush.msra.mxu0 %v2294
        %2669 = vmatpush.msra.mxu0 %v2290
        %2670 = vmatpush.msra.mxu0 %v2286
        %2671 = vmatpush.msra.mxu0 %v2282
        %2672 = vmatpush.msra.mxu0 %v2278
        %2673 = vmatpush.msra.mxu0 %v2274
        %2674 = vmatpush.msra.mxu0 %v2270
        %2675 = vmatpush.msra.mxu0 %v2266
        %2676 = vmatmul.f32.gmra.mxu0 %v2336
        %v2677 = vpop.f32.mrf.mxu0
        %v2678 = vadd.f32 %v2535, %v2677
        %2679 = vdwg.mxu0
        %2680 = vmatpush.msra.mxu0 0.0
        %2681 = vmatpush.msra.mxu0 0.0
        %2682 = vmatpush.msra.mxu0 0.0
        %2683 = vmatpush.msra.mxu0 0.0
        %2684 = vmatpush.msra.mxu0 0.0
        %2685 = vmatpush.msra.mxu0 0.0
        %2686 = vmatpush.msra.mxu0 0.0
        %2687 = vmatpush.msra.mxu0 0.0
        %2688 = vmatpush.msra.mxu0 0.0
        %2689 = vmatpush.msra.mxu0 0.0
        %2690 = vmatpush.msra.mxu0 0.0
        %2691 = vmatpush.msra.mxu0 0.0
        %2692 = vmatpush.msra.mxu0 0.0
        %2693 = vmatpush.msra.mxu0 0.0
        %2694 = vmatpush.msra.mxu0 %v2334
        %2695 = vmatpush.msra.mxu0 %v2330
        %2696 = vmatmul.f32.gmra.mxu0 %v2578
        %v2697 = vpop.f32.mrf.mxu0
        %v2698 = vadd.f32 %v2678, %v2697
        %2699 = vdwg.mxu0
        %2700 = vmatpush.msra.mxu0 %v2327
        %2701 = vmatpush.msra.mxu0 %v2323
        %2702 = vmatpush.msra.mxu0 %v2319
        %2703 = vmatpush.msra.mxu0 %v2315
        %2704 = vmatpush.msra.mxu0 %v2311
        %2705 = vmatpush.msra.mxu0 %v2307
        %2706 = vmatpush.msra.mxu0 %v2303
        %2707 = vmatpush.msra.mxu0 %v2299
        %2708 = vmatpush.msra.mxu0 %v2295
        %2709 = vmatpush.msra.mxu0 %v2291
        %2710 = vmatpush.msra.mxu0 %v2287
        %2711 = vmatpush.msra.mxu0 %v2283
        %2712 = vmatpush.msra.mxu0 %v2279
        %2713 = vmatpush.msra.mxu0 %v2275
        %2714 = vmatpush.msra.mxu0 %v2271
        %2715 = vmatpush.msra.mxu0 %v2267
        %2716 = vmatmul.f32.gmra.mxu0 %v2336
        %v2717 = vpop.f32.mrf.mxu0
        %v2718 = vadd.f32 %v2575, %v2717
        %2719 = vdwg.mxu0
        %2720 = vmatpush.msra.mxu0 0.0
        %2721 = vmatpush.msra.mxu0 0.0
        %2722 = vmatpush.msra.mxu0 0.0
        %2723 = vmatpush.msra.mxu0 0.0
        %2724 = vmatpush.msra.mxu0 0.0
        %2725 = vmatpush.msra.mxu0 0.0
        %2726 = vmatpush.msra.mxu0 0.0
        %2727 = vmatpush.msra.mxu0 0.0
        %2728 = vmatpush.msra.mxu0 0.0
        %2729 = vmatpush.msra.mxu0 0.0
        %2730 = vmatpush.msra.mxu0 0.0
        %2731 = vmatpush.msra.mxu0 0.0
        %2732 = vmatpush.msra.mxu0 0.0
        %2733 = vmatpush.msra.mxu0 0.0
        %2734 = vmatpush.msra.mxu0 %v2335
        %2735 = vmatpush.msra.mxu0 %v2331
        %2736 = vmatmul.f32.gmra.mxu0 %v2578
        %v2737 = vpop.f32.mrf.mxu0
        %v2738 = vadd.f32 %v2718, %v2737
        %2739 = vdwg.mxu0
        %v2740 = vld [vmem:[#allocation2] sm:$0x1e]
        %v2741 = vld [vmem:[#allocation2 + $0x8] sm:$0x1e]
        %v2744 = vrot.slane %v2740, 1
        %v2745 = vrot.slane %v2741, 1
        %v2747 = vsel %vm2413, %v2745, 0
        %2749 = vmatpush.msra.mxu0 %v2401
        %2750 = vmatpush.msra.mxu0 %v2397
        %2751 = vmatpush.msra.mxu0 %v2393
        %2752 = vmatpush.msra.mxu0 %v2389
        %2753 = vmatpush.msra.mxu0 %v2385
        %2754 = vmatpush.msra.mxu0 %v2381
        %2755 = vmatpush.msra.mxu0 %v2377
        %2756 = vmatpush.msra.mxu0 %v2373
        %2757 = vmatpush.msra.mxu0 %v2369
        %2758 = vmatpush.msra.mxu0 %v2365
        %2759 = vmatpush.msra.mxu0 %v2361
        %2760 = vmatpush.msra.mxu0 %v2357
        %2761 = vmatpush.msra.mxu0 %v2353
        %2762 = vmatpush.msra.mxu0 %v2349
        %2763 = vmatpush.msra.mxu0 %v2345
        %2764 = vmatpush.msra.mxu0 %v2341
        %2765 = vmatmul.f32.gmra.mxu0 %v2744
        %v2766 = vpop.f32.mrf.mxu0
        %v2767 = vadd.f32 0.0, %v2766
        %2768 = vdwg.mxu0
        %2769 = vmatpush.msra.mxu0 0.0
        %2770 = vmatpush.msra.mxu0 0.0
        %2771 = vmatpush.msra.mxu0 0.0
        %2772 = vmatpush.msra.mxu0 0.0
        %2773 = vmatpush.msra.mxu0 0.0
        %2774 = vmatpush.msra.mxu0 0.0
        %2775 = vmatpush.msra.mxu0 0.0
        %2776 = vmatpush.msra.mxu0 0.0
        %2777 = vmatpush.msra.mxu0 0.0
        %2778 = vmatpush.msra.mxu0 0.0
        %2779 = vmatpush.msra.mxu0 0.0
        %2780 = vmatpush.msra.mxu0 0.0
        %2781 = vmatpush.msra.mxu0 0.0
        %2782 = vmatpush.msra.mxu0 0.0
        %2783 = vmatpush.msra.mxu0 %v2409
        %2784 = vmatpush.msra.mxu0 %v2405
        %2785 = vmatmul.f32.gmra.mxu0 %v2747
        %v2786 = vpop.f32.mrf.mxu0
        %v2787 = vadd.f32 %v2767, %v2786
        %2788 = vdwg.mxu0
        %2789 = vmatpush.msra.mxu0 %v2402
        %2790 = vmatpush.msra.mxu0 %v2398
        %2791 = vmatpush.msra.mxu0 %v2394
        %2792 = vmatpush.msra.mxu0 %v2390
        %2793 = vmatpush.msra.mxu0 %v2386
        %2794 = vmatpush.msra.mxu0 %v2382
        %2795 = vmatpush.msra.mxu0 %v2378
        %2796 = vmatpush.msra.mxu0 %v2374
        %2797 = vmatpush.msra.mxu0 %v2370
        %2798 = vmatpush.msra.mxu0 %v2366
        %2799 = vmatpush.msra.mxu0 %v2362
        %2800 = vmatpush.msra.mxu0 %v2358
        %2801 = vmatpush.msra.mxu0 %v2354
        %2802 = vmatpush.msra.mxu0 %v2350
        %2803 = vmatpush.msra.mxu0 %v2346
        %2804 = vmatpush.msra.mxu0 %v2342
        %2805 = vmatmul.f32.gmra.mxu0 %v2744
        %v2806 = vpop.f32.mrf.mxu0
        %v2807 = vadd.f32 0.0, %v2806
        %2808 = vdwg.mxu0
        %2809 = vmatpush.msra.mxu0 0.0
        %2810 = vmatpush.msra.mxu0 0.0
        %2811 = vmatpush.msra.mxu0 0.0
        %2812 = vmatpush.msra.mxu0 0.0
        %2813 = vmatpush.msra.mxu0 0.0
        %2814 = vmatpush.msra.mxu0 0.0
        %2815 = vmatpush.msra.mxu0 0.0
        %2816 = vmatpush.msra.mxu0 0.0
        %2817 = vmatpush.msra.mxu0 0.0
        %2818 = vmatpush.msra.mxu0 0.0
        %2819 = vmatpush.msra.mxu0 0.0
        %2820 = vmatpush.msra.mxu0 0.0
        %2821 = vmatpush.msra.mxu0 0.0
        %2822 = vmatpush.msra.mxu0 0.0
        %2823 = vmatpush.msra.mxu0 %v2410
        %2824 = vmatpush.msra.mxu0 %v2406
        %2825 = vmatmul.f32.gmra.mxu0 %v2747
        %v2826 = vpop.f32.mrf.mxu0
        %v2827 = vadd.f32 %v2807, %v2826
        %2828 = vdwg.mxu0
        %2829 = vmatpush.msra.mxu0 %v2403
        %2830 = vmatpush.msra.mxu0 %v2399
        %2831 = vmatpush.msra.mxu0 %v2395
        %2832 = vmatpush.msra.mxu0 %v2391
        %2833 = vmatpush.msra.mxu0 %v2387
        %2834 = vmatpush.msra.mxu0 %v2383
        %2835 = vmatpush.msra.mxu0 %v2379
        %2836 = vmatpush.msra.mxu0 %v2375
        %2837 = vmatpush.msra.mxu0 %v2371
        %2838 = vmatpush.msra.mxu0 %v2367
        %2839 = vmatpush.msra.mxu0 %v2363
        %2840 = vmatpush.msra.mxu0 %v2359
        %2841 = vmatpush.msra.mxu0 %v2355
        %2842 = vmatpush.msra.mxu0 %v2351
        %2843 = vmatpush.msra.mxu0 %v2347
        %2844 = vmatpush.msra.mxu0 %v2343
        %2845 = vmatmul.f32.gmra.mxu0 %v2744
        %v2846 = vpop.f32.mrf.mxu0
        %v2847 = vadd.f32 0.0, %v2846
        %2848 = vdwg.mxu0
        %2849 = vmatpush.msra.mxu0 0.0
        %2850 = vmatpush.msra.mxu0 0.0
        %2851 = vmatpush.msra.mxu0 0.0
        %2852 = vmatpush.msra.mxu0 0.0
        %2853 = vmatpush.msra.mxu0 0.0
        %2854 = vmatpush.msra.mxu0 0.0
        %2855 = vmatpush.msra.mxu0 0.0
        %2856 = vmatpush.msra.mxu0 0.0
        %2857 = vmatpush.msra.mxu0 0.0
        %2858 = vmatpush.msra.mxu0 0.0
        %2859 = vmatpush.msra.mxu0 0.0
        %2860 = vmatpush.msra.mxu0 0.0
        %2861 = vmatpush.msra.mxu0 0.0
        %2862 = vmatpush.msra.mxu0 0.0
        %2863 = vmatpush.msra.mxu0 %v2411
        %2864 = vmatpush.msra.mxu0 %v2407
        %2865 = vmatmul.f32.gmra.mxu0 %v2747
        %v2866 = vpop.f32.mrf.mxu0
        %v2867 = vadd.f32 %v2847, %v2866
        %2868 = vdwg.mxu0
        %2869 = vmatpush.msra.mxu0 %v2404
        %2870 = vmatpush.msra.mxu0 %v2400
        %2871 = vmatpush.msra.mxu0 %v2396
        %2872 = vmatpush.msra.mxu0 %v2392
        %2873 = vmatpush.msra.mxu0 %v2388
        %2874 = vmatpush.msra.mxu0 %v2384
        %2875 = vmatpush.msra.mxu0 %v2380
        %2876 = vmatpush.msra.mxu0 %v2376
        %2877 = vmatpush.msra.mxu0 %v2372
        %2878 = vmatpush.msra.mxu0 %v2368
        %2879 = vmatpush.msra.mxu0 %v2364
        %2880 = vmatpush.msra.mxu0 %v2360
        %2881 = vmatpush.msra.mxu0 %v2356
        %2882 = vmatpush.msra.mxu0 %v2352
        %2883 = vmatpush.msra.mxu0 %v2348
        %2884 = vmatpush.msra.mxu0 %v2344
        %2885 = vmatmul.f32.gmra.mxu0 %v2744
        %v2886 = vpop.f32.mrf.mxu0
        %v2887 = vadd.f32 0.0, %v2886
        %2888 = vdwg.mxu0
        %2889 = vmatpush.msra.mxu0 0.0
        %2890 = vmatpush.msra.mxu0 0.0
        %2891 = vmatpush.msra.mxu0 0.0
        %2892 = vmatpush.msra.mxu0 0.0
        %2893 = vmatpush.msra.mxu0 0.0
        %2894 = vmatpush.msra.mxu0 0.0
        %2895 = vmatpush.msra.mxu0 0.0
        %2896 = vmatpush.msra.mxu0 0.0
        %2897 = vmatpush.msra.mxu0 0.0
        %2898 = vmatpush.msra.mxu0 0.0
        %2899 = vmatpush.msra.mxu0 0.0
        %2900 = vmatpush.msra.mxu0 0.0
        %2901 = vmatpush.msra.mxu0 0.0
        %2902 = vmatpush.msra.mxu0 0.0
        %2903 = vmatpush.msra.mxu0 %v2412
        %2904 = vmatpush.msra.mxu0 %v2408
        %2905 = vmatmul.f32.gmra.mxu0 %v2747
        %v2906 = vpop.f32.mrf.mxu0
        %v2907 = vadd.f32 %v2887, %v2906
        %2908 = vdwg.mxu0
        %2909 = vmatpush.msra.mxu0 %v2324
        %2910 = vmatpush.msra.mxu0 %v2320
        %2911 = vmatpush.msra.mxu0 %v2316
        %2912 = vmatpush.msra.mxu0 %v2312
        %2913 = vmatpush.msra.mxu0 %v2308
        %2914 = vmatpush.msra.mxu0 %v2304
        %2915 = vmatpush.msra.mxu0 %v2300
        %2916 = vmatpush.msra.mxu0 %v2296
        %2917 = vmatpush.msra.mxu0 %v2292
        %2918 = vmatpush.msra.mxu0 %v2288
        %2919 = vmatpush.msra.mxu0 %v2284
        %2920 = vmatpush.msra.mxu0 %v2280
        %2921 = vmatpush.msra.mxu0 %v2276
        %2922 = vmatpush.msra.mxu0 %v2272
        %2923 = vmatpush.msra.mxu0 %v2268
        %2924 = vmatpush.msra.mxu0 %v2264
        %2925 = vmatmul.f32.gmra.mxu0 %v2338
        %v2926 = vpop.f32.mrf.mxu0
        %v2927 = vadd.f32 %v2787, %v2926
        %2928 = vdwg.mxu0
        %2929 = vmatpush.msra.mxu0 0.0
        %2930 = vmatpush.msra.mxu0 0.0
        %2931 = vmatpush.msra.mxu0 0.0
        %2932 = vmatpush.msra.mxu0 0.0
        %2933 = vmatpush.msra.mxu0 0.0
        %2934 = vmatpush.msra.mxu0 0.0
        %2935 = vmatpush.msra.mxu0 0.0
        %2936 = vmatpush.msra.mxu0 0.0
        %2937 = vmatpush.msra.mxu0 0.0
        %2938 = vmatpush.msra.mxu0 0.0
        %2939 = vmatpush.msra.mxu0 0.0
        %2940 = vmatpush.msra.mxu0 0.0
        %2941 = vmatpush.msra.mxu0 0.0
        %2942 = vmatpush.msra.mxu0 0.0
        %2943 = vmatpush.msra.mxu0 %v2332
        %2944 = vmatpush.msra.mxu0 %v2328
        %2945 = vmatmul.f32.gmra.mxu0 %v2415
        %v2946 = vpop.f32.mrf.mxu0
        %v2947 = vadd.f32 %v2927, %v2946
        %2948 = vdwg.mxu0
        %2949 = vmatpush.msra.mxu0 %v2325
        %2950 = vmatpush.msra.mxu0 %v2321
        %2951 = vmatpush.msra.mxu0 %v2317
        %2952 = vmatpush.msra.mxu0 %v2313
        %2953 = vmatpush.msra.mxu0 %v2309
        %2954 = vmatpush.msra.mxu0 %v2305
        %2955 = vmatpush.msra.mxu0 %v2301
        %2956 = vmatpush.msra.mxu0 %v2297
        %2957 = vmatpush.msra.mxu0 %v2293
        %2958 = vmatpush.msra.mxu0 %v2289
        %2959 = vmatpush.msra.mxu0 %v2285
        %2960 = vmatpush.msra.mxu0 %v2281
        %2961 = vmatpush.msra.mxu0 %v2277
        %2962 = vmatpush.msra.mxu0 %v2273
        %2963 = vmatpush.msra.mxu0 %v2269
        %2964 = vmatpush.msra.mxu0 %v2265
        %2965 = vmatmul.f32.gmra.mxu0 %v2338
        %v2966 = vpop.f32.mrf.mxu0
        %v2967 = vadd.f32 %v2827, %v2966
        %2968 = vdwg.mxu0
        %2969 = vmatpush.msra.mxu0 0.0
        %2970 = vmatpush.msra.mxu0 0.0
        %2971 = vmatpush.msra.mxu0 0.0
        %2972 = vmatpush.msra.mxu0 0.0
        %2973 = vmatpush.msra.mxu0 0.0
        %2974 = vmatpush.msra.mxu0 0.0
        %2975 = vmatpush.msra.mxu0 0.0
        %2976 = vmatpush.msra.mxu0 0.0
        %2977 = vmatpush.msra.mxu0 0.0
        %2978 = vmatpush.msra.mxu0 0.0
        %2979 = vmatpush.msra.mxu0 0.0
        %2980 = vmatpush.msra.mxu0 0.0
        %2981 = vmatpush.msra.mxu0 0.0
        %2982 = vmatpush.msra.mxu0 0.0
        %2983 = vmatpush.msra.mxu0 %v2333
        %2984 = vmatpush.msra.mxu0 %v2329
        %2985 = vmatmul.f32.gmra.mxu0 %v2415
        %v2986 = vpop.f32.mrf.mxu0
        %v2987 = vadd.f32 %v2967, %v2986
        %2988 = vdwg.mxu0
        %2989 = vmatpush.msra.mxu0 %v2326
        %2990 = vmatpush.msra.mxu0 %v2322
        %2991 = vmatpush.msra.mxu0 %v2318
        %2992 = vmatpush.msra.mxu0 %v2314
        %2993 = vmatpush.msra.mxu0 %v2310
        %2994 = vmatpush.msra.mxu0 %v2306
        %2995 = vmatpush.msra.mxu0 %v2302
        %2996 = vmatpush.msra.mxu0 %v2298
        %2997 = vmatpush.msra.mxu0 %v2294
        %2998 = vmatpush.msra.mxu0 %v2290
        %2999 = vmatpush.msra.mxu0 %v2286
        %3000 = vmatpush.msra.mxu0 %v2282
        %3001 = vmatpush.msra.mxu0 %v2278
        %3002 = vmatpush.msra.mxu0 %v2274
        %3003 = vmatpush.msra.mxu0 %v2270
        %3004 = vmatpush.msra.mxu0 %v2266
        %3005 = vmatmul.f32.gmra.mxu0 %v2338
        %v3006 = vpop.f32.mrf.mxu0
        %v3007 = vadd.f32 %v2867, %v3006
        %3008 = vdwg.mxu0
        %3009 = vmatpush.msra.mxu0 0.0
        %3010 = vmatpush.msra.mxu0 0.0
        %3011 = vmatpush.msra.mxu0 0.0
        %3012 = vmatpush.msra.mxu0 0.0
        %3013 = vmatpush.msra.mxu0 0.0
        %3014 = vmatpush.msra.mxu0 0.0
        %3015 = vmatpush.msra.mxu0 0.0
        %3016 = vmatpush.msra.mxu0 0.0
        %3017 = vmatpush.msra.mxu0 0.0
        %3018 = vmatpush.msra.mxu0 0.0
        %3019 = vmatpush.msra.mxu0 0.0
        %3020 = vmatpush.msra.mxu0 0.0
        %3021 = vmatpush.msra.mxu0 0.0
        %3022 = vmatpush.msra.mxu0 0.0
        %3023 = vmatpush.msra.mxu0 %v2334
        %3024 = vmatpush.msra.mxu0 %v2330
        %3025 = vmatmul.f32.gmra.mxu0 %v2415
        %v3026 = vpop.f32.mrf.mxu0
        %v3027 = vadd.f32 %v3007, %v3026
        %3028 = vdwg.mxu0
        %3029 = vmatpush.msra.mxu0 %v2327
        %3030 = vmatpush.msra.mxu0 %v2323
        %3031 = vmatpush.msra.mxu0 %v2319
        %3032 = vmatpush.msra.mxu0 %v2315
        %3033 = vmatpush.msra.mxu0 %v2311
        %3034 = vmatpush.msra.mxu0 %v2307
        %3035 = vmatpush.msra.mxu0 %v2303
        %3036 = vmatpush.msra.mxu0 %v2299
        %3037 = vmatpush.msra.mxu0 %v2295
        %3038 = vmatpush.msra.mxu0 %v2291
        %3039 = vmatpush.msra.mxu0 %v2287
        %3040 = vmatpush.msra.mxu0 %v2283
        %3041 = vmatpush.msra.mxu0 %v2279
        %3042 = vmatpush.msra.mxu0 %v2275
        %3043 = vmatpush.msra.mxu0 %v2271
        %3044 = vmatpush.msra.mxu0 %v2267
        %3045 = vmatmul.f32.gmra.mxu0 %v2338
        %v3046 = vpop.f32.mrf.mxu0
        %v3047 = vadd.f32 %v2907, %v3046
        %3048 = vdwg.mxu0
        %3049 = vmatpush.msra.mxu0 0.0
        %3050 = vmatpush.msra.mxu0 0.0
        %3051 = vmatpush.msra.mxu0 0.0
        %3052 = vmatpush.msra.mxu0 0.0
        %3053 = vmatpush.msra.mxu0 0.0
        %3054 = vmatpush.msra.mxu0 0.0
        %3055 = vmatpush.msra.mxu0 0.0
        %3056 = vmatpush.msra.mxu0 0.0
        %3057 = vmatpush.msra.mxu0 0.0
        %3058 = vmatpush.msra.mxu0 0.0
        %3059 = vmatpush.msra.mxu0 0.0
        %3060 = vmatpush.msra.mxu0 0.0
        %3061 = vmatpush.msra.mxu0 0.0
        %3062 = vmatpush.msra.mxu0 0.0
        %3063 = vmatpush.msra.mxu0 %v2335
        %3064 = vmatpush.msra.mxu0 %v2331
        %3065 = vmatmul.f32.gmra.mxu0 %v2415
        %v3066 = vpop.f32.mrf.mxu0
        %v3067 = vadd.f32 %v3047, %v3066
        %3068 = vdwg.mxu0
        %s3069 = scalar_lea.vmem [#allocation10], 1152
        %v3070 = vld [vmem:[%s3069] sm:$0xff]
        %v3071 = vld [vmem:[%s3069 + $0x8] sm:$0xff]
        %v3072 = vld [vmem:[%s3069 + $0x10] sm:$0xff]
        %v3073 = vld [vmem:[%s3069 + $0x18] sm:$0xff]
        %v3074 = vld [vmem:[%s3069 + $0x20] sm:$0xff]
        %v3075 = vld [vmem:[%s3069 + $0x28] sm:$0xff]
        %v3076 = vld [vmem:[%s3069 + $0x30] sm:$0xff]
        %v3077 = vld [vmem:[%s3069 + $0x38] sm:$0xff]
        %v3078 = vld [vmem:[%s3069 + $0x40] sm:$0xff]
        %v3079 = vld [vmem:[%s3069 + $0x48] sm:$0xff]
        %v3080 = vld [vmem:[%s3069 + $0x50] sm:$0xff]
        %v3081 = vld [vmem:[%s3069 + $0x58] sm:$0xff]
        %v3082 = vld [vmem:[%s3069 + $0x60] sm:$0xff]
        %v3083 = vld [vmem:[%s3069 + $0x68] sm:$0xff]
        %v3084 = vld [vmem:[%s3069 + $0x70] sm:$0xff]
        %v3085 = vld [vmem:[%s3069 + $0x78] sm:$0xff]
        %v3086 = vld [vmem:[%s3069 + $0x80] sm:$0xff]
        %v3087 = vld [vmem:[%s3069 + $0x88] sm:$0xff]
        %v3088 = vld [vmem:[%s3069 + $0x90] sm:$0xff]
        %v3089 = vld [vmem:[%s3069 + $0x98] sm:$0xff]
        %v3090 = vld [vmem:[%s3069 + $0xa0] sm:$0xff]
        %v3091 = vld [vmem:[%s3069 + $0xa8] sm:$0xff]
        %v3092 = vld [vmem:[%s3069 + $0xb0] sm:$0xff]
        %v3093 = vld [vmem:[%s3069 + $0xb8] sm:$0xff]
        %v3094 = vld [vmem:[%s3069 + $0xc0] sm:$0xff]
        %v3095 = vld [vmem:[%s3069 + $0xc8] sm:$0xff]
        %v3096 = vld [vmem:[%s3069 + $0xd0] sm:$0xff]
        %v3097 = vld [vmem:[%s3069 + $0xd8] sm:$0xff]
        %v3098 = vld [vmem:[%s3069 + $0xe0] sm:$0xff]
        %v3099 = vld [vmem:[%s3069 + $0xe8] sm:$0xff]
        %v3100 = vld [vmem:[%s3069 + $0xf0] sm:$0xff]
        %v3101 = vld [vmem:[%s3069 + $0xf8] sm:$0xff]
        %v3102 = vld [vmem:[%s3069 + $0x100] sm:$0xff]
        %v3103 = vld [vmem:[%s3069 + $0x108] sm:$0xff]
        %v3104 = vld [vmem:[%s3069 + $0x110] sm:$0xff]
        %v3105 = vld [vmem:[%s3069 + $0x118] sm:$0xff]
        %v3106 = vld [vmem:[%s3069 + $0x120] sm:$0xff]
        %v3107 = vld [vmem:[%s3069 + $0x128] sm:$0xff]
        %v3108 = vld [vmem:[%s3069 + $0x130] sm:$0xff]
        %v3109 = vld [vmem:[%s3069 + $0x138] sm:$0xff]
        %v3110 = vld [vmem:[%s3069 + $0x140] sm:$0xff]
        %v3111 = vld [vmem:[%s3069 + $0x148] sm:$0xff]
        %v3112 = vld [vmem:[%s3069 + $0x150] sm:$0xff]
        %v3113 = vld [vmem:[%s3069 + $0x158] sm:$0xff]
        %v3114 = vld [vmem:[%s3069 + $0x160] sm:$0xff]
        %v3115 = vld [vmem:[%s3069 + $0x168] sm:$0xff]
        %v3116 = vld [vmem:[%s3069 + $0x170] sm:$0xff]
        %v3117 = vld [vmem:[%s3069 + $0x178] sm:$0xff]
        %v3118 = vld [vmem:[%s3069 + $0x180] sm:$0xff]
        %v3119 = vld [vmem:[%s3069 + $0x188] sm:$0xff]
        %v3120 = vld [vmem:[%s3069 + $0x190] sm:$0xff]
        %v3121 = vld [vmem:[%s3069 + $0x198] sm:$0xff]
        %v3122 = vld [vmem:[%s3069 + $0x1a0] sm:$0xff]
        %v3123 = vld [vmem:[%s3069 + $0x1a8] sm:$0xff]
        %v3124 = vld [vmem:[%s3069 + $0x1b0] sm:$0xff]
        %v3125 = vld [vmem:[%s3069 + $0x1b8] sm:$0xff]
        %v3126 = vld [vmem:[%s3069 + $0x1c0] sm:$0xff]
        %v3127 = vld [vmem:[%s3069 + $0x1c8] sm:$0xff]
        %v3128 = vld [vmem:[%s3069 + $0x1d0] sm:$0xff]
        %v3129 = vld [vmem:[%s3069 + $0x1d8] sm:$0xff]
        %v3130 = vld [vmem:[%s3069 + $0x1e0] sm:$0xff]
        %v3131 = vld [vmem:[%s3069 + $0x1e8] sm:$0xff]
        %v3132 = vld [vmem:[%s3069 + $0x1f0] sm:$0xff]
        %v3133 = vld [vmem:[%s3069 + $0x1f8] sm:$0xff]
        %v3134 = vld [vmem:[%s3069 + $0x200] sm:$0xff]
        %v3135 = vld [vmem:[%s3069 + $0x208] sm:$0xff]
        %v3136 = vld [vmem:[%s3069 + $0x210] sm:$0xff]
        %v3137 = vld [vmem:[%s3069 + $0x218] sm:$0xff]
        %v3138 = vld [vmem:[%s3069 + $0x220] sm:$0xff]
        %v3139 = vld [vmem:[%s3069 + $0x228] sm:$0xff]
        %v3140 = vld [vmem:[%s3069 + $0x230] sm:$0xff]
        %v3141 = vld [vmem:[%s3069 + $0x238] sm:$0xff]
        %3142 = vmatpush.msra.mxu0 %v3130
        %3143 = vmatpush.msra.mxu0 %v3126
        %3144 = vmatpush.msra.mxu0 %v3122
        %3145 = vmatpush.msra.mxu0 %v3118
        %3146 = vmatpush.msra.mxu0 %v3114
        %3147 = vmatpush.msra.mxu0 %v3110
        %3148 = vmatpush.msra.mxu0 %v3106
        %3149 = vmatpush.msra.mxu0 %v3102
        %3150 = vmatpush.msra.mxu0 %v3098
        %3151 = vmatpush.msra.mxu0 %v3094
        %3152 = vmatpush.msra.mxu0 %v3090
        %3153 = vmatpush.msra.mxu0 %v3086
        %3154 = vmatpush.msra.mxu0 %v3082
        %3155 = vmatpush.msra.mxu0 %v3078
        %3156 = vmatpush.msra.mxu0 %v3074
        %3157 = vmatpush.msra.mxu0 %v3070
        %3158 = vmatmul.f32.gmra.mxu0 %v2744
        %v3159 = vpop.f32.mrf.mxu0
        %v3160 = vadd.f32 0.0, %v3159
        %3161 = vdwg.mxu0
        %3162 = vmatpush.msra.mxu0 0.0
        %3163 = vmatpush.msra.mxu0 0.0
        %3164 = vmatpush.msra.mxu0 0.0
        %3165 = vmatpush.msra.mxu0 0.0
        %3166 = vmatpush.msra.mxu0 0.0
        %3167 = vmatpush.msra.mxu0 0.0
        %3168 = vmatpush.msra.mxu0 0.0
        %3169 = vmatpush.msra.mxu0 0.0
        %3170 = vmatpush.msra.mxu0 0.0
        %3171 = vmatpush.msra.mxu0 0.0
        %3172 = vmatpush.msra.mxu0 0.0
        %3173 = vmatpush.msra.mxu0 0.0
        %3174 = vmatpush.msra.mxu0 0.0
        %3175 = vmatpush.msra.mxu0 0.0
        %3176 = vmatpush.msra.mxu0 %v3138
        %3177 = vmatpush.msra.mxu0 %v3134
        %3178 = vmatmul.f32.gmra.mxu0 %v2747
        %v3179 = vpop.f32.mrf.mxu0
        %v3180 = vadd.f32 %v3160, %v3179
        %3181 = vdwg.mxu0
        %3182 = vmatpush.msra.mxu0 %v3131
        %3183 = vmatpush.msra.mxu0 %v3127
        %3184 = vmatpush.msra.mxu0 %v3123
        %3185 = vmatpush.msra.mxu0 %v3119
        %3186 = vmatpush.msra.mxu0 %v3115
        %3187 = vmatpush.msra.mxu0 %v3111
        %3188 = vmatpush.msra.mxu0 %v3107
        %3189 = vmatpush.msra.mxu0 %v3103
        %3190 = vmatpush.msra.mxu0 %v3099
        %3191 = vmatpush.msra.mxu0 %v3095
        %3192 = vmatpush.msra.mxu0 %v3091
        %3193 = vmatpush.msra.mxu0 %v3087
        %3194 = vmatpush.msra.mxu0 %v3083
        %3195 = vmatpush.msra.mxu0 %v3079
        %3196 = vmatpush.msra.mxu0 %v3075
        %3197 = vmatpush.msra.mxu0 %v3071
        %3198 = vmatmul.f32.gmra.mxu0 %v2744
        %v3199 = vpop.f32.mrf.mxu0
        %v3200 = vadd.f32 0.0, %v3199
        %3201 = vdwg.mxu0
        %3202 = vmatpush.msra.mxu0 0.0
        %3203 = vmatpush.msra.mxu0 0.0
        %3204 = vmatpush.msra.mxu0 0.0
        %3205 = vmatpush.msra.mxu0 0.0
        %3206 = vmatpush.msra.mxu0 0.0
        %3207 = vmatpush.msra.mxu0 0.0
        %3208 = vmatpush.msra.mxu0 0.0
        %3209 = vmatpush.msra.mxu0 0.0
        %3210 = vmatpush.msra.mxu0 0.0
        %3211 = vmatpush.msra.mxu0 0.0
        %3212 = vmatpush.msra.mxu0 0.0
        %3213 = vmatpush.msra.mxu0 0.0
        %3214 = vmatpush.msra.mxu0 0.0
        %3215 = vmatpush.msra.mxu0 0.0
        %3216 = vmatpush.msra.mxu0 %v3139
        %3217 = vmatpush.msra.mxu0 %v3135
        %3218 = vmatmul.f32.gmra.mxu0 %v2747
        %v3219 = vpop.f32.mrf.mxu0
        %v3220 = vadd.f32 %v3200, %v3219
        %3221 = vdwg.mxu0
        %3222 = vmatpush.msra.mxu0 %v3132
        %3223 = vmatpush.msra.mxu0 %v3128
        %3224 = vmatpush.msra.mxu0 %v3124
        %3225 = vmatpush.msra.mxu0 %v3120
        %3226 = vmatpush.msra.mxu0 %v3116
        %3227 = vmatpush.msra.mxu0 %v3112
        %3228 = vmatpush.msra.mxu0 %v3108
        %3229 = vmatpush.msra.mxu0 %v3104
        %3230 = vmatpush.msra.mxu0 %v3100
        %3231 = vmatpush.msra.mxu0 %v3096
        %3232 = vmatpush.msra.mxu0 %v3092
        %3233 = vmatpush.msra.mxu0 %v3088
        %3234 = vmatpush.msra.mxu0 %v3084
        %3235 = vmatpush.msra.mxu0 %v3080
        %3236 = vmatpush.msra.mxu0 %v3076
        %3237 = vmatpush.msra.mxu0 %v3072
        %3238 = vmatmul.f32.gmra.mxu0 %v2744
        %v3239 = vpop.f32.mrf.mxu0
        %v3240 = vadd.f32 0.0, %v3239
        %3241 = vdwg.mxu0
        %3242 = vmatpush.msra.mxu0 0.0
        %3243 = vmatpush.msra.mxu0 0.0
        %3244 = vmatpush.msra.mxu0 0.0
        %3245 = vmatpush.msra.mxu0 0.0
        %3246 = vmatpush.msra.mxu0 0.0
        %3247 = vmatpush.msra.mxu0 0.0
        %3248 = vmatpush.msra.mxu0 0.0
        %3249 = vmatpush.msra.mxu0 0.0
        %3250 = vmatpush.msra.mxu0 0.0
        %3251 = vmatpush.msra.mxu0 0.0
        %3252 = vmatpush.msra.mxu0 0.0
        %3253 = vmatpush.msra.mxu0 0.0
        %3254 = vmatpush.msra.mxu0 0.0
        %3255 = vmatpush.msra.mxu0 0.0
        %3256 = vmatpush.msra.mxu0 %v3140
        %3257 = vmatpush.msra.mxu0 %v3136
        %3258 = vmatmul.f32.gmra.mxu0 %v2747
        %v3259 = vpop.f32.mrf.mxu0
        %v3260 = vadd.f32 %v3240, %v3259
        %3261 = vdwg.mxu0
        %3262 = vmatpush.msra.mxu0 %v3133
        %3263 = vmatpush.msra.mxu0 %v3129
        %3264 = vmatpush.msra.mxu0 %v3125
        %3265 = vmatpush.msra.mxu0 %v3121
        %3266 = vmatpush.msra.mxu0 %v3117
        %3267 = vmatpush.msra.mxu0 %v3113
        %3268 = vmatpush.msra.mxu0 %v3109
        %3269 = vmatpush.msra.mxu0 %v3105
        %3270 = vmatpush.msra.mxu0 %v3101
        %3271 = vmatpush.msra.mxu0 %v3097
        %3272 = vmatpush.msra.mxu0 %v3093
        %3273 = vmatpush.msra.mxu0 %v3089
        %3274 = vmatpush.msra.mxu0 %v3085
        %3275 = vmatpush.msra.mxu0 %v3081
        %3276 = vmatpush.msra.mxu0 %v3077
        %3277 = vmatpush.msra.mxu0 %v3073
        %3278 = vmatmul.f32.gmra.mxu0 %v2744
        %v3279 = vpop.f32.mrf.mxu0
        %v3280 = vadd.f32 0.0, %v3279
        %3281 = vdwg.mxu0
        %3282 = vmatpush.msra.mxu0 0.0
        %3283 = vmatpush.msra.mxu0 0.0
        %3284 = vmatpush.msra.mxu0 0.0
        %3285 = vmatpush.msra.mxu0 0.0
        %3286 = vmatpush.msra.mxu0 0.0
        %3287 = vmatpush.msra.mxu0 0.0
        %3288 = vmatpush.msra.mxu0 0.0
        %3289 = vmatpush.msra.mxu0 0.0
        %3290 = vmatpush.msra.mxu0 0.0
        %3291 = vmatpush.msra.mxu0 0.0
        %3292 = vmatpush.msra.mxu0 0.0
        %3293 = vmatpush.msra.mxu0 0.0
        %3294 = vmatpush.msra.mxu0 0.0
        %3295 = vmatpush.msra.mxu0 0.0
        %3296 = vmatpush.msra.mxu0 %v3141
        %3297 = vmatpush.msra.mxu0 %v3137
        %3298 = vmatmul.f32.gmra.mxu0 %v2747
        %v3299 = vpop.f32.mrf.mxu0
        %v3300 = vadd.f32 %v3280, %v3299
        %3301 = vdwg.mxu0
        %v3302 = vadd.f32 %v2618, %v3180
        %v3303 = vadd.f32 %v2658, %v3220
        %v3304 = vadd.f32 %v2698, %v3260
        %v3305 = vadd.f32 %v2738, %v3300
        %v3306 = vld [vmem:[#allocation3] sm:$0x1e]
        %v3307 = vld [vmem:[#allocation3 + $0x8] sm:$0x1e]
        %v3310 = vrot.slane %v3306, 1
        %v3311 = vrot.slane %v3307, 1
        %v3313 = vsel %vm2413, %v3311, 0
        %3315 = vmatpush.msra.mxu0 %v3130
        %3316 = vmatpush.msra.mxu0 %v3126
        %3317 = vmatpush.msra.mxu0 %v3122
        %3318 = vmatpush.msra.mxu0 %v3118
        %3319 = vmatpush.msra.mxu0 %v3114
        %3320 = vmatpush.msra.mxu0 %v3110
        %3321 = vmatpush.msra.mxu0 %v3106
        %3322 = vmatpush.msra.mxu0 %v3102
        %3323 = vmatpush.msra.mxu0 %v3098
        %3324 = vmatpush.msra.mxu0 %v3094
        %3325 = vmatpush.msra.mxu0 %v3090
        %3326 = vmatpush.msra.mxu0 %v3086
        %3327 = vmatpush.msra.mxu0 %v3082
        %3328 = vmatpush.msra.mxu0 %v3078
        %3329 = vmatpush.msra.mxu0 %v3074
        %3330 = vmatpush.msra.mxu0 %v3070
        %3331 = vmatmul.f32.gmra.mxu0 %v3310
        %v3332 = vpop.f32.mrf.mxu0
        %v3333 = vadd.f32 0.0, %v3332
        %3334 = vdwg.mxu0
        %3335 = vmatpush.msra.mxu0 0.0
        %3336 = vmatpush.msra.mxu0 0.0
        %3337 = vmatpush.msra.mxu0 0.0
        %3338 = vmatpush.msra.mxu0 0.0
        %3339 = vmatpush.msra.mxu0 0.0
        %3340 = vmatpush.msra.mxu0 0.0
        %3341 = vmatpush.msra.mxu0 0.0
        %3342 = vmatpush.msra.mxu0 0.0
        %3343 = vmatpush.msra.mxu0 0.0
        %3344 = vmatpush.msra.mxu0 0.0
        %3345 = vmatpush.msra.mxu0 0.0
        %3346 = vmatpush.msra.mxu0 0.0
        %3347 = vmatpush.msra.mxu0 0.0
        %3348 = vmatpush.msra.mxu0 0.0
        %3349 = vmatpush.msra.mxu0 %v3138
        %3350 = vmatpush.msra.mxu0 %v3134
        %3351 = vmatmul.f32.gmra.mxu0 %v3313
        %v3352 = vpop.f32.mrf.mxu0
        %v3353 = vadd.f32 %v3333, %v3352
        %3354 = vdwg.mxu0
        %3355 = vmatpush.msra.mxu0 %v3131
        %3356 = vmatpush.msra.mxu0 %v3127
        %3357 = vmatpush.msra.mxu0 %v3123
        %3358 = vmatpush.msra.mxu0 %v3119
        %3359 = vmatpush.msra.mxu0 %v3115
        %3360 = vmatpush.msra.mxu0 %v3111
        %3361 = vmatpush.msra.mxu0 %v3107
        %3362 = vmatpush.msra.mxu0 %v3103
        %3363 = vmatpush.msra.mxu0 %v3099
        %3364 = vmatpush.msra.mxu0 %v3095
        %3365 = vmatpush.msra.mxu0 %v3091
        %3366 = vmatpush.msra.mxu0 %v3087
        %3367 = vmatpush.msra.mxu0 %v3083
        %3368 = vmatpush.msra.mxu0 %v3079
        %3369 = vmatpush.msra.mxu0 %v3075
        %3370 = vmatpush.msra.mxu0 %v3071
        %3371 = vmatmul.f32.gmra.mxu0 %v3310
        %v3372 = vpop.f32.mrf.mxu0
        %v3373 = vadd.f32 0.0, %v3372
        %3374 = vdwg.mxu0
        %3375 = vmatpush.msra.mxu0 0.0
        %3376 = vmatpush.msra.mxu0 0.0
        %3377 = vmatpush.msra.mxu0 0.0
        %3378 = vmatpush.msra.mxu0 0.0
        %3379 = vmatpush.msra.mxu0 0.0
        %3380 = vmatpush.msra.mxu0 0.0
        %3381 = vmatpush.msra.mxu0 0.0
        %3382 = vmatpush.msra.mxu0 0.0
        %3383 = vmatpush.msra.mxu0 0.0
        %3384 = vmatpush.msra.mxu0 0.0
        %3385 = vmatpush.msra.mxu0 0.0
        %3386 = vmatpush.msra.mxu0 0.0
        %3387 = vmatpush.msra.mxu0 0.0
        %3388 = vmatpush.msra.mxu0 0.0
        %3389 = vmatpush.msra.mxu0 %v3139
        %3390 = vmatpush.msra.mxu0 %v3135
        %3391 = vmatmul.f32.gmra.mxu0 %v3313
        %v3392 = vpop.f32.mrf.mxu0
        %v3393 = vadd.f32 %v3373, %v3392
        %3394 = vdwg.mxu0
        %3395 = vmatpush.msra.mxu0 %v3132
        %3396 = vmatpush.msra.mxu0 %v3128
        %3397 = vmatpush.msra.mxu0 %v3124
        %3398 = vmatpush.msra.mxu0 %v3120
        %3399 = vmatpush.msra.mxu0 %v3116
        %3400 = vmatpush.msra.mxu0 %v3112
        %3401 = vmatpush.msra.mxu0 %v3108
        %3402 = vmatpush.msra.mxu0 %v3104
        %3403 = vmatpush.msra.mxu0 %v3100
        %3404 = vmatpush.msra.mxu0 %v3096
        %3405 = vmatpush.msra.mxu0 %v3092
        %3406 = vmatpush.msra.mxu0 %v3088
        %3407 = vmatpush.msra.mxu0 %v3084
        %3408 = vmatpush.msra.mxu0 %v3080
        %3409 = vmatpush.msra.mxu0 %v3076
        %3410 = vmatpush.msra.mxu0 %v3072
        %3411 = vmatmul.f32.gmra.mxu0 %v3310
        %v3412 = vpop.f32.mrf.mxu0
        %v3413 = vadd.f32 0.0, %v3412
        %3414 = vdwg.mxu0
        %3415 = vmatpush.msra.mxu0 0.0
        %3416 = vmatpush.msra.mxu0 0.0
        %3417 = vmatpush.msra.mxu0 0.0
        %3418 = vmatpush.msra.mxu0 0.0
        %3419 = vmatpush.msra.mxu0 0.0
        %3420 = vmatpush.msra.mxu0 0.0
        %3421 = vmatpush.msra.mxu0 0.0
        %3422 = vmatpush.msra.mxu0 0.0
        %3423 = vmatpush.msra.mxu0 0.0
        %3424 = vmatpush.msra.mxu0 0.0
        %3425 = vmatpush.msra.mxu0 0.0
        %3426 = vmatpush.msra.mxu0 0.0
        %3427 = vmatpush.msra.mxu0 0.0
        %3428 = vmatpush.msra.mxu0 0.0
        %3429 = vmatpush.msra.mxu0 %v3140
        %3430 = vmatpush.msra.mxu0 %v3136
        %3431 = vmatmul.f32.gmra.mxu0 %v3313
        %v3432 = vpop.f32.mrf.mxu0
        %v3433 = vadd.f32 %v3413, %v3432
        %3434 = vdwg.mxu0
        %3435 = vmatpush.msra.mxu0 %v3133
        %3436 = vmatpush.msra.mxu0 %v3129
        %3437 = vmatpush.msra.mxu0 %v3125
        %3438 = vmatpush.msra.mxu0 %v3121
        %3439 = vmatpush.msra.mxu0 %v3117
        %3440 = vmatpush.msra.mxu0 %v3113
        %3441 = vmatpush.msra.mxu0 %v3109
        %3442 = vmatpush.msra.mxu0 %v3105
        %3443 = vmatpush.msra.mxu0 %v3101
        %3444 = vmatpush.msra.mxu0 %v3097
        %3445 = vmatpush.msra.mxu0 %v3093
        %3446 = vmatpush.msra.mxu0 %v3089
        %3447 = vmatpush.msra.mxu0 %v3085
        %3448 = vmatpush.msra.mxu0 %v3081
        %3449 = vmatpush.msra.mxu0 %v3077
        %3450 = vmatpush.msra.mxu0 %v3073
        %3451 = vmatmul.f32.gmra.mxu0 %v3310
        %v3452 = vpop.f32.mrf.mxu0
        %v3453 = vadd.f32 0.0, %v3452
        %3454 = vdwg.mxu0
        %3455 = vmatpush.msra.mxu0 0.0
        %3456 = vmatpush.msra.mxu0 0.0
        %3457 = vmatpush.msra.mxu0 0.0
        %3458 = vmatpush.msra.mxu0 0.0
        %3459 = vmatpush.msra.mxu0 0.0
        %3460 = vmatpush.msra.mxu0 0.0
        %3461 = vmatpush.msra.mxu0 0.0
        %3462 = vmatpush.msra.mxu0 0.0
        %3463 = vmatpush.msra.mxu0 0.0
        %3464 = vmatpush.msra.mxu0 0.0
        %3465 = vmatpush.msra.mxu0 0.0
        %3466 = vmatpush.msra.mxu0 0.0
        %3467 = vmatpush.msra.mxu0 0.0
        %3468 = vmatpush.msra.mxu0 0.0
        %3469 = vmatpush.msra.mxu0 %v3141
        %3470 = vmatpush.msra.mxu0 %v3137
        %3471 = vmatmul.f32.gmra.mxu0 %v3313
        %v3472 = vpop.f32.mrf.mxu0
        %v3473 = vadd.f32 %v3453, %v3472
        %3474 = vdwg.mxu0
        %v3475 = vadd.f32 %v2947, %v3353
        %v3476 = vadd.f32 %v2987, %v3393
        %v3477 = vadd.f32 %v3027, %v3433
        %v3478 = vadd.f32 %v3067, %v3473
        %s3479 = scalar_lea.vmem [#allocation10], 1728
        %v3480 = vld [vmem:[%s3479] sm:$0xff]
        %v3481 = vld [vmem:[%s3479 + $0x8] sm:$0xff]
        %v3482 = vld [vmem:[%s3479 + $0x10] sm:$0xff]
        %v3483 = vld [vmem:[%s3479 + $0x18] sm:$0xff]
        %v3484 = vld [vmem:[%s3479 + $0x20] sm:$0xff]
        %v3485 = vld [vmem:[%s3479 + $0x28] sm:$0xff]
        %v3486 = vld [vmem:[%s3479 + $0x30] sm:$0xff]
        %v3487 = vld [vmem:[%s3479 + $0x38] sm:$0xff]
        %v3488 = vld [vmem:[%s3479 + $0x40] sm:$0xff]
        %v3489 = vld [vmem:[%s3479 + $0x48] sm:$0xff]
        %v3490 = vld [vmem:[%s3479 + $0x50] sm:$0xff]
        %v3491 = vld [vmem:[%s3479 + $0x58] sm:$0xff]
        %v3492 = vld [vmem:[%s3479 + $0x60] sm:$0xff]
        %v3493 = vld [vmem:[%s3479 + $0x68] sm:$0xff]
        %v3494 = vld [vmem:[%s3479 + $0x70] sm:$0xff]
        %v3495 = vld [vmem:[%s3479 + $0x78] sm:$0xff]
        %v3496 = vld [vmem:[%s3479 + $0x80] sm:$0xff]
        %v3497 = vld [vmem:[%s3479 + $0x88] sm:$0xff]
        %v3498 = vld [vmem:[%s3479 + $0x90] sm:$0xff]
        %v3499 = vld [vmem:[%s3479 + $0x98] sm:$0xff]
        %v3500 = vld [vmem:[%s3479 + $0xa0] sm:$0xff]
        %v3501 = vld [vmem:[%s3479 + $0xa8] sm:$0xff]
        %v3502 = vld [vmem:[%s3479 + $0xb0] sm:$0xff]
        %v3503 = vld [vmem:[%s3479 + $0xb8] sm:$0xff]
        %v3504 = vld [vmem:[%s3479 + $0xc0] sm:$0xff]
        %v3505 = vld [vmem:[%s3479 + $0xc8] sm:$0xff]
        %v3506 = vld [vmem:[%s3479 + $0xd0] sm:$0xff]
        %v3507 = vld [vmem:[%s3479 + $0xd8] sm:$0xff]
        %v3508 = vld [vmem:[%s3479 + $0xe0] sm:$0xff]
        %v3509 = vld [vmem:[%s3479 + $0xe8] sm:$0xff]
        %v3510 = vld [vmem:[%s3479 + $0xf0] sm:$0xff]
        %v3511 = vld [vmem:[%s3479 + $0xf8] sm:$0xff]
        %v3512 = vld [vmem:[%s3479 + $0x100] sm:$0xff]
        %v3513 = vld [vmem:[%s3479 + $0x108] sm:$0xff]
        %v3514 = vld [vmem:[%s3479 + $0x110] sm:$0xff]
        %v3515 = vld [vmem:[%s3479 + $0x118] sm:$0xff]
        %v3516 = vld [vmem:[%s3479 + $0x120] sm:$0xff]
        %v3517 = vld [vmem:[%s3479 + $0x128] sm:$0xff]
        %v3518 = vld [vmem:[%s3479 + $0x130] sm:$0xff]
        %v3519 = vld [vmem:[%s3479 + $0x138] sm:$0xff]
        %v3520 = vld [vmem:[%s3479 + $0x140] sm:$0xff]
        %v3521 = vld [vmem:[%s3479 + $0x148] sm:$0xff]
        %v3522 = vld [vmem:[%s3479 + $0x150] sm:$0xff]
        %v3523 = vld [vmem:[%s3479 + $0x158] sm:$0xff]
        %v3524 = vld [vmem:[%s3479 + $0x160] sm:$0xff]
        %v3525 = vld [vmem:[%s3479 + $0x168] sm:$0xff]
        %v3526 = vld [vmem:[%s3479 + $0x170] sm:$0xff]
        %v3527 = vld [vmem:[%s3479 + $0x178] sm:$0xff]
        %v3528 = vld [vmem:[%s3479 + $0x180] sm:$0xff]
        %v3529 = vld [vmem:[%s3479 + $0x188] sm:$0xff]
        %v3530 = vld [vmem:[%s3479 + $0x190] sm:$0xff]
        %v3531 = vld [vmem:[%s3479 + $0x198] sm:$0xff]
        %v3532 = vld [vmem:[%s3479 + $0x1a0] sm:$0xff]
        %v3533 = vld [vmem:[%s3479 + $0x1a8] sm:$0xff]
        %v3534 = vld [vmem:[%s3479 + $0x1b0] sm:$0xff]
        %v3535 = vld [vmem:[%s3479 + $0x1b8] sm:$0xff]
        %v3536 = vld [vmem:[%s3479 + $0x1c0] sm:$0xff]
        %v3537 = vld [vmem:[%s3479 + $0x1c8] sm:$0xff]
        %v3538 = vld [vmem:[%s3479 + $0x1d0] sm:$0xff]
        %v3539 = vld [vmem:[%s3479 + $0x1d8] sm:$0xff]
        %v3540 = vld [vmem:[%s3479 + $0x1e0] sm:$0xff]
        %v3541 = vld [vmem:[%s3479 + $0x1e8] sm:$0xff]
        %v3542 = vld [vmem:[%s3479 + $0x1f0] sm:$0xff]
        %v3543 = vld [vmem:[%s3479 + $0x1f8] sm:$0xff]
        %v3544 = vld [vmem:[%s3479 + $0x200] sm:$0xff]
        %v3545 = vld [vmem:[%s3479 + $0x208] sm:$0xff]
        %v3546 = vld [vmem:[%s3479 + $0x210] sm:$0xff]
        %v3547 = vld [vmem:[%s3479 + $0x218] sm:$0xff]
        %v3548 = vld [vmem:[%s3479 + $0x220] sm:$0xff]
        %v3549 = vld [vmem:[%s3479 + $0x228] sm:$0xff]
        %v3550 = vld [vmem:[%s3479 + $0x230] sm:$0xff]
        %v3551 = vld [vmem:[%s3479 + $0x238] sm:$0xff]
        %3552 = vmatpush.msra.mxu0 %v3540
        %3553 = vmatpush.msra.mxu0 %v3536
        %3554 = vmatpush.msra.mxu0 %v3532
        %3555 = vmatpush.msra.mxu0 %v3528
        %3556 = vmatpush.msra.mxu0 %v3524
        %3557 = vmatpush.msra.mxu0 %v3520
        %3558 = vmatpush.msra.mxu0 %v3516
        %3559 = vmatpush.msra.mxu0 %v3512
        %3560 = vmatpush.msra.mxu0 %v3508
        %3561 = vmatpush.msra.mxu0 %v3504
        %3562 = vmatpush.msra.mxu0 %v3500
        %3563 = vmatpush.msra.mxu0 %v3496
        %3564 = vmatpush.msra.mxu0 %v3492
        %3565 = vmatpush.msra.mxu0 %v3488
        %3566 = vmatpush.msra.mxu0 %v3484
        %3567 = vmatpush.msra.mxu0 %v3480
        %3568 = vmatmul.f32.gmra.mxu0 %v3310
        %v3569 = vpop.f32.mrf.mxu0
        %v3570 = vadd.f32 0.0, %v3569
        %3571 = vdwg.mxu0
        %3572 = vmatpush.msra.mxu0 0.0
        %3573 = vmatpush.msra.mxu0 0.0
        %3574 = vmatpush.msra.mxu0 0.0
        %3575 = vmatpush.msra.mxu0 0.0
        %3576 = vmatpush.msra.mxu0 0.0
        %3577 = vmatpush.msra.mxu0 0.0
        %3578 = vmatpush.msra.mxu0 0.0
        %3579 = vmatpush.msra.mxu0 0.0
        %3580 = vmatpush.msra.mxu0 0.0
        %3581 = vmatpush.msra.mxu0 0.0
        %3582 = vmatpush.msra.mxu0 0.0
        %3583 = vmatpush.msra.mxu0 0.0
        %3584 = vmatpush.msra.mxu0 0.0
        %3585 = vmatpush.msra.mxu0 0.0
        %3586 = vmatpush.msra.mxu0 %v3548
        %3587 = vmatpush.msra.mxu0 %v3544
        %3588 = vmatmul.f32.gmra.mxu0 %v3313
        %v3589 = vpop.f32.mrf.mxu0
        %v3590 = vadd.f32 %v3570, %v3589
        %3591 = vdwg.mxu0
        %3592 = vmatpush.msra.mxu0 %v3541
        %3593 = vmatpush.msra.mxu0 %v3537
        %3594 = vmatpush.msra.mxu0 %v3533
        %3595 = vmatpush.msra.mxu0 %v3529
        %3596 = vmatpush.msra.mxu0 %v3525
        %3597 = vmatpush.msra.mxu0 %v3521
        %3598 = vmatpush.msra.mxu0 %v3517
        %3599 = vmatpush.msra.mxu0 %v3513
        %3600 = vmatpush.msra.mxu0 %v3509
        %3601 = vmatpush.msra.mxu0 %v3505
        %3602 = vmatpush.msra.mxu0 %v3501
        %3603 = vmatpush.msra.mxu0 %v3497
        %3604 = vmatpush.msra.mxu0 %v3493
        %3605 = vmatpush.msra.mxu0 %v3489
        %3606 = vmatpush.msra.mxu0 %v3485
        %3607 = vmatpush.msra.mxu0 %v3481
        %3608 = vmatmul.f32.gmra.mxu0 %v3310
        %v3609 = vpop.f32.mrf.mxu0
        %v3610 = vadd.f32 0.0, %v3609
        %3611 = vdwg.mxu0
        %3612 = vmatpush.msra.mxu0 0.0
        %3613 = vmatpush.msra.mxu0 0.0
        %3614 = vmatpush.msra.mxu0 0.0
        %3615 = vmatpush.msra.mxu0 0.0
        %3616 = vmatpush.msra.mxu0 0.0
        %3617 = vmatpush.msra.mxu0 0.0
        %3618 = vmatpush.msra.mxu0 0.0
        %3619 = vmatpush.msra.mxu0 0.0
        %3620 = vmatpush.msra.mxu0 0.0
        %3621 = vmatpush.msra.mxu0 0.0
        %3622 = vmatpush.msra.mxu0 0.0
        %3623 = vmatpush.msra.mxu0 0.0
        %3624 = vmatpush.msra.mxu0 0.0
        %3625 = vmatpush.msra.mxu0 0.0
        %3626 = vmatpush.msra.mxu0 %v3549
        %3627 = vmatpush.msra.mxu0 %v3545
        %3628 = vmatmul.f32.gmra.mxu0 %v3313
        %v3629 = vpop.f32.mrf.mxu0
        %v3630 = vadd.f32 %v3610, %v3629
        %3631 = vdwg.mxu0
        %3632 = vmatpush.msra.mxu0 %v3542
        %3633 = vmatpush.msra.mxu0 %v3538
        %3634 = vmatpush.msra.mxu0 %v3534
        %3635 = vmatpush.msra.mxu0 %v3530
        %3636 = vmatpush.msra.mxu0 %v3526
        %3637 = vmatpush.msra.mxu0 %v3522
        %3638 = vmatpush.msra.mxu0 %v3518
        %3639 = vmatpush.msra.mxu0 %v3514
        %3640 = vmatpush.msra.mxu0 %v3510
        %3641 = vmatpush.msra.mxu0 %v3506
        %3642 = vmatpush.msra.mxu0 %v3502
        %3643 = vmatpush.msra.mxu0 %v3498
        %3644 = vmatpush.msra.mxu0 %v3494
        %3645 = vmatpush.msra.mxu0 %v3490
        %3646 = vmatpush.msra.mxu0 %v3486
        %3647 = vmatpush.msra.mxu0 %v3482
        %3648 = vmatmul.f32.gmra.mxu0 %v3310
        %v3649 = vpop.f32.mrf.mxu0
        %v3650 = vadd.f32 0.0, %v3649
        %3651 = vdwg.mxu0
        %3652 = vmatpush.msra.mxu0 0.0
        %3653 = vmatpush.msra.mxu0 0.0
        %3654 = vmatpush.msra.mxu0 0.0
        %3655 = vmatpush.msra.mxu0 0.0
        %3656 = vmatpush.msra.mxu0 0.0
        %3657 = vmatpush.msra.mxu0 0.0
        %3658 = vmatpush.msra.mxu0 0.0
        %3659 = vmatpush.msra.mxu0 0.0
        %3660 = vmatpush.msra.mxu0 0.0
        %3661 = vmatpush.msra.mxu0 0.0
        %3662 = vmatpush.msra.mxu0 0.0
        %3663 = vmatpush.msra.mxu0 0.0
        %3664 = vmatpush.msra.mxu0 0.0
        %3665 = vmatpush.msra.mxu0 0.0
        %3666 = vmatpush.msra.mxu0 %v3550
        %3667 = vmatpush.msra.mxu0 %v3546
        %3668 = vmatmul.f32.gmra.mxu0 %v3313
        %v3669 = vpop.f32.mrf.mxu0
        %v3670 = vadd.f32 %v3650, %v3669
        %3671 = vdwg.mxu0
        %3672 = vmatpush.msra.mxu0 %v3543
        %3673 = vmatpush.msra.mxu0 %v3539
        %3674 = vmatpush.msra.mxu0 %v3535
        %3675 = vmatpush.msra.mxu0 %v3531
        %3676 = vmatpush.msra.mxu0 %v3527
        %3677 = vmatpush.msra.mxu0 %v3523
        %3678 = vmatpush.msra.mxu0 %v3519
        %3679 = vmatpush.msra.mxu0 %v3515
        %3680 = vmatpush.msra.mxu0 %v3511
        %3681 = vmatpush.msra.mxu0 %v3507
        %3682 = vmatpush.msra.mxu0 %v3503
        %3683 = vmatpush.msra.mxu0 %v3499
        %3684 = vmatpush.msra.mxu0 %v3495
        %3685 = vmatpush.msra.mxu0 %v3491
        %3686 = vmatpush.msra.mxu0 %v3487
        %3687 = vmatpush.msra.mxu0 %v3483
        %3688 = vmatmul.f32.gmra.mxu0 %v3310
        %v3689 = vpop.f32.mrf.mxu0
        %v3690 = vadd.f32 0.0, %v3689
        %3691 = vdwg.mxu0
        %3692 = vmatpush.msra.mxu0 0.0
        %3693 = vmatpush.msra.mxu0 0.0
        %3694 = vmatpush.msra.mxu0 0.0
        %3695 = vmatpush.msra.mxu0 0.0
        %3696 = vmatpush.msra.mxu0 0.0
        %3697 = vmatpush.msra.mxu0 0.0
        %3698 = vmatpush.msra.mxu0 0.0
        %3699 = vmatpush.msra.mxu0 0.0
        %3700 = vmatpush.msra.mxu0 0.0
        %3701 = vmatpush.msra.mxu0 0.0
        %3702 = vmatpush.msra.mxu0 0.0
        %3703 = vmatpush.msra.mxu0 0.0
        %3704 = vmatpush.msra.mxu0 0.0
        %3705 = vmatpush.msra.mxu0 0.0
        %3706 = vmatpush.msra.mxu0 %v3551
        %3707 = vmatpush.msra.mxu0 %v3547
        %3708 = vmatmul.f32.gmra.mxu0 %v3313
        %v3709 = vpop.f32.mrf.mxu0
        %v3710 = vadd.f32 %v3690, %v3709
        %3711 = vdwg.mxu0
        %v3712 = vadd.f32 %v3302, %v3590
        %v3713 = vadd.f32 %v3303, %v3630
        %v3714 = vadd.f32 %v3304, %v3670
        %v3715 = vadd.f32 %v3305, %v3710
        %v3716 = vld [vmem:[#allocation2] sm:$0x3c]
        %v3717 = vld [vmem:[#allocation2 + $0x8] sm:$0x3c]
        %v3720 = vrot.slane %v3716, 2
        %v3721 = vrot.slane %v3717, 2
        %v3723 = vsel %vm2413, %v3721, 0
        %3725 = vmatpush.msra.mxu0 %v3540
        %3726 = vmatpush.msra.mxu0 %v3536
        %3727 = vmatpush.msra.mxu0 %v3532
        %3728 = vmatpush.msra.mxu0 %v3528
        %3729 = vmatpush.msra.mxu0 %v3524
        %3730 = vmatpush.msra.mxu0 %v3520
        %3731 = vmatpush.msra.mxu0 %v3516
        %3732 = vmatpush.msra.mxu0 %v3512
        %3733 = vmatpush.msra.mxu0 %v3508
        %3734 = vmatpush.msra.mxu0 %v3504
        %3735 = vmatpush.msra.mxu0 %v3500
        %3736 = vmatpush.msra.mxu0 %v3496
        %3737 = vmatpush.msra.mxu0 %v3492
        %3738 = vmatpush.msra.mxu0 %v3488
        %3739 = vmatpush.msra.mxu0 %v3484
        %3740 = vmatpush.msra.mxu0 %v3480
        %3741 = vmatmul.f32.gmra.mxu0 %v3720
        %v3742 = vpop.f32.mrf.mxu0
        %v3743 = vadd.f32 0.0, %v3742
        %3744 = vdwg.mxu0
        %3745 = vmatpush.msra.mxu0 0.0
        %3746 = vmatpush.msra.mxu0 0.0
        %3747 = vmatpush.msra.mxu0 0.0
        %3748 = vmatpush.msra.mxu0 0.0
        %3749 = vmatpush.msra.mxu0 0.0
        %3750 = vmatpush.msra.mxu0 0.0
        %3751 = vmatpush.msra.mxu0 0.0
        %3752 = vmatpush.msra.mxu0 0.0
        %3753 = vmatpush.msra.mxu0 0.0
        %3754 = vmatpush.msra.mxu0 0.0
        %3755 = vmatpush.msra.mxu0 0.0
        %3756 = vmatpush.msra.mxu0 0.0
        %3757 = vmatpush.msra.mxu0 0.0
        %3758 = vmatpush.msra.mxu0 0.0
        %3759 = vmatpush.msra.mxu0 %v3548
        %3760 = vmatpush.msra.mxu0 %v3544
        %3761 = vmatmul.f32.gmra.mxu0 %v3723
        %v3762 = vpop.f32.mrf.mxu0
        %v3763 = vadd.f32 %v3743, %v3762
        %3764 = vdwg.mxu0
        %3765 = vmatpush.msra.mxu0 %v3541
        %3766 = vmatpush.msra.mxu0 %v3537
        %3767 = vmatpush.msra.mxu0 %v3533
        %3768 = vmatpush.msra.mxu0 %v3529
        %3769 = vmatpush.msra.mxu0 %v3525
        %3770 = vmatpush.msra.mxu0 %v3521
        %3771 = vmatpush.msra.mxu0 %v3517
        %3772 = vmatpush.msra.mxu0 %v3513
        %3773 = vmatpush.msra.mxu0 %v3509
        %3774 = vmatpush.msra.mxu0 %v3505
        %3775 = vmatpush.msra.mxu0 %v3501
        %3776 = vmatpush.msra.mxu0 %v3497
        %3777 = vmatpush.msra.mxu0 %v3493
        %3778 = vmatpush.msra.mxu0 %v3489
        %3779 = vmatpush.msra.mxu0 %v3485
        %3780 = vmatpush.msra.mxu0 %v3481
        %3781 = vmatmul.f32.gmra.mxu0 %v3720
        %v3782 = vpop.f32.mrf.mxu0
        %v3783 = vadd.f32 0.0, %v3782
        %3784 = vdwg.mxu0
        %3785 = vmatpush.msra.mxu0 0.0
        %3786 = vmatpush.msra.mxu0 0.0
        %3787 = vmatpush.msra.mxu0 0.0
        %3788 = vmatpush.msra.mxu0 0.0
        %3789 = vmatpush.msra.mxu0 0.0
        %3790 = vmatpush.msra.mxu0 0.0
        %3791 = vmatpush.msra.mxu0 0.0
        %3792 = vmatpush.msra.mxu0 0.0
        %3793 = vmatpush.msra.mxu0 0.0
        %3794 = vmatpush.msra.mxu0 0.0
        %3795 = vmatpush.msra.mxu0 0.0
        %3796 = vmatpush.msra.mxu0 0.0
        %3797 = vmatpush.msra.mxu0 0.0
        %3798 = vmatpush.msra.mxu0 0.0
        %3799 = vmatpush.msra.mxu0 %v3549
        %3800 = vmatpush.msra.mxu0 %v3545
        %3801 = vmatmul.f32.gmra.mxu0 %v3723
        %v3802 = vpop.f32.mrf.mxu0
        %v3803 = vadd.f32 %v3783, %v3802
        %3804 = vdwg.mxu0
        %3805 = vmatpush.msra.mxu0 %v3542
        %3806 = vmatpush.msra.mxu0 %v3538
        %3807 = vmatpush.msra.mxu0 %v3534
        %3808 = vmatpush.msra.mxu0 %v3530
        %3809 = vmatpush.msra.mxu0 %v3526
        %3810 = vmatpush.msra.mxu0 %v3522
        %3811 = vmatpush.msra.mxu0 %v3518
        %3812 = vmatpush.msra.mxu0 %v3514
        %3813 = vmatpush.msra.mxu0 %v3510
        %3814 = vmatpush.msra.mxu0 %v3506
        %3815 = vmatpush.msra.mxu0 %v3502
        %3816 = vmatpush.msra.mxu0 %v3498
        %3817 = vmatpush.msra.mxu0 %v3494
        %3818 = vmatpush.msra.mxu0 %v3490
        %3819 = vmatpush.msra.mxu0 %v3486
        %3820 = vmatpush.msra.mxu0 %v3482
        %3821 = vmatmul.f32.gmra.mxu0 %v3720
        %v3822 = vpop.f32.mrf.mxu0
        %v3823 = vadd.f32 0.0, %v3822
        %3824 = vdwg.mxu0
        %3825 = vmatpush.msra.mxu0 0.0
        %3826 = vmatpush.msra.mxu0 0.0
        %3827 = vmatpush.msra.mxu0 0.0
        %3828 = vmatpush.msra.mxu0 0.0
        %3829 = vmatpush.msra.mxu0 0.0
        %3830 = vmatpush.msra.mxu0 0.0
        %3831 = vmatpush.msra.mxu0 0.0
        %3832 = vmatpush.msra.mxu0 0.0
        %3833 = vmatpush.msra.mxu0 0.0
        %3834 = vmatpush.msra.mxu0 0.0
        %3835 = vmatpush.msra.mxu0 0.0
        %3836 = vmatpush.msra.mxu0 0.0
        %3837 = vmatpush.msra.mxu0 0.0
        %3838 = vmatpush.msra.mxu0 0.0
        %3839 = vmatpush.msra.mxu0 %v3550
        %3840 = vmatpush.msra.mxu0 %v3546
        %3841 = vmatmul.f32.gmra.mxu0 %v3723
        %v3842 = vpop.f32.mrf.mxu0
        %v3843 = vadd.f32 %v3823, %v3842
        %3844 = vdwg.mxu0
        %3845 = vmatpush.msra.mxu0 %v3543
        %3846 = vmatpush.msra.mxu0 %v3539
        %3847 = vmatpush.msra.mxu0 %v3535
        %3848 = vmatpush.msra.mxu0 %v3531
        %3849 = vmatpush.msra.mxu0 %v3527
        %3850 = vmatpush.msra.mxu0 %v3523
        %3851 = vmatpush.msra.mxu0 %v3519
        %3852 = vmatpush.msra.mxu0 %v3515
        %3853 = vmatpush.msra.mxu0 %v3511
        %3854 = vmatpush.msra.mxu0 %v3507
        %3855 = vmatpush.msra.mxu0 %v3503
        %3856 = vmatpush.msra.mxu0 %v3499
        %3857 = vmatpush.msra.mxu0 %v3495
        %3858 = vmatpush.msra.mxu0 %v3491
        %3859 = vmatpush.msra.mxu0 %v3487
        %3860 = vmatpush.msra.mxu0 %v3483
        %3861 = vmatmul.f32.gmra.mxu0 %v3720
        %v3862 = vpop.f32.mrf.mxu0
        %v3863 = vadd.f32 0.0, %v3862
        %3864 = vdwg.mxu0
        %3865 = vmatpush.msra.mxu0 0.0
        %3866 = vmatpush.msra.mxu0 0.0
        %3867 = vmatpush.msra.mxu0 0.0
        %3868 = vmatpush.msra.mxu0 0.0
        %3869 = vmatpush.msra.mxu0 0.0
        %3870 = vmatpush.msra.mxu0 0.0
        %3871 = vmatpush.msra.mxu0 0.0
        %3872 = vmatpush.msra.mxu0 0.0
        %3873 = vmatpush.msra.mxu0 0.0
        %3874 = vmatpush.msra.mxu0 0.0
        %3875 = vmatpush.msra.mxu0 0.0
        %3876 = vmatpush.msra.mxu0 0.0
        %3877 = vmatpush.msra.mxu0 0.0
        %3878 = vmatpush.msra.mxu0 0.0
        %3879 = vmatpush.msra.mxu0 %v3551
        %3880 = vmatpush.msra.mxu0 %v3547
        %3881 = vmatmul.f32.gmra.mxu0 %v3723
        %v3882 = vpop.f32.mrf.mxu0
        %v3883 = vadd.f32 %v3863, %v3882
        %3884 = vdwg.mxu0
        %v3885 = vadd.f32 %v3475, %v3763
        %v3886 = vadd.f32 %v3476, %v3803
        %v3887 = vadd.f32 %v3477, %v3843
        %v3888 = vadd.f32 %v3478, %v3883
        %s3889 = scalar_lea.vmem [#allocation10], 2304
        %v3890 = vld [vmem:[%s3889] sm:$0xff]
        %v3891 = vld [vmem:[%s3889 + $0x8] sm:$0xff]
        %v3892 = vld [vmem:[%s3889 + $0x10] sm:$0xff]
        %v3893 = vld [vmem:[%s3889 + $0x18] sm:$0xff]
        %v3894 = vld [vmem:[%s3889 + $0x20] sm:$0xff]
        %v3895 = vld [vmem:[%s3889 + $0x28] sm:$0xff]
        %v3896 = vld [vmem:[%s3889 + $0x30] sm:$0xff]
        %v3897 = vld [vmem:[%s3889 + $0x38] sm:$0xff]
        %v3898 = vld [vmem:[%s3889 + $0x40] sm:$0xff]
        %v3899 = vld [vmem:[%s3889 + $0x48] sm:$0xff]
        %v3900 = vld [vmem:[%s3889 + $0x50] sm:$0xff]
        %v3901 = vld [vmem:[%s3889 + $0x58] sm:$0xff]
        %v3902 = vld [vmem:[%s3889 + $0x60] sm:$0xff]
        %v3903 = vld [vmem:[%s3889 + $0x68] sm:$0xff]
        %v3904 = vld [vmem:[%s3889 + $0x70] sm:$0xff]
        %v3905 = vld [vmem:[%s3889 + $0x78] sm:$0xff]
        %v3906 = vld [vmem:[%s3889 + $0x80] sm:$0xff]
        %v3907 = vld [vmem:[%s3889 + $0x88] sm:$0xff]
        %v3908 = vld [vmem:[%s3889 + $0x90] sm:$0xff]
        %v3909 = vld [vmem:[%s3889 + $0x98] sm:$0xff]
        %v3910 = vld [vmem:[%s3889 + $0xa0] sm:$0xff]
        %v3911 = vld [vmem:[%s3889 + $0xa8] sm:$0xff]
        %v3912 = vld [vmem:[%s3889 + $0xb0] sm:$0xff]
        %v3913 = vld [vmem:[%s3889 + $0xb8] sm:$0xff]
        %v3914 = vld [vmem:[%s3889 + $0xc0] sm:$0xff]
        %v3915 = vld [vmem:[%s3889 + $0xc8] sm:$0xff]
        %v3916 = vld [vmem:[%s3889 + $0xd0] sm:$0xff]
        %v3917 = vld [vmem:[%s3889 + $0xd8] sm:$0xff]
        %v3918 = vld [vmem:[%s3889 + $0xe0] sm:$0xff]
        %v3919 = vld [vmem:[%s3889 + $0xe8] sm:$0xff]
        %v3920 = vld [vmem:[%s3889 + $0xf0] sm:$0xff]
        %v3921 = vld [vmem:[%s3889 + $0xf8] sm:$0xff]
        %v3922 = vld [vmem:[%s3889 + $0x100] sm:$0xff]
        %v3923 = vld [vmem:[%s3889 + $0x108] sm:$0xff]
        %v3924 = vld [vmem:[%s3889 + $0x110] sm:$0xff]
        %v3925 = vld [vmem:[%s3889 + $0x118] sm:$0xff]
        %v3926 = vld [vmem:[%s3889 + $0x120] sm:$0xff]
        %v3927 = vld [vmem:[%s3889 + $0x128] sm:$0xff]
        %v3928 = vld [vmem:[%s3889 + $0x130] sm:$0xff]
        %v3929 = vld [vmem:[%s3889 + $0x138] sm:$0xff]
        %v3930 = vld [vmem:[%s3889 + $0x140] sm:$0xff]
        %v3931 = vld [vmem:[%s3889 + $0x148] sm:$0xff]
        %v3932 = vld [vmem:[%s3889 + $0x150] sm:$0xff]
        %v3933 = vld [vmem:[%s3889 + $0x158] sm:$0xff]
        %v3934 = vld [vmem:[%s3889 + $0x160] sm:$0xff]
        %v3935 = vld [vmem:[%s3889 + $0x168] sm:$0xff]
        %v3936 = vld [vmem:[%s3889 + $0x170] sm:$0xff]
        %v3937 = vld [vmem:[%s3889 + $0x178] sm:$0xff]
        %v3938 = vld [vmem:[%s3889 + $0x180] sm:$0xff]
        %v3939 = vld [vmem:[%s3889 + $0x188] sm:$0xff]
        %v3940 = vld [vmem:[%s3889 + $0x190] sm:$0xff]
        %v3941 = vld [vmem:[%s3889 + $0x198] sm:$0xff]
        %v3942 = vld [vmem:[%s3889 + $0x1a0] sm:$0xff]
        %v3943 = vld [vmem:[%s3889 + $0x1a8] sm:$0xff]
        %v3944 = vld [vmem:[%s3889 + $0x1b0] sm:$0xff]
        %v3945 = vld [vmem:[%s3889 + $0x1b8] sm:$0xff]
        %v3946 = vld [vmem:[%s3889 + $0x1c0] sm:$0xff]
        %v3947 = vld [vmem:[%s3889 + $0x1c8] sm:$0xff]
        %v3948 = vld [vmem:[%s3889 + $0x1d0] sm:$0xff]
        %v3949 = vld [vmem:[%s3889 + $0x1d8] sm:$0xff]
        %v3950 = vld [vmem:[%s3889 + $0x1e0] sm:$0xff]
        %v3951 = vld [vmem:[%s3889 + $0x1e8] sm:$0xff]
        %v3952 = vld [vmem:[%s3889 + $0x1f0] sm:$0xff]
        %v3953 = vld [vmem:[%s3889 + $0x1f8] sm:$0xff]
        %v3954 = vld [vmem:[%s3889 + $0x200] sm:$0xff]
        %v3955 = vld [vmem:[%s3889 + $0x208] sm:$0xff]
        %v3956 = vld [vmem:[%s3889 + $0x210] sm:$0xff]
        %v3957 = vld [vmem:[%s3889 + $0x218] sm:$0xff]
        %v3958 = vld [vmem:[%s3889 + $0x220] sm:$0xff]
        %v3959 = vld [vmem:[%s3889 + $0x228] sm:$0xff]
        %v3960 = vld [vmem:[%s3889 + $0x230] sm:$0xff]
        %v3961 = vld [vmem:[%s3889 + $0x238] sm:$0xff]
        %3962 = vmatpush.msra.mxu0 %v3950
        %3963 = vmatpush.msra.mxu0 %v3946
        %3964 = vmatpush.msra.mxu0 %v3942
        %3965 = vmatpush.msra.mxu0 %v3938
        %3966 = vmatpush.msra.mxu0 %v3934
        %3967 = vmatpush.msra.mxu0 %v3930
        %3968 = vmatpush.msra.mxu0 %v3926
        %3969 = vmatpush.msra.mxu0 %v3922
        %3970 = vmatpush.msra.mxu0 %v3918
        %3971 = vmatpush.msra.mxu0 %v3914
        %3972 = vmatpush.msra.mxu0 %v3910
        %3973 = vmatpush.msra.mxu0 %v3906
        %3974 = vmatpush.msra.mxu0 %v3902
        %3975 = vmatpush.msra.mxu0 %v3898
        %3976 = vmatpush.msra.mxu0 %v3894
        %3977 = vmatpush.msra.mxu0 %v3890
        %3978 = vmatmul.f32.gmra.mxu0 %v3720
        %v3979 = vpop.f32.mrf.mxu0
        %v3980 = vadd.f32 0.0, %v3979
        %3981 = vdwg.mxu0
        %3982 = vmatpush.msra.mxu0 0.0
        %3983 = vmatpush.msra.mxu0 0.0
        %3984 = vmatpush.msra.mxu0 0.0
        %3985 = vmatpush.msra.mxu0 0.0
        %3986 = vmatpush.msra.mxu0 0.0
        %3987 = vmatpush.msra.mxu0 0.0
        %3988 = vmatpush.msra.mxu0 0.0
        %3989 = vmatpush.msra.mxu0 0.0
        %3990 = vmatpush.msra.mxu0 0.0
        %3991 = vmatpush.msra.mxu0 0.0
        %3992 = vmatpush.msra.mxu0 0.0
        %3993 = vmatpush.msra.mxu0 0.0
        %3994 = vmatpush.msra.mxu0 0.0
        %3995 = vmatpush.msra.mxu0 0.0
        %3996 = vmatpush.msra.mxu0 %v3958
        %3997 = vmatpush.msra.mxu0 %v3954
        %3998 = vmatmul.f32.gmra.mxu0 %v3723
        %v3999 = vpop.f32.mrf.mxu0
        %v4000 = vadd.f32 %v3980, %v3999
        %4001 = vdwg.mxu0
        %4002 = vmatpush.msra.mxu0 %v3951
        %4003 = vmatpush.msra.mxu0 %v3947
        %4004 = vmatpush.msra.mxu0 %v3943
        %4005 = vmatpush.msra.mxu0 %v3939
        %4006 = vmatpush.msra.mxu0 %v3935
        %4007 = vmatpush.msra.mxu0 %v3931
        %4008 = vmatpush.msra.mxu0 %v3927
        %4009 = vmatpush.msra.mxu0 %v3923
        %4010 = vmatpush.msra.mxu0 %v3919
        %4011 = vmatpush.msra.mxu0 %v3915
        %4012 = vmatpush.msra.mxu0 %v3911
        %4013 = vmatpush.msra.mxu0 %v3907
        %4014 = vmatpush.msra.mxu0 %v3903
        %4015 = vmatpush.msra.mxu0 %v3899
        %4016 = vmatpush.msra.mxu0 %v3895
        %4017 = vmatpush.msra.mxu0 %v3891
        %4018 = vmatmul.f32.gmra.mxu0 %v3720
        %v4019 = vpop.f32.mrf.mxu0
        %v4020 = vadd.f32 0.0, %v4019
        %4021 = vdwg.mxu0
        %4022 = vmatpush.msra.mxu0 0.0
        %4023 = vmatpush.msra.mxu0 0.0
        %4024 = vmatpush.msra.mxu0 0.0
        %4025 = vmatpush.msra.mxu0 0.0
        %4026 = vmatpush.msra.mxu0 0.0
        %4027 = vmatpush.msra.mxu0 0.0
        %4028 = vmatpush.msra.mxu0 0.0
        %4029 = vmatpush.msra.mxu0 0.0
        %4030 = vmatpush.msra.mxu0 0.0
        %4031 = vmatpush.msra.mxu0 0.0
        %4032 = vmatpush.msra.mxu0 0.0
        %4033 = vmatpush.msra.mxu0 0.0
        %4034 = vmatpush.msra.mxu0 0.0
        %4035 = vmatpush.msra.mxu0 0.0
        %4036 = vmatpush.msra.mxu0 %v3959
        %4037 = vmatpush.msra.mxu0 %v3955
        %4038 = vmatmul.f32.gmra.mxu0 %v3723
        %v4039 = vpop.f32.mrf.mxu0
        %v4040 = vadd.f32 %v4020, %v4039
        %4041 = vdwg.mxu0
        %4042 = vmatpush.msra.mxu0 %v3952
        %4043 = vmatpush.msra.mxu0 %v3948
        %4044 = vmatpush.msra.mxu0 %v3944
        %4045 = vmatpush.msra.mxu0 %v3940
        %4046 = vmatpush.msra.mxu0 %v3936
        %4047 = vmatpush.msra.mxu0 %v3932
        %4048 = vmatpush.msra.mxu0 %v3928
        %4049 = vmatpush.msra.mxu0 %v3924
        %4050 = vmatpush.msra.mxu0 %v3920
        %4051 = vmatpush.msra.mxu0 %v3916
        %4052 = vmatpush.msra.mxu0 %v3912
        %4053 = vmatpush.msra.mxu0 %v3908
        %4054 = vmatpush.msra.mxu0 %v3904
        %4055 = vmatpush.msra.mxu0 %v3900
        %4056 = vmatpush.msra.mxu0 %v3896
        %4057 = vmatpush.msra.mxu0 %v3892
        %4058 = vmatmul.f32.gmra.mxu0 %v3720
        %v4059 = vpop.f32.mrf.mxu0
        %v4060 = vadd.f32 0.0, %v4059
        %4061 = vdwg.mxu0
        %4062 = vmatpush.msra.mxu0 0.0
        %4063 = vmatpush.msra.mxu0 0.0
        %4064 = vmatpush.msra.mxu0 0.0
        %4065 = vmatpush.msra.mxu0 0.0
        %4066 = vmatpush.msra.mxu0 0.0
        %4067 = vmatpush.msra.mxu0 0.0
        %4068 = vmatpush.msra.mxu0 0.0
        %4069 = vmatpush.msra.mxu0 0.0
        %4070 = vmatpush.msra.mxu0 0.0
        %4071 = vmatpush.msra.mxu0 0.0
        %4072 = vmatpush.msra.mxu0 0.0
        %4073 = vmatpush.msra.mxu0 0.0
        %4074 = vmatpush.msra.mxu0 0.0
        %4075 = vmatpush.msra.mxu0 0.0
        %4076 = vmatpush.msra.mxu0 %v3960
        %4077 = vmatpush.msra.mxu0 %v3956
        %4078 = vmatmul.f32.gmra.mxu0 %v3723
        %v4079 = vpop.f32.mrf.mxu0
        %v4080 = vadd.f32 %v4060, %v4079
        %4081 = vdwg.mxu0
        %4082 = vmatpush.msra.mxu0 %v3953
        %4083 = vmatpush.msra.mxu0 %v3949
        %4084 = vmatpush.msra.mxu0 %v3945
        %4085 = vmatpush.msra.mxu0 %v3941
        %4086 = vmatpush.msra.mxu0 %v3937
        %4087 = vmatpush.msra.mxu0 %v3933
        %4088 = vmatpush.msra.mxu0 %v3929
        %4089 = vmatpush.msra.mxu0 %v3925
        %4090 = vmatpush.msra.mxu0 %v3921
        %4091 = vmatpush.msra.mxu0 %v3917
        %4092 = vmatpush.msra.mxu0 %v3913
        %4093 = vmatpush.msra.mxu0 %v3909
        %4094 = vmatpush.msra.mxu0 %v3905
        %4095 = vmatpush.msra.mxu0 %v3901
        %4096 = vmatpush.msra.mxu0 %v3897
        %4097 = vmatpush.msra.mxu0 %v3893
        %4098 = vmatmul.f32.gmra.mxu0 %v3720
        %v4099 = vpop.f32.mrf.mxu0
        %v4100 = vadd.f32 0.0, %v4099
        %4101 = vdwg.mxu0
        %4102 = vmatpush.msra.mxu0 0.0
        %4103 = vmatpush.msra.mxu0 0.0
        %4104 = vmatpush.msra.mxu0 0.0
        %4105 = vmatpush.msra.mxu0 0.0
        %4106 = vmatpush.msra.mxu0 0.0
        %4107 = vmatpush.msra.mxu0 0.0
        %4108 = vmatpush.msra.mxu0 0.0
        %4109 = vmatpush.msra.mxu0 0.0
        %4110 = vmatpush.msra.mxu0 0.0
        %4111 = vmatpush.msra.mxu0 0.0
        %4112 = vmatpush.msra.mxu0 0.0
        %4113 = vmatpush.msra.mxu0 0.0
        %4114 = vmatpush.msra.mxu0 0.0
        %4115 = vmatpush.msra.mxu0 0.0
        %4116 = vmatpush.msra.mxu0 %v3961
        %4117 = vmatpush.msra.mxu0 %v3957
        %4118 = vmatmul.f32.gmra.mxu0 %v3723
        %v4119 = vpop.f32.mrf.mxu0
        %v4120 = vadd.f32 %v4100, %v4119
        %4121 = vdwg.mxu0
        %v4122 = vadd.f32 %v3712, %v4000
        %v4123 = vadd.f32 %v3713, %v4040
        %v4124 = vadd.f32 %v3714, %v4080
        %v4125 = vadd.f32 %v3715, %v4120
        %v4126 = vld [vmem:[#allocation3] sm:$0x3c]
        %v4127 = vld [vmem:[#allocation3 + $0x8] sm:$0x3c]
        %v4130 = vrot.slane %v4126, 2
        %v4131 = vrot.slane %v4127, 2
        %v4133 = vsel %vm2413, %v4131, 0
        %4135 = vmatpush.msra.mxu0 %v3950
        %4136 = vmatpush.msra.mxu0 %v3946
        %4137 = vmatpush.msra.mxu0 %v3942
        %4138 = vmatpush.msra.mxu0 %v3938
        %4139 = vmatpush.msra.mxu0 %v3934
        %4140 = vmatpush.msra.mxu0 %v3930
        %4141 = vmatpush.msra.mxu0 %v3926
        %4142 = vmatpush.msra.mxu0 %v3922
        %4143 = vmatpush.msra.mxu0 %v3918
        %4144 = vmatpush.msra.mxu0 %v3914
        %4145 = vmatpush.msra.mxu0 %v3910
        %4146 = vmatpush.msra.mxu0 %v3906
        %4147 = vmatpush.msra.mxu0 %v3902
        %4148 = vmatpush.msra.mxu0 %v3898
        %4149 = vmatpush.msra.mxu0 %v3894
        %4150 = vmatpush.msra.mxu0 %v3890
        %4151 = vmatmul.f32.gmra.mxu0 %v4130
        %v4152 = vpop.f32.mrf.mxu0
        %v4153 = vadd.f32 0.0, %v4152
        %4154 = vdwg.mxu0
        %4155 = vmatpush.msra.mxu0 0.0
        %4156 = vmatpush.msra.mxu0 0.0
        %4157 = vmatpush.msra.mxu0 0.0
        %4158 = vmatpush.msra.mxu0 0.0
        %4159 = vmatpush.msra.mxu0 0.0
        %4160 = vmatpush.msra.mxu0 0.0
        %4161 = vmatpush.msra.mxu0 0.0
        %4162 = vmatpush.msra.mxu0 0.0
        %4163 = vmatpush.msra.mxu0 0.0
        %4164 = vmatpush.msra.mxu0 0.0
        %4165 = vmatpush.msra.mxu0 0.0
        %4166 = vmatpush.msra.mxu0 0.0
        %4167 = vmatpush.msra.mxu0 0.0
        %4168 = vmatpush.msra.mxu0 0.0
        %4169 = vmatpush.msra.mxu0 %v3958
        %4170 = vmatpush.msra.mxu0 %v3954
        %4171 = vmatmul.f32.gmra.mxu0 %v4133
        %v4172 = vpop.f32.mrf.mxu0
        %v4173 = vadd.f32 %v4153, %v4172
        %4174 = vdwg.mxu0
        %4175 = vmatpush.msra.mxu0 %v3951
        %4176 = vmatpush.msra.mxu0 %v3947
        %4177 = vmatpush.msra.mxu0 %v3943
        %4178 = vmatpush.msra.mxu0 %v3939
        %4179 = vmatpush.msra.mxu0 %v3935
        %4180 = vmatpush.msra.mxu0 %v3931
        %4181 = vmatpush.msra.mxu0 %v3927
        %4182 = vmatpush.msra.mxu0 %v3923
        %4183 = vmatpush.msra.mxu0 %v3919
        %4184 = vmatpush.msra.mxu0 %v3915
        %4185 = vmatpush.msra.mxu0 %v3911
        %4186 = vmatpush.msra.mxu0 %v3907
        %4187 = vmatpush.msra.mxu0 %v3903
        %4188 = vmatpush.msra.mxu0 %v3899
        %4189 = vmatpush.msra.mxu0 %v3895
        %4190 = vmatpush.msra.mxu0 %v3891
        %4191 = vmatmul.f32.gmra.mxu0 %v4130
        %v4192 = vpop.f32.mrf.mxu0
        %v4193 = vadd.f32 0.0, %v4192
        %4194 = vdwg.mxu0
        %4195 = vmatpush.msra.mxu0 0.0
        %4196 = vmatpush.msra.mxu0 0.0
        %4197 = vmatpush.msra.mxu0 0.0
        %4198 = vmatpush.msra.mxu0 0.0
        %4199 = vmatpush.msra.mxu0 0.0
        %4200 = vmatpush.msra.mxu0 0.0
        %4201 = vmatpush.msra.mxu0 0.0
        %4202 = vmatpush.msra.mxu0 0.0
        %4203 = vmatpush.msra.mxu0 0.0
        %4204 = vmatpush.msra.mxu0 0.0
        %4205 = vmatpush.msra.mxu0 0.0
        %4206 = vmatpush.msra.mxu0 0.0
        %4207 = vmatpush.msra.mxu0 0.0
        %4208 = vmatpush.msra.mxu0 0.0
        %4209 = vmatpush.msra.mxu0 %v3959
        %4210 = vmatpush.msra.mxu0 %v3955
        %4211 = vmatmul.f32.gmra.mxu0 %v4133
        %v4212 = vpop.f32.mrf.mxu0
        %v4213 = vadd.f32 %v4193, %v4212
        %4214 = vdwg.mxu0
        %4215 = vmatpush.msra.mxu0 %v3952
        %4216 = vmatpush.msra.mxu0 %v3948
        %4217 = vmatpush.msra.mxu0 %v3944
        %4218 = vmatpush.msra.mxu0 %v3940
        %4219 = vmatpush.msra.mxu0 %v3936
        %4220 = vmatpush.msra.mxu0 %v3932
        %4221 = vmatpush.msra.mxu0 %v3928
        %4222 = vmatpush.msra.mxu0 %v3924
        %4223 = vmatpush.msra.mxu0 %v3920
        %4224 = vmatpush.msra.mxu0 %v3916
        %4225 = vmatpush.msra.mxu0 %v3912
        %4226 = vmatpush.msra.mxu0 %v3908
        %4227 = vmatpush.msra.mxu0 %v3904
        %4228 = vmatpush.msra.mxu0 %v3900
        %4229 = vmatpush.msra.mxu0 %v3896
        %4230 = vmatpush.msra.mxu0 %v3892
        %4231 = vmatmul.f32.gmra.mxu0 %v4130
        %v4232 = vpop.f32.mrf.mxu0
        %v4233 = vadd.f32 0.0, %v4232
        %4234 = vdwg.mxu0
        %4235 = vmatpush.msra.mxu0 0.0
        %4236 = vmatpush.msra.mxu0 0.0
        %4237 = vmatpush.msra.mxu0 0.0
        %4238 = vmatpush.msra.mxu0 0.0
        %4239 = vmatpush.msra.mxu0 0.0
        %4240 = vmatpush.msra.mxu0 0.0
        %4241 = vmatpush.msra.mxu0 0.0
        %4242 = vmatpush.msra.mxu0 0.0
        %4243 = vmatpush.msra.mxu0 0.0
        %4244 = vmatpush.msra.mxu0 0.0
        %4245 = vmatpush.msra.mxu0 0.0
        %4246 = vmatpush.msra.mxu0 0.0
        %4247 = vmatpush.msra.mxu0 0.0
        %4248 = vmatpush.msra.mxu0 0.0
        %4249 = vmatpush.msra.mxu0 %v3960
        %4250 = vmatpush.msra.mxu0 %v3956
        %4251 = vmatmul.f32.gmra.mxu0 %v4133
        %v4252 = vpop.f32.mrf.mxu0
        %v4253 = vadd.f32 %v4233, %v4252
        %4254 = vdwg.mxu0
        %4255 = vmatpush.msra.mxu0 %v3953
        %4256 = vmatpush.msra.mxu0 %v3949
        %4257 = vmatpush.msra.mxu0 %v3945
        %4258 = vmatpush.msra.mxu0 %v3941
        %4259 = vmatpush.msra.mxu0 %v3937
        %4260 = vmatpush.msra.mxu0 %v3933
        %4261 = vmatpush.msra.mxu0 %v3929
        %4262 = vmatpush.msra.mxu0 %v3925
        %4263 = vmatpush.msra.mxu0 %v3921
        %4264 = vmatpush.msra.mxu0 %v3917
        %4265 = vmatpush.msra.mxu0 %v3913
        %4266 = vmatpush.msra.mxu0 %v3909
        %4267 = vmatpush.msra.mxu0 %v3905
        %4268 = vmatpush.msra.mxu0 %v3901
        %4269 = vmatpush.msra.mxu0 %v3897
        %4270 = vmatpush.msra.mxu0 %v3893
        %4271 = vmatmul.f32.gmra.mxu0 %v4130
        %v4272 = vpop.f32.mrf.mxu0
        %v4273 = vadd.f32 0.0, %v4272
        %4274 = vdwg.mxu0
        %4275 = vmatpush.msra.mxu0 0.0
        %4276 = vmatpush.msra.mxu0 0.0
        %4277 = vmatpush.msra.mxu0 0.0
        %4278 = vmatpush.msra.mxu0 0.0
        %4279 = vmatpush.msra.mxu0 0.0
        %4280 = vmatpush.msra.mxu0 0.0
        %4281 = vmatpush.msra.mxu0 0.0
        %4282 = vmatpush.msra.mxu0 0.0
        %4283 = vmatpush.msra.mxu0 0.0
        %4284 = vmatpush.msra.mxu0 0.0
        %4285 = vmatpush.msra.mxu0 0.0
        %4286 = vmatpush.msra.mxu0 0.0
        %4287 = vmatpush.msra.mxu0 0.0
        %4288 = vmatpush.msra.mxu0 0.0
        %4289 = vmatpush.msra.mxu0 %v3961
        %4290 = vmatpush.msra.mxu0 %v3957
        %4291 = vmatmul.f32.gmra.mxu0 %v4133
        %v4292 = vpop.f32.mrf.mxu0
        %v4293 = vadd.f32 %v4273, %v4292
        %4294 = vdwg.mxu0
        %v4295 = vadd.f32 %v3885, %v4173
        %v4296 = vadd.f32 %v3886, %v4213
        %v4297 = vadd.f32 %v3887, %v4253
        %v4298 = vadd.f32 %v3888, %v4293
        %v4299 = vmax.f32 %v4122, %v4295
        %v4300 = vmax.f32 %v4123, %v4296
        %v4301 = vmax.f32 %v4124, %v4297
        %v4302 = vmax.f32 %v4125, %v4298
        %v4303 = vmax.f32 %v4299, %v4301
        %v4304 = vmax.f32 %v4300, %v4302
        %v4305 = vld [vmem:[#allocation11] sm:$0x3]
        %v4307 = vperm.slane %v4305, 0
        %v4308 = vperm.slane %v4305, 1
        %v4311 = vadd.f32 %v4303, %v4307
        %v4312 = vadd.f32 %v4304, %v4308
        %vm4313 = vcmp.gt.f32.partialorder %v4311, 1.0
        %vm4314 = vcmp.gt.f32.partialorder %v4312, 1.0
        %v4315 = vsel %vm4313, 1, 0
        %v4316 = vsel %vm4314, 1, 0
        %v4317 = vcvt.s32.f32 %v4315
        %v4318 = vcvt.s32.f32 %v4316
        %v4321 = vrot.slane %v4318, 4
        %v4322 = vsel %vm434, %v4317, %v4321
        %4324 = vst [vmem:[#allocation4] sm:$0xff] %v4322
        %v4325 = vld [vmem:[#allocation13] sm:$0x1]
        %v4326 = vld [vmem:[#allocation4] ss:$4 sm:$0x3]
        %v4327 = vld [vmem:[%s5] sm:$0xff]
        %v4328 = vld [vmem:[%s5 + $0x8] sm:$0xff]
        %v4329 = vld [vmem:[%s5 + $0x10] sm:$0xff]
        %v4330 = vld [vmem:[%s5 + $0x18] sm:$0xff]
        %v4331 = vld [vmem:[%s5 + $0x20] sm:$0xff]
        %v4332 = vld [vmem:[%s5 + $0x28] sm:$0xff]
        %v4333 = vld [vmem:[%s5 + $0x30] sm:$0xff]
        %v4334 = vld [vmem:[%s5 + $0x38] sm:$0xff]
        %v4335 = vld [vmem:[%s5 + $0x40] sm:$0xff]
        %v4336 = vld [vmem:[%s5 + $0x48] sm:$0xff]
        %v4337 = vld [vmem:[%s5 + $0x50] sm:$0xff]
        %v4338 = vld [vmem:[%s5 + $0x58] sm:$0xff]
        %v4339 = vld [vmem:[%s5 + $0x60] sm:$0xff]
        %v4340 = vld [vmem:[%s5 + $0x68] sm:$0xff]
        %v4341 = vld [vmem:[%s5 + $0x70] sm:$0xff]
        %v4342 = vld [vmem:[%s5 + $0x78] sm:$0xff]
        %v4343 = vld [vmem:[%s5 + $0x80] sm:$0xff]
        %v4344 = vld [vmem:[%s5 + $0x88] sm:$0xff]
        %v4345 = vld [vmem:[%s5 + $0x90] sm:$0xff]
        %v4346 = vld [vmem:[%s5 + $0x98] sm:$0xff]
        %v4347 = vld [vmem:[%s5 + $0xa0] sm:$0xff]
        %v4348 = vld [vmem:[%s5 + $0xa8] sm:$0xff]
        %v4349 = vld [vmem:[%s5 + $0xb0] sm:$0xff]
        %v4350 = vld [vmem:[%s5 + $0xb8] sm:$0xff]
        %v4351 = vld [vmem:[%s5 + $0xc0] sm:$0xff]
        %v4352 = vld [vmem:[%s5 + $0xc8] sm:$0xff]
        %v4353 = vld [vmem:[%s5 + $0xd0] sm:$0xff]
        %v4354 = vld [vmem:[%s5 + $0xd8] sm:$0xff]
        %v4355 = vld [vmem:[%s5 + $0xe0] sm:$0xff]
        %v4356 = vld [vmem:[%s5 + $0xe8] sm:$0xff]
        %v4357 = vld [vmem:[%s5 + $0xf0] sm:$0xff]
        %v4358 = vld [vmem:[%s5 + $0xf8] sm:$0xff]
        %v4360 = vperm.slane %v4326, 0
        %v4361 = vperm.slane %v4326, 1
        %4364 = vmatpush.msra.mxu0 %v4342
        %4365 = vmatpush.msra.mxu0 %v4341
        %4366 = vmatpush.msra.mxu0 %v4340
        %4367 = vmatpush.msra.mxu0 %v4339
        %4368 = vmatpush.msra.mxu0 %v4338
        %4369 = vmatpush.msra.mxu0 %v4337
        %4370 = vmatpush.msra.mxu0 %v4336
        %4371 = vmatpush.msra.mxu0 %v4335
        %4372 = vmatpush.msra.mxu0 %v4334
        %4373 = vmatpush.msra.mxu0 %v4333
        %4374 = vmatpush.msra.mxu0 %v4332
        %4375 = vmatpush.msra.mxu0 %v4331
        %4376 = vmatpush.msra.mxu0 %v4330
        %4377 = vmatpush.msra.mxu0 %v4329
        %4378 = vmatpush.msra.mxu0 %v4328
        %4379 = vmatpush.msra.mxu0 %v4327
        %4380 = vmatmul.f32.gmra.mxu0 %v4360
        %v4381 = vpop.f32.mrf.mxu0
        %v4382 = vadd.f32 0.0, %v4381
        %4383 = vdwg.mxu0
        %4384 = vmatpush.msra.mxu0 %v4358
        %4385 = vmatpush.msra.mxu0 %v4357
        %4386 = vmatpush.msra.mxu0 %v4356
        %4387 = vmatpush.msra.mxu0 %v4355
        %4388 = vmatpush.msra.mxu0 %v4354
        %4389 = vmatpush.msra.mxu0 %v4353
        %4390 = vmatpush.msra.mxu0 %v4352
        %4391 = vmatpush.msra.mxu0 %v4351
        %4392 = vmatpush.msra.mxu0 %v4350
        %4393 = vmatpush.msra.mxu0 %v4349
        %4394 = vmatpush.msra.mxu0 %v4348
        %4395 = vmatpush.msra.mxu0 %v4347
        %4396 = vmatpush.msra.mxu0 %v4346
        %4397 = vmatpush.msra.mxu0 %v4345
        %4398 = vmatpush.msra.mxu0 %v4344
        %4399 = vmatpush.msra.mxu0 %v4343
        %4400 = vmatmul.f32.gmra.mxu0 %v4361
        %v4401 = vpop.f32.mrf.mxu0
        %v4402 = vadd.f32 %v4382, %v4401
        %4403 = vdwg.mxu0
        %v4404 = vadd.f32 %v4325, %v4402
        %s4405 = scalar_lea.vmem [#allocation4], 1
        %v4406 = vld [vmem:[%s4405] ss:$4 sm:$0x3]
        %s4407 = scalar_lea.vmem %s5, 256
        %v4408 = vld [vmem:[%s4407] sm:$0xff]
        %v4409 = vld [vmem:[%s4407 + $0x8] sm:$0xff]
        %v4410 = vld [vmem:[%s4407 + $0x10] sm:$0xff]
        %v4411 = vld [vmem:[%s4407 + $0x18] sm:$0xff]
        %v4412 = vld [vmem:[%s4407 + $0x20] sm:$0xff]
        %v4413 = vld [vmem:[%s4407 + $0x28] sm:$0xff]
        %v4414 = vld [vmem:[%s4407 + $0x30] sm:$0xff]
        %v4415 = vld [vmem:[%s4407 + $0x38] sm:$0xff]
        %v4416 = vld [vmem:[%s4407 + $0x40] sm:$0xff]
        %v4417 = vld [vmem:[%s4407 + $0x48] sm:$0xff]
        %v4418 = vld [vmem:[%s4407 + $0x50] sm:$0xff]
        %v4419 = vld [vmem:[%s4407 + $0x58] sm:$0xff]
        %v4420 = vld [vmem:[%s4407 + $0x60] sm:$0xff]
        %v4421 = vld [vmem:[%s4407 + $0x68] sm:$0xff]
        %v4422 = vld [vmem:[%s4407 + $0x70] sm:$0xff]
        %v4423 = vld [vmem:[%s4407 + $0x78] sm:$0xff]
        %v4424 = vld [vmem:[%s4407 + $0x80] sm:$0xff]
        %v4425 = vld [vmem:[%s4407 + $0x88] sm:$0xff]
        %v4426 = vld [vmem:[%s4407 + $0x90] sm:$0xff]
        %v4427 = vld [vmem:[%s4407 + $0x98] sm:$0xff]
        %v4428 = vld [vmem:[%s4407 + $0xa0] sm:$0xff]
        %v4429 = vld [vmem:[%s4407 + $0xa8] sm:$0xff]
        %v4430 = vld [vmem:[%s4407 + $0xb0] sm:$0xff]
        %v4431 = vld [vmem:[%s4407 + $0xb8] sm:$0xff]
        %v4432 = vld [vmem:[%s4407 + $0xc0] sm:$0xff]
        %v4433 = vld [vmem:[%s4407 + $0xc8] sm:$0xff]
        %v4434 = vld [vmem:[%s4407 + $0xd0] sm:$0xff]
        %v4435 = vld [vmem:[%s4407 + $0xd8] sm:$0xff]
        %v4436 = vld [vmem:[%s4407 + $0xe0] sm:$0xff]
        %v4437 = vld [vmem:[%s4407 + $0xe8] sm:$0xff]
        %v4438 = vld [vmem:[%s4407 + $0xf0] sm:$0xff]
        %v4439 = vld [vmem:[%s4407 + $0xf8] sm:$0xff]
        %v4441 = vperm.slane %v4406, 0
        %v4442 = vperm.slane %v4406, 1
        %4445 = vmatpush.msra.mxu0 %v4423
        %4446 = vmatpush.msra.mxu0 %v4422
        %4447 = vmatpush.msra.mxu0 %v4421
        %4448 = vmatpush.msra.mxu0 %v4420
        %4449 = vmatpush.msra.mxu0 %v4419
        %4450 = vmatpush.msra.mxu0 %v4418
        %4451 = vmatpush.msra.mxu0 %v4417
        %4452 = vmatpush.msra.mxu0 %v4416
        %4453 = vmatpush.msra.mxu0 %v4415
        %4454 = vmatpush.msra.mxu0 %v4414
        %4455 = vmatpush.msra.mxu0 %v4413
        %4456 = vmatpush.msra.mxu0 %v4412
        %4457 = vmatpush.msra.mxu0 %v4411
        %4458 = vmatpush.msra.mxu0 %v4410
        %4459 = vmatpush.msra.mxu0 %v4409
        %4460 = vmatpush.msra.mxu0 %v4408
        %4461 = vmatmul.f32.gmra.mxu0 %v4441
        %v4462 = vpop.f32.mrf.mxu0
        %v4463 = vadd.f32 0.0, %v4462
        %4464 = vdwg.mxu0
        %4465 = vmatpush.msra.mxu0 %v4439
        %4466 = vmatpush.msra.mxu0 %v4438
        %4467 = vmatpush.msra.mxu0 %v4437
        %4468 = vmatpush.msra.mxu0 %v4436
        %4469 = vmatpush.msra.mxu0 %v4435
        %4470 = vmatpush.msra.mxu0 %v4434
        %4471 = vmatpush.msra.mxu0 %v4433
        %4472 = vmatpush.msra.mxu0 %v4432
        %4473 = vmatpush.msra.mxu0 %v4431
        %4474 = vmatpush.msra.mxu0 %v4430
        %4475 = vmatpush.msra.mxu0 %v4429
        %4476 = vmatpush.msra.mxu0 %v4428
        %4477 = vmatpush.msra.mxu0 %v4427
        %4478 = vmatpush.msra.mxu0 %v4426
        %4479 = vmatpush.msra.mxu0 %v4425
        %4480 = vmatpush.msra.mxu0 %v4424
        %4481 = vmatmul.f32.gmra.mxu0 %v4442
        %v4482 = vpop.f32.mrf.mxu0
        %v4483 = vadd.f32 %v4463, %v4482
        %4484 = vdwg.mxu0
        %v4485 = vadd.f32 %v4404, %v4483
        %s4486 = scalar_lea.vmem [#allocation4], 2
        %v4487 = vld [vmem:[%s4486] ss:$4 sm:$0x3]
        %s4488 = scalar_lea.vmem %s5, 512
        %v4489 = vld [vmem:[%s4488] sm:$0xff]
        %v4490 = vld [vmem:[%s4488 + $0x8] sm:$0xff]
        %v4491 = vld [vmem:[%s4488 + $0x10] sm:$0xff]
        %v4492 = vld [vmem:[%s4488 + $0x18] sm:$0xff]
        %v4493 = vld [vmem:[%s4488 + $0x20] sm:$0xff]
        %v4494 = vld [vmem:[%s4488 + $0x28] sm:$0xff]
        %v4495 = vld [vmem:[%s4488 + $0x30] sm:$0xff]
        %v4496 = vld [vmem:[%s4488 + $0x38] sm:$0xff]
        %v4497 = vld [vmem:[%s4488 + $0x40] sm:$0xff]
        %v4498 = vld [vmem:[%s4488 + $0x48] sm:$0xff]
        %v4499 = vld [vmem:[%s4488 + $0x50] sm:$0xff]
        %v4500 = vld [vmem:[%s4488 + $0x58] sm:$0xff]
        %v4501 = vld [vmem:[%s4488 + $0x60] sm:$0xff]
        %v4502 = vld [vmem:[%s4488 + $0x68] sm:$0xff]
        %v4503 = vld [vmem:[%s4488 + $0x70] sm:$0xff]
        %v4504 = vld [vmem:[%s4488 + $0x78] sm:$0xff]
        %v4505 = vld [vmem:[%s4488 + $0x80] sm:$0xff]
        %v4506 = vld [vmem:[%s4488 + $0x88] sm:$0xff]
        %v4507 = vld [vmem:[%s4488 + $0x90] sm:$0xff]
        %v4508 = vld [vmem:[%s4488 + $0x98] sm:$0xff]
        %v4509 = vld [vmem:[%s4488 + $0xa0] sm:$0xff]
        %v4510 = vld [vmem:[%s4488 + $0xa8] sm:$0xff]
        %v4511 = vld [vmem:[%s4488 + $0xb0] sm:$0xff]
        %v4512 = vld [vmem:[%s4488 + $0xb8] sm:$0xff]
        %v4513 = vld [vmem:[%s4488 + $0xc0] sm:$0xff]
        %v4514 = vld [vmem:[%s4488 + $0xc8] sm:$0xff]
        %v4515 = vld [vmem:[%s4488 + $0xd0] sm:$0xff]
        %v4516 = vld [vmem:[%s4488 + $0xd8] sm:$0xff]
        %v4517 = vld [vmem:[%s4488 + $0xe0] sm:$0xff]
        %v4518 = vld [vmem:[%s4488 + $0xe8] sm:$0xff]
        %v4519 = vld [vmem:[%s4488 + $0xf0] sm:$0xff]
        %v4520 = vld [vmem:[%s4488 + $0xf8] sm:$0xff]
        %v4522 = vperm.slane %v4487, 0
        %v4523 = vperm.slane %v4487, 1
        %4526 = vmatpush.msra.mxu0 %v4504
        %4527 = vmatpush.msra.mxu0 %v4503
        %4528 = vmatpush.msra.mxu0 %v4502
        %4529 = vmatpush.msra.mxu0 %v4501
        %4530 = vmatpush.msra.mxu0 %v4500
        %4531 = vmatpush.msra.mxu0 %v4499
        %4532 = vmatpush.msra.mxu0 %v4498
        %4533 = vmatpush.msra.mxu0 %v4497
        %4534 = vmatpush.msra.mxu0 %v4496
        %4535 = vmatpush.msra.mxu0 %v4495
        %4536 = vmatpush.msra.mxu0 %v4494
        %4537 = vmatpush.msra.mxu0 %v4493
        %4538 = vmatpush.msra.mxu0 %v4492
        %4539 = vmatpush.msra.mxu0 %v4491
        %4540 = vmatpush.msra.mxu0 %v4490
        %4541 = vmatpush.msra.mxu0 %v4489
        %4542 = vmatmul.f32.gmra.mxu0 %v4522
        %v4543 = vpop.f32.mrf.mxu0
        %v4544 = vadd.f32 0.0, %v4543
        %4545 = vdwg.mxu0
        %4546 = vmatpush.msra.mxu0 %v4520
        %4547 = vmatpush.msra.mxu0 %v4519
        %4548 = vmatpush.msra.mxu0 %v4518
        %4549 = vmatpush.msra.mxu0 %v4517
        %4550 = vmatpush.msra.mxu0 %v4516
        %4551 = vmatpush.msra.mxu0 %v4515
        %4552 = vmatpush.msra.mxu0 %v4514
        %4553 = vmatpush.msra.mxu0 %v4513
        %4554 = vmatpush.msra.mxu0 %v4512
        %4555 = vmatpush.msra.mxu0 %v4511
        %4556 = vmatpush.msra.mxu0 %v4510
        %4557 = vmatpush.msra.mxu0 %v4509
        %4558 = vmatpush.msra.mxu0 %v4508
        %4559 = vmatpush.msra.mxu0 %v4507
        %4560 = vmatpush.msra.mxu0 %v4506
        %4561 = vmatpush.msra.mxu0 %v4505
        %4562 = vmatmul.f32.gmra.mxu0 %v4523
        %v4563 = vpop.f32.mrf.mxu0
        %v4564 = vadd.f32 %v4544, %v4563
        %4565 = vdwg.mxu0
        %v4566 = vadd.f32 %v4485, %v4564
        %s4567 = scalar_lea.vmem [#allocation4], 3
        %v4568 = vld [vmem:[%s4567] ss:$4 sm:$0x3]
        %s4569 = scalar_lea.vmem %s5, 768
        %v4570 = vld [vmem:[%s4569] sm:$0xff]
        %v4571 = vld [vmem:[%s4569 + $0x8] sm:$0xff]
        %v4572 = vld [vmem:[%s4569 + $0x10] sm:$0xff]
        %v4573 = vld [vmem:[%s4569 + $0x18] sm:$0xff]
        %v4574 = vld [vmem:[%s4569 + $0x20] sm:$0xff]
        %v4575 = vld [vmem:[%s4569 + $0x28] sm:$0xff]
        %v4576 = vld [vmem:[%s4569 + $0x30] sm:$0xff]
        %v4577 = vld [vmem:[%s4569 + $0x38] sm:$0xff]
        %v4578 = vld [vmem:[%s4569 + $0x40] sm:$0xff]
        %v4579 = vld [vmem:[%s4569 + $0x48] sm:$0xff]
        %v4580 = vld [vmem:[%s4569 + $0x50] sm:$0xff]
        %v4581 = vld [vmem:[%s4569 + $0x58] sm:$0xff]
        %v4582 = vld [vmem:[%s4569 + $0x60] sm:$0xff]
        %v4583 = vld [vmem:[%s4569 + $0x68] sm:$0xff]
        %v4584 = vld [vmem:[%s4569 + $0x70] sm:$0xff]
        %v4585 = vld [vmem:[%s4569 + $0x78] sm:$0xff]
        %v4586 = vld [vmem:[%s4569 + $0x80] sm:$0xff]
        %v4587 = vld [vmem:[%s4569 + $0x88] sm:$0xff]
        %v4588 = vld [vmem:[%s4569 + $0x90] sm:$0xff]
        %v4589 = vld [vmem:[%s4569 + $0x98] sm:$0xff]
        %v4590 = vld [vmem:[%s4569 + $0xa0] sm:$0xff]
        %v4591 = vld [vmem:[%s4569 + $0xa8] sm:$0xff]
        %v4592 = vld [vmem:[%s4569 + $0xb0] sm:$0xff]
        %v4593 = vld [vmem:[%s4569 + $0xb8] sm:$0xff]
        %v4594 = vld [vmem:[%s4569 + $0xc0] sm:$0xff]
        %v4595 = vld [vmem:[%s4569 + $0xc8] sm:$0xff]
        %v4596 = vld [vmem:[%s4569 + $0xd0] sm:$0xff]
        %v4597 = vld [vmem:[%s4569 + $0xd8] sm:$0xff]
        %v4598 = vld [vmem:[%s4569 + $0xe0] sm:$0xff]
        %v4599 = vld [vmem:[%s4569 + $0xe8] sm:$0xff]
        %v4600 = vld [vmem:[%s4569 + $0xf0] sm:$0xff]
        %v4601 = vld [vmem:[%s4569 + $0xf8] sm:$0xff]
        %v4603 = vperm.slane %v4568, 0
        %v4604 = vperm.slane %v4568, 1
        %4607 = vmatpush.msra.mxu0 %v4585
        %4608 = vmatpush.msra.mxu0 %v4584
        %4609 = vmatpush.msra.mxu0 %v4583
        %4610 = vmatpush.msra.mxu0 %v4582
        %4611 = vmatpush.msra.mxu0 %v4581
        %4612 = vmatpush.msra.mxu0 %v4580
        %4613 = vmatpush.msra.mxu0 %v4579
        %4614 = vmatpush.msra.mxu0 %v4578
        %4615 = vmatpush.msra.mxu0 %v4577
        %4616 = vmatpush.msra.mxu0 %v4576
        %4617 = vmatpush.msra.mxu0 %v4575
        %4618 = vmatpush.msra.mxu0 %v4574
        %4619 = vmatpush.msra.mxu0 %v4573
        %4620 = vmatpush.msra.mxu0 %v4572
        %4621 = vmatpush.msra.mxu0 %v4571
        %4622 = vmatpush.msra.mxu0 %v4570
        %4623 = vmatmul.f32.gmra.mxu0 %v4603
        %v4624 = vpop.f32.mrf.mxu0
        %v4625 = vadd.f32 0.0, %v4624
        %4626 = vdwg.mxu0
        %4627 = vmatpush.msra.mxu0 %v4601
        %4628 = vmatpush.msra.mxu0 %v4600
        %4629 = vmatpush.msra.mxu0 %v4599
        %4630 = vmatpush.msra.mxu0 %v4598
        %4631 = vmatpush.msra.mxu0 %v4597
        %4632 = vmatpush.msra.mxu0 %v4596
        %4633 = vmatpush.msra.mxu0 %v4595
        %4634 = vmatpush.msra.mxu0 %v4594
        %4635 = vmatpush.msra.mxu0 %v4593
        %4636 = vmatpush.msra.mxu0 %v4592
        %4637 = vmatpush.msra.mxu0 %v4591
        %4638 = vmatpush.msra.mxu0 %v4590
        %4639 = vmatpush.msra.mxu0 %v4589
        %4640 = vmatpush.msra.mxu0 %v4588
        %4641 = vmatpush.msra.mxu0 %v4587
        %4642 = vmatpush.msra.mxu0 %v4586
        %4643 = vmatmul.f32.gmra.mxu0 %v4604
        %v4644 = vpop.f32.mrf.mxu0
        %v4645 = vadd.f32 %v4625, %v4644
        %4646 = vdwg.mxu0
        %v4647 = vadd.f32 %v4566, %v4645
        %vm4648 = vcmask 73728
        %4649 = vst.msk [vmem:[%s384] sm:$0x1] %vm4648, %v4647
        %vm4650 = vcmp.gt.f32.partialorder %v4647, 1.0
        %v4651 = vsel %vm4650, 1, 0
        %v4652 = vcvt.s32.f32 %v4651
        %4653 = vst.msk [vmem:[%s378] sm:$0x1] %vm4648, %v4652
        %s4654 = sand.u32 %s189, 1
        %s4655 = scalar_lea.sflag [#allocation7], %s4654
        %s4656 = sand.u32 %s189, 1
        %s4657 = scalar_lea.vmem [#allocation14], %s4656
        %s4658 = sand.u32 %s215, 1
        %s4659 = scalar_lea.sflag [#allocation16], %s4658
        %s4660 = sand.u32 %s215, 1
        %s4661 = scalar_lea.vmem [#allocation15], %s4660
        // Predicated region
        $region69: #{_net_forward.1} parent=47 // pred_check
          %p4662 = pneg %p199
        $region70: #{_net_forward.1} parent=47 // pred_check_branch
          %4664 = sbr.rel (%p4662) target = $region72
        $region71: #{_net_forward.1} parent=47 // pred_region
          %4666 = vsyncadd %s4655, 0
          %s4667 = scalar_lea.hbm %s7, %s29
          %s4669 = sshll.u32 %s4657, 4
          %s4670 = int_to_ptr.vmem [resolvable:$true] %s4669
          %s4671 = sshll.u32 %s4667, 4
          %s4672 = int_to_ptr.hbm [resolvable:$true] %s4671
          %4674 = dma.vmem_to_hbm [thread:$0]  %s4670, 16, %s4672, %s4655
        $region72: #{_net_forward.1} parent=47 // pred_fallthru
          _
        // Predicated region
        $region73: #{_net_forward.1} parent=47 // pred_check
          %p4675 = pneg %p225
        $region74: #{_net_forward.1} parent=47 // pred_check_branch
          %4677 = sbr.rel (%p4675) target = $region76
        $region75: #{_net_forward.1} parent=47 // pred_region
          %4679 = vsyncadd %s4659, 0
          %s4680 = scalar_lea.hbm %s8, %s29
          %s4682 = sshll.u32 %s4661, 4
          %s4683 = int_to_ptr.vmem [resolvable:$true] %s4682
          %s4684 = sshll.u32 %s4680, 4
          %s4685 = int_to_ptr.hbm [resolvable:$true] %s4684
          %4687 = dma.vmem_to_hbm [thread:$0]  %s4683, 16, %s4685, %s4659
        $region76: #{_net_forward.1} parent=47 // pred_fallthru
          _
      $region48: #{_net_forward.1} parent=5 // pred_fallthru
        _
      %p4688 = scmp.le.s32.totalorder 2, %s24
      // Predicated region
      $region77: #{_net_forward.1} parent=5 // pred_check
        %p4689 = pneg %p4688
      $region78: #{_net_forward.1} parent=5 // pred_check_branch
        %4691 = sbr.rel (%p4689) target = $region80
      $region79: #{_net_forward.1} parent=5 // pred_region
        %s4692 = ssub.s32 %s24, 2
        // Predicated region
        $region81: #{_net_forward.1} parent=79 // pred_check
          %p4693 = pneg %p205
        $region82: #{_net_forward.1} parent=79 // pred_check_branch
          %4695 = sbr.rel (%p4693) target = $region84
        $region83: #{_net_forward.1} parent=79 // pred_region
          %s4696 = sand.u32 %s190, 1
          %s4697 = scalar_lea.sflag [#allocation7], %s4696
          %s4698 = sand.u32 %s190, 1
          %s4699 = scalar_lea.vmem [#allocation14], %s4698
          %4701 = dma.done %s4697, 16
        $region84: #{_net_forward.1} parent=79 // pred_fallthru
          _
        // Predicated region
        $region85: #{_net_forward.1} parent=79 // pred_check
          %p4702 = pneg %p231
        $region86: #{_net_forward.1} parent=79 // pred_check_branch
          %4704 = sbr.rel (%p4702) target = $region88
        $region87: #{_net_forward.1} parent=79 // pred_region
          %s4705 = sand.u32 %s216, 1
          %s4706 = scalar_lea.sflag [#allocation16], %s4705
          %s4707 = sand.u32 %s216, 1
          %s4708 = scalar_lea.vmem [#allocation15], %s4707
          %4710 = dma.done %s4706, 16
        $region88: #{_net_forward.1} parent=79 // pred_fallthru
          _
      $region80: #{_net_forward.1} parent=5 // pred_fallthru
        _
    $region6: #{_net_forward.1} parent=1 // loop_footer
      %s28 = sadd.s32 1, %s24
    $region7: #{_net_forward.1} parent=1 // loop_footer_branch
      %23 = sbr.rel target = $region3
    $region8: #{_net_forward.1} parent=1 // loop_exit
      _
    %4711 = vsyncpa [#allocation6], 1
    %s4712 = scalar_lea.sflag [#allocation6], 1
    %4713 = vsyncpa %s4712, 1
    %4714 = vsyncpa [#allocation9], 1
    %4715 = vsyncpa [#allocation12], 1
    %4716 = vsyncpa [#allocation7], 1
    %s4717 = scalar_lea.sflag [#allocation7], 1
    %4718 = vsyncpa %s4717, 1
    %4719 = vsyncpa [#allocation16], 1
    %s4720 = scalar_lea.sflag [#allocation16], 1
    %4721 = vsyncpa %s4720, 1

</llo_original>
